<compile_context>
chip_gen: v7x
topology: tpu7x:2x2x1
jax: 0.10.0
libtpu: 0.0.40
codegen_flags: <defaults>
</compile_context>

<pallas_src>
import jax
import jax.numpy as jnp
from jax.experimental import pallas as pl
from jax.experimental.pallas import tpu as pltpu


_ROW_CHUNK = 8  # batch-row chunk inside the kernel (sublane-aligned)


def _vmem_limit_bytes() -> int:
    """Explicit scoped-VMEM limit: ~75% of physical VMEM (128 MiB on v5e/v6e,
    64 MiB per core on v7x); conservative 48 MiB if the query is unavailable."""
    try:
        cap = int(pltpu.get_tpu_info().vmem_capacity_bytes)
    except Exception:
        cap = 64 * 1024 * 1024
    return min(int(0.75 * cap), 128 * 1024 * 1024)


def _pick_batch_tile(B: int, I: int, H: int, vmem_limit: int) -> int:
    """Largest batch tile whose double-buffered working set fits ~70% of the
    scoped VMEM limit, as a divisor of B (multiples of 8 preferred), keeping
    at least 2 grid steps when the batch allows (v7x megacore / pipelining)."""
    f32 = 4
    per_row = f32 * (4 * H * H        # C in + C out blocks, double-buffered
                     + 2 * I          # x block (double-buffered)
                     + 2 * 3 * H      # h / n / m output blocks
                     + 2 * 2 * H      # n / m input blocks
                     + 6 * H)         # gate/coefficient scratch
    fixed = f32 * 2 * (I * 6 * H + 6 * H)          # packed weights + bias
    fixed += f32 * 8 * _ROW_CHUNK * H * H          # in-loop temporaries headroom
    budget = int(0.70 * vmem_limit) - fixed
    cap = max(budget // per_row, 1)
    if B >= 16:
        cap = min(cap, B // 2)        # keep >= 2 grid steps
    cap = max(min(cap, B), 1)
    divisors = [d for d in range(1, B + 1) if B % d == 0 and d <= cap]
    mult8 = [d for d in divisors if d % 8 == 0]
    return max(mult8) if mult8 else max(divisors)


def _mlstm_kernel(x_ref, w_ref, b_ref, c_ref, n_ref, m_ref,
                  h_out, c_out, n_out, m_out, gate_ref):
    """One batch-tile of an mLSTMCell step."""
    BT = c_ref.shape[0]
    H = c_ref.shape[-1]

    # ---- Phase 1: all six projections in ONE MXU matmul; small-tensor math.
    z = jnp.dot(x_ref[...], w_ref[...],
                preferred_element_type=jnp.float32) + b_ref[...]
    i_tilda = z[:, 0 * H:1 * H]
    f_tilda = z[:, 1 * H:2 * H]
    o_tilda = z[:, 2 * H:3 * H]
    q_t = z[:, 3 * H:4 * H]
    k_t = z[:, 4 * H:5 * H]            # 1/sqrt(H) folded into the packed weights
    v_t = z[:, 5 * H:6 * H]

    f_t = jax.nn.sigmoid(f_tilda)
    o_t = jax.nn.sigmoid(o_tilda)

    # m_t = max(log(sigmoid(f~)) + m_prev, log(exp(i~))), exp/log pairs removed
    # and log-sigmoid computed stably.
    log_sig_f = jnp.minimum(f_tilda, 0.0) - jnp.log(1.0 + jnp.exp(-jnp.abs(f_tilda)))
    m_t = jnp.maximum(log_sig_f + m_ref[...], i_tilda)
    i_prime = jnp.exp(i_tilda - m_t)
    iv = i_prime * v_t                                     # (BT, H)

    n_t = f_t * n_ref[...] + i_prime * k_t                 # (BT, H)

    # divisor = max(|diag(n_t q_t^T)|, 1); reciprocal on the EUP + one Newton
    # step (divisor >= 1, so this is safe and ~1e-7 relative accurate).
    normalize_inner = jnp.sum(n_t * q_t, axis=-1, keepdims=True)    # (BT, 1)
    divisor = jnp.maximum(jnp.abs(normalize_inner), 1.0)
    r = pl.reciprocal(divisor, approx=True)
    inv = r * (2.0 - divisor * r)                                    # (BT, 1)

    kq = jnp.sum(k_t * q_t, axis=-1, keepdims=True)                  # (BT, 1)
    o_inv = o_t * inv
    coeff_cq = o_inv * f_t            # h_t = coeff_cq * (C_prev . q) + coeff_add
    coeff_add = o_inv * iv * kq

    n_out[...] = n_t.astype(n_out.dtype)
    m_out[...] = m_t.astype(m_out.dtype)

    # Stage per-row coefficients in VMEM so the chunked loop below can slice
    # them along the (sublane) batch axis with pl.ds.
    gate_ref[0, :, :] = f_t
    gate_ref[1, :, :] = iv
    gate_ref[2, :, :] = k_t
    gate_ref[3, :, :] = q_t
    gate_ref[4, :, :] = coeff_cq
    gate_ref[5, :, :] = coeff_add

    # ---- Phase 2: single fused pass over the (BT, H, H) matrix memory.
    # C_prev is read ONCE per row-chunk and used for both the read-out
    # contraction (C_prev . q) and the state update; C_t is written once.
    # Chunking bounds temporaries to (RB, H, H) regardless of BT.
    RB = _ROW_CHUNK if BT % _ROW_CHUNK == 0 else BT

    def chunk_body(s, carry):
        row0 = pl.multiple_of(s * RB, RB)
        rows = pl.ds(row0, RB)
        f_c = gate_ref[0, rows, :]
        iv_c = gate_ref[1, rows, :]
        k_c = gate_ref[2, rows, :]
        q_c = gate_ref[3, rows, :]
        a_c = gate_ref[4, rows, :]
        b_c = gate_ref[5, rows, :]

        c_prev = c_ref[rows, :, :]                                   # (RB, H, H)
        cq = jnp.sum(c_prev * q_c[:, None, :], axis=-1)              # (RB, H)
        c_out[rows, :, :] = (f_c[:, :, None] * c_prev
                             + iv_c[:, :, None] * k_c[:, None, :]
                             ).astype(c_out.dtype)
        h_out[rows, :] = (a_c * cq + b_c).astype(h_out.dtype)
        return carry

    jax.lax.fori_loop(0, BT // RB, chunk_body, 0)


def mlstm_cell_forward(x, params, state, *, donate_state=False):
    """One mLSTMCell step via a Pallas TPU kernel.

    x:      (B, I) float32
    params: dict with W_i..W_v (I, H) and B_i..B_v (H,)
    state:  (C (B,H,H), n (B,H), m (B,H))
    donate_state: alias C/n/m to the outputs in place. Only set this when the
        caller actually donates those buffers (e.g. inside a scan), otherwise
        XLA adds a defensive copy of the full (B,H,H) state.
    Returns (h_t, (C_t, n_t, m_t)).
    """
    C, n, m = state
    B, I = x.shape
    H = params["W_i"].shape[1]

    # Pack the six projections into one lane-dense matmul; fold the 1/sqrt(H)
    # scale of the k-projection into its weight columns (bias stays unscaled,
    # exactly like the PyTorch forward).
    inv_sqrt_h = 1.0 / jnp.sqrt(jnp.float32(H))
    W_cat = jnp.concatenate(
        [params["W_i"], params["W_f"], params["W_o"], params["W_q"],
         params["W_k"] * inv_sqrt_h, params["W_v"]], axis=1)          # (I, 6H)
    b_cat = jnp.concatenate(
        [params["B_i"], params["B_f"], params["B_o"], params["B_q"],
         params["B_k"], params["B_v"]], axis=0).reshape(1, 6 * H)     # (1, 6H)

    vmem_limit = _vmem_limit_bytes()
    BT = _pick_batch_tile(B, I, H, vmem_limit)
    grid = (B // BT,)

    in_specs = [
        pl.BlockSpec((BT, I), lambda b: (b, 0)),            # x
        pl.BlockSpec((I, 6 * H), lambda b: (0, 0)),         # packed weights
        pl.BlockSpec((1, 6 * H), lambda b: (0, 0)),         # packed biases
        pl.BlockSpec((BT, H, H), lambda b: (b, 0, 0)),      # C
        pl.BlockSpec((BT, H), lambda b: (b, 0)),            # n
        pl.BlockSpec((BT, H), lambda b: (b, 0)),            # m
    ]
    out_specs = (
        pl.BlockSpec((BT, H), lambda b: (b, 0)),            # h_t
        pl.BlockSpec((BT, H, H), lambda b: (b, 0, 0)),      # C_t
        pl.BlockSpec((BT, H), lambda b: (b, 0)),            # n_t
        pl.BlockSpec((BT, H), lambda b: (b, 0)),            # m_t
    )
    out_shapes = (
        jax.ShapeDtypeStruct((B, H), x.dtype),
        jax.ShapeDtypeStruct((B, H, H), C.dtype),
        jax.ShapeDtypeStruct((B, H), n.dtype),
        jax.ShapeDtypeStruct((B, H), m.dtype),
    )

    h_t, C_t, n_t, m_t = pl.pallas_call(
        _mlstm_kernel,
        out_shape=out_shapes,
        grid=grid,
        in_specs=in_specs,
        out_specs=out_specs,
        scratch_shapes=[pltpu.VMEM((6, BT, H), jnp.float32)],
        input_output_aliases=({3: 1, 4: 2, 5: 3} if donate_state else {}),
        compiler_params=pltpu.CompilerParams(
            dimension_semantics=("parallel",),
            vmem_limit_bytes=vmem_limit),
    )(x, W_cat, b_cat, C, n, m)
    return h_t, (C_t, n_t, m_t)


def _mlstm_reference(x, params, state):
    """Pure-JAX reference mirroring the PyTorch forward exactly."""
    C, n, m = state
    H = params["W_i"].shape[1]
    i_tilda = x @ params["W_i"] + params["B_i"]
    f_tilda = x @ params["W_f"] + params["B_f"]
    o_tilda = x @ params["W_o"] + params["B_o"]
    q_t = x @ params["W_q"] + params["B_q"]
    k_t = (x @ params["W_k"]) / jnp.sqrt(jnp.float32(H)) + params["B_k"]
    v_t = x @ params["W_v"] + params["B_v"]
    i_t = jnp.exp(i_tilda)
    f_t = jax.nn.sigmoid(f_tilda)
    o_t = jax.nn.sigmoid(o_tilda)
    m_t = jnp.maximum(jnp.log(f_t) + m, jnp.log(i_t))
    i_prime = jnp.exp(i_tilda - m_t)
    C_t = (f_t[:, :, None] * C
           + i_prime[:, :, None] * jnp.einsum('bi,bk->bik', v_t, k_t))
    n_t = f_t * n + i_prime * k_t
    normalize_inner = jnp.sum(n_t * q_t, axis=-1)
    divisor = jnp.maximum(jnp.abs(normalize_inner),
                          jnp.ones_like(normalize_inner))
    h_tilda = jnp.einsum('bkj,bj->bk', C_t, q_t) / divisor[:, None]
    h_t = o_t * h_tilda
    return h_t, (C_t, n_t, m_t)


def _xavier_uniform(key, fan_in, fan_out):
    bound = jnp.sqrt(6.0 / (fan_in + fan_out))
    return jax.random.uniform(key, (fan_in, fan_out), jnp.float32,
                              minval=-bound, maxval=bound)


if __name__ == "__main__":
    # H = 128 keeps every stored slab lane-dense (unmasked vst); B = 16 gives
    # a 2-step grid that exercises the pipeline / megacore path.
    B, I, H = 16, 64, 128

    key = jax.random.PRNGKey(0)
    keys = jax.random.split(key, 16)

    params = {
        "W_i": _xavier_uniform(keys[0], I, H),
        "W_f": _xavier_uniform(keys[1], I, H),
        "W_o": _xavier_uniform(keys[2], I, H),
        "W_q": _xavier_uniform(keys[3], I, H),
        "W_k": _xavier_uniform(keys[4], I, H),
        "W_v": _xavier_uniform(keys[5], I, H),
        # Non-zero biases exercise the bias path (incl. the "scale-then-bias"
        # ordering of the k projection).
        "B_i": 0.05 * jax.random.normal(keys[6], (H,), jnp.float32),
        "B_f": 0.05 * jax.random.normal(keys[7], (H,), jnp.float32),
        "B_o": 0.05 * jax.random.normal(keys[8], (H,), jnp.float32),
        "B_q": 0.05 * jax.random.normal(keys[9], (H,), jnp.float32),
        "B_k": 0.05 * jax.random.normal(keys[10], (H,), jnp.float32),
        "B_v": 0.05 * jax.random.normal(keys[11], (H,), jnp.float32),
    }

    x = jax.random.normal(keys[12], (B, I), jnp.float32)
    # Non-trivial state to exercise the C / n / m update paths.
    C0 = 0.1 * jax.random.normal(keys[13], (B, H, H), jnp.float32)
    n0 = 0.1 * jax.random.normal(keys[14], (B, H), jnp.float32)
    m0 = 0.1 * jax.random.normal(keys[15], (B, H), jnp.float32)
    state = (C0, n0, m0)

    h_t, (C_t, n_t, m_t) = mlstm_cell_forward(x, params, state)
    jax.block_until_ready((h_t, C_t, n_t, m_t))

    h_r, (C_r, n_r, m_r) = _mlstm_reference(x, params, state)
    jax.block_until_ready((h_r, C_r, n_r, m_r))

    assert jnp.allclose(h_t, h_r, atol=1e-4, rtol=1e-4)
    assert jnp.allclose(C_t, C_r, atol=1e-4, rtol=1e-4)
    assert jnp.allclose(n_t, n_r, atol=1e-4, rtol=1e-4)
    assert jnp.allclose(m_t, m_r, atol=1e-4, rtol=1e-4)

    print("KERNEL_OK")
</pallas_src>

<mosaic_0001>
module attributes {stable_mosaic.version = 11 : i64} {
  func.func @_mlstm_kernel(%arg0: i32, %arg1: memref<8x64xf32, #tpu.memory_space<vmem>>, %arg2: memref<64x768xf32, #tpu.memory_space<vmem>>, %arg3: memref<1x768xf32, #tpu.memory_space<vmem>>, %arg4: memref<8x128x128xf32, #tpu.memory_space<vmem>>, %arg5: memref<8x128xf32, #tpu.memory_space<vmem>>, %arg6: memref<8x128xf32, #tpu.memory_space<vmem>>, %arg7: memref<8x128xf32, #tpu.memory_space<vmem>>, %arg8: memref<8x128x128xf32, #tpu.memory_space<vmem>>, %arg9: memref<8x128xf32, #tpu.memory_space<vmem>>, %arg10: memref<8x128xf32, #tpu.memory_space<vmem>>, %arg11: memref<6x8x128xf32, #tpu.memory_space<vmem>>) attributes {dimension_semantics = [#tpu.dimension_semantics<parallel>], iteration_bounds = array<i64: 2>, scalar_prefetch = 0 : i64, scratch_operands = 1 : i64, tpu.core_type = #tpu.core_type<tc>, window_params = [{transform_indices = @transform_0, window_bounds = array<i64: 8, 64>}, {pipeline_mode = #tpu.pipeline_mode<synchronous>, transform_indices = @transform_1, window_bounds = array<i64: 64, 768>}, {pipeline_mode = #tpu.pipeline_mode<synchronous>, transform_indices = @transform_2, window_bounds = array<i64: 1, 768>}, {transform_indices = @transform_3, window_bounds = array<i64: 8, 128, 128>}, {transform_indices = @transform_4, window_bounds = array<i64: 8, 128>}, {transform_indices = @transform_5, window_bounds = array<i64: 8, 128>}, {transform_indices = @transform_6, window_bounds = array<i64: 8, 128>}, {transform_indices = @transform_7, window_bounds = array<i64: 8, 128, 128>}, {transform_indices = @transform_8, window_bounds = array<i64: 8, 128>}, {transform_indices = @transform_9, window_bounds = array<i64: 8, 128>}]} {
    %c0 = arith.constant 0 : index
    %c0_0 = arith.constant 0 : index
    %0 = vector.load %arg1[%c0, %c0_0] : memref<8x64xf32, #tpu.memory_space<vmem>>, vector<8x64xf32>
    %c0_1 = arith.constant 0 : index
    %c0_2 = arith.constant 0 : index
    %1 = vector.load %arg2[%c0_1, %c0_2] : memref<64x768xf32, #tpu.memory_space<vmem>>, vector<64x768xf32>
    %cst = arith.constant dense<0.000000e+00> : vector<8x768xf32>
    %2 = tpu.matmul %0, %1, %cst {dimension_numbers = #tpu.dot_dimension_numbers<[1], [0], [0], [1], [0, 0, 1, 1], [], []>} : vector<8x64xf32>, vector<64x768xf32>, vector<8x768xf32> -> vector<8x768xf32>
    %c0_3 = arith.constant 0 : index
    %c0_4 = arith.constant 0 : index
    %3 = vector.load %arg3[%c0_3, %c0_4] : memref<1x768xf32, #tpu.memory_space<vmem>>, vector<1x768xf32>
    %4 = vector.broadcast %3 : vector<1x768xf32> to vector<8x768xf32>
    %5 = arith.addf %2, %4 : vector<8x768xf32>
    %6 = vector.extract_strided_slice %5 {offsets = [0, 0], sizes = [8, 128], strides = [1, 1]} : vector<8x768xf32> to vector<8x128xf32>
    %7 = vector.extract_strided_slice %5 {offsets = [0, 128], sizes = [8, 128], strides = [1, 1]} : vector<8x768xf32> to vector<8x128xf32>
    %8 = vector.extract_strided_slice %5 {offsets = [0, 256], sizes = [8, 128], strides = [1, 1]} : vector<8x768xf32> to vector<8x128xf32>
    %9 = vector.extract_strided_slice %5 {offsets = [0, 384], sizes = [8, 128], strides = [1, 1]} : vector<8x768xf32> to vector<8x128xf32>
    %10 = vector.extract_strided_slice %5 {offsets = [0, 512], sizes = [8, 128], strides = [1, 1]} : vector<8x768xf32> to vector<8x128xf32>
    %11 = vector.extract_strided_slice %5 {offsets = [0, 640], sizes = [8, 128], strides = [1, 1]} : vector<8x768xf32> to vector<8x128xf32>
    %12 = arith.negf %7 : vector<8x128xf32>
    %13 = math.exp %12 : vector<8x128xf32>
    %cst_5 = arith.constant 1.000000e+00 : f32
    %14 = vector.broadcast %cst_5 : f32 to vector<8x128xf32>
    %15 = arith.addf %14, %13 : vector<8x128xf32>
    %16 = arith.divf %14, %15 : vector<8x128xf32>
    %17 = arith.negf %8 : vector<8x128xf32>
    %18 = math.exp %17 : vector<8x128xf32>
    %cst_6 = arith.constant 1.000000e+00 : f32
    %19 = vector.broadcast %cst_6 : f32 to vector<8x128xf32>
    %20 = arith.addf %19, %18 : vector<8x128xf32>
    %21 = arith.divf %19, %20 : vector<8x128xf32>
    %cst_7 = arith.constant 0.000000e+00 : f32
    %22 = vector.broadcast %cst_7 : f32 to vector<8x128xf32>
    %23 = arith.minimumf %7, %22 : vector<8x128xf32>
    %24 = math.absf %7 : vector<8x128xf32>
    %cst_8 = arith.constant 0.000000e+00 : f32
    %25 = vector.broadcast %cst_8 : f32 to vector<8x128xf32>
    %26 = arith.subf %25, %24 : vector<8x128xf32>
    %27 = math.exp %26 : vector<8x128xf32>
    %cst_9 = arith.constant 1.000000e+00 : f32
    %28 = vector.broadcast %cst_9 : f32 to vector<8x128xf32>
    %29 = arith.addf %28, %27 : vector<8x128xf32>
    %30 = math.log %29 : vector<8x128xf32>
    %31 = arith.subf %23, %30 : vector<8x128xf32>
    %c0_10 = arith.constant 0 : index
    %c0_11 = arith.constant 0 : index
    %32 = vector.load %arg6[%c0_10, %c0_11] : memref<8x128xf32, #tpu.memory_space<vmem>>, vector<8x128xf32>
    %33 = arith.addf %31, %32 : vector<8x128xf32>
    %34 = arith.maximumf %33, %6 : vector<8x128xf32>
    %35 = arith.subf %6, %34 : vector<8x128xf32>
    %36 = math.exp %35 : vector<8x128xf32>
    %37 = arith.mulf %36, %11 : vector<8x128xf32>
    %c0_12 = arith.constant 0 : index
    %c0_13 = arith.constant 0 : index
    %38 = vector.load %arg5[%c0_12, %c0_13] : memref<8x128xf32, #tpu.memory_space<vmem>>, vector<8x128xf32>
    %39 = arith.mulf %16, %38 : vector<8x128xf32>
    %40 = arith.mulf %36, %10 : vector<8x128xf32>
    %41 = arith.addf %39, %40 : vector<8x128xf32>
    %42 = arith.mulf %41, %9 : vector<8x128xf32>
    %cst_14 = arith.constant dense<0.000000e+00> : vector<8xf32>
    %43 = vector.multi_reduction <add>, %42, %cst_14 [1] : vector<8x128xf32> to vector<8xf32>
    %44 = vector.shape_cast %43 : vector<8xf32> to vector<8x1xf32>
    %45 = math.absf %44 : vector<8x1xf32>
    %cst_15 = arith.constant 1.000000e+00 : f32
    %46 = vector.broadcast %cst_15 : f32 to vector<8x1xf32>
    %47 = arith.maximumf %45, %46 : vector<8x1xf32>
    %48 = tpu.reciprocal %47 {approx = true} : vector<8x1xf32> -> vector<8x1xf32>
    %49 = arith.mulf %47, %48 : vector<8x1xf32>
    %cst_16 = arith.constant 2.000000e+00 : f32
    %50 = vector.broadcast %cst_16 : f32 to vector<8x1xf32>
    %51 = arith.subf %50, %49 : vector<8x1xf32>
    %52 = arith.mulf %48, %51 : vector<8x1xf32>
    %53 = arith.mulf %10, %9 : vector<8x128xf32>
    %cst_17 = arith.constant dense<0.000000e+00> : vector<8xf32>
    %54 = vector.multi_reduction <add>, %53, %cst_17 [1] : vector<8x128xf32> to vector<8xf32>
    %55 = vector.shape_cast %54 : vector<8xf32> to vector<8x1xf32>
    %56 = vector.broadcast %52 : vector<8x1xf32> to vector<8x128xf32>
    %57 = arith.mulf %21, %56 : vector<8x128xf32>
    %58 = arith.mulf %57, %16 : vector<8x128xf32>
    %59 = arith.mulf %57, %37 : vector<8x128xf32>
    %60 = vector.broadcast %55 : vector<8x1xf32> to vector<8x128xf32>
    %61 = arith.mulf %59, %60 : vector<8x128xf32>
    %c0_18 = arith.constant 0 : index
    %c0_19 = arith.constant 0 : index
    %62 = vector.load %arg9[%c0_18, %c0_19] : memref<8x128xf32, #tpu.memory_space<vmem>>, vector<8x128xf32>
    tpu.vector_store %arg9[%c0_18, %c0_19], %41 {strides = array<i32>} : memref<8x128xf32, #tpu.memory_space<vmem>>, vector<8x128xf32>,
    %c0_20 = arith.constant 0 : index
    %c0_21 = arith.constant 0 : index
    %63 = vector.load %arg10[%c0_20, %c0_21] : memref<8x128xf32, #tpu.memory_space<vmem>>, vector<8x128xf32>
    tpu.vector_store %arg10[%c0_20, %c0_21], %34 {strides = array<i32>} : memref<8x128xf32, #tpu.memory_space<vmem>>, vector<8x128xf32>,
    %c0_22 = arith.constant 0 : index
    %c0_23 = arith.constant 0 : index
    %c0_24 = arith.constant 0 : index
    %64 = vector.load %arg11[%c0_22, %c0_23, %c0_24] : memref<6x8x128xf32, #tpu.memory_space<vmem>>, vector<1x8x128xf32>
    %65 = vector.shape_cast %64 : vector<1x8x128xf32> to vector<8x128xf32>
    %66 = vector.shape_cast %16 : vector<8x128xf32> to vector<1x8x128xf32>
    tpu.vector_store %arg11[%c0_22, %c0_23, %c0_24], %66 {strides = array<i32>} : memref<6x8x128xf32, #tpu.memory_space<vmem>>, vector<1x8x128xf32>,
    %c1 = arith.constant 1 : index
    %c0_25 = arith.constant 0 : index
    %c0_26 = arith.constant 0 : index
    %67 = vector.load %arg11[%c1, %c0_25, %c0_26] : memref<6x8x128xf32, #tpu.memory_space<vmem>>, vector<1x8x128xf32>
    %68 = vector.shape_cast %67 : vector<1x8x128xf32> to vector<8x128xf32>
    %69 = vector.shape_cast %37 : vector<8x128xf32> to vector<1x8x128xf32>
    tpu.vector_store %arg11[%c1, %c0_25, %c0_26], %69 {strides = array<i32>} : memref<6x8x128xf32, #tpu.memory_space<vmem>>, vector<1x8x128xf32>,
    %c2 = arith.constant 2 : index
    %c0_27 = arith.constant 0 : index
    %c0_28 = arith.constant 0 : index
    %70 = vector.load %arg11[%c2, %c0_27, %c0_28] : memref<6x8x128xf32, #tpu.memory_space<vmem>>, vector<1x8x128xf32>
    %71 = vector.shape_cast %70 : vector<1x8x128xf32> to vector<8x128xf32>
    %72 = vector.shape_cast %10 : vector<8x128xf32> to vector<1x8x128xf32>
    tpu.vector_store %arg11[%c2, %c0_27, %c0_28], %72 {strides = array<i32>} : memref<6x8x128xf32, #tpu.memory_space<vmem>>, vector<1x8x128xf32>,
    %c3 = arith.constant 3 : index
    %c0_29 = arith.constant 0 : index
    %c0_30 = arith.constant 0 : index
    %73 = vector.load %arg11[%c3, %c0_29, %c0_30] : memref<6x8x128xf32, #tpu.memory_space<vmem>>, vector<1x8x128xf32>
    %74 = vector.shape_cast %73 : vector<1x8x128xf32> to vector<8x128xf32>
    %75 = vector.shape_cast %9 : vector<8x128xf32> to vector<1x8x128xf32>
    tpu.vector_store %arg11[%c3, %c0_29, %c0_30], %75 {strides = array<i32>} : memref<6x8x128xf32, #tpu.memory_space<vmem>>, vector<1x8x128xf32>,
    %c4 = arith.constant 4 : index
    %c0_31 = arith.constant 0 : index
    %c0_32 = arith.constant 0 : index
    %76 = vector.load %arg11[%c4, %c0_31, %c0_32] : memref<6x8x128xf32, #tpu.memory_space<vmem>>, vector<1x8x128xf32>
    %77 = vector.shape_cast %76 : vector<1x8x128xf32> to vector<8x128xf32>
    %78 = vector.shape_cast %58 : vector<8x128xf32> to vector<1x8x128xf32>
    tpu.vector_store %arg11[%c4, %c0_31, %c0_32], %78 {strides = array<i32>} : memref<6x8x128xf32, #tpu.memory_space<vmem>>, vector<1x8x128xf32>,
    %c5 = arith.constant 5 : index
    %c0_33 = arith.constant 0 : index
    %c0_34 = arith.constant 0 : index
    %79 = vector.load %arg11[%c5, %c0_33, %c0_34] : memref<6x8x128xf32, #tpu.memory_space<vmem>>, vector<1x8x128xf32>
    %80 = vector.shape_cast %79 : vector<1x8x128xf32> to vector<8x128xf32>
    %81 = vector.shape_cast %61 : vector<8x128xf32> to vector<1x8x128xf32>
    tpu.vector_store %arg11[%c5, %c0_33, %c0_34], %81 {strides = array<i32>} : memref<6x8x128xf32, #tpu.memory_space<vmem>>, vector<1x8x128xf32>,
    %c0_i32 = arith.constant 0 : i32
    %c8_i32 = arith.constant 8 : i32
    %82 = arith.muli %c0_i32, %c8_i32 : i32
    %83 = tpu.assume_multiple %82, 8 : i32
    %c0_35 = arith.constant 0 : index
    %84 = arith.index_cast %83 : i32 to index
    %c0_36 = arith.constant 0 : index
    %85 = vector.load %arg11[%c0_35, %84, %c0_36] : memref<6x8x128xf32, #tpu.memory_space<vmem>>, vector<1x8x128xf32>
    %86 = vector.shape_cast %85 : vector<1x8x128xf32> to vector<8x128xf32>
    %c1_37 = arith.constant 1 : index
    %87 = arith.index_cast %83 : i32 to index
    %c0_38 = arith.constant 0 : index
    %88 = vector.load %arg11[%c1_37, %87, %c0_38] : memref<6x8x128xf32, #tpu.memory_space<vmem>>, vector<1x8x128xf32>
    %89 = vector.shape_cast %88 : vector<1x8x128xf32> to vector<8x128xf32>
    %c2_39 = arith.constant 2 : index
    %90 = arith.index_cast %83 : i32 to index
    %c0_40 = arith.constant 0 : index
    %91 = vector.load %arg11[%c2_39, %90, %c0_40] : memref<6x8x128xf32, #tpu.memory_space<vmem>>, vector<1x8x128xf32>
    %92 = vector.shape_cast %91 : vector<1x8x128xf32> to vector<8x128xf32>
    %c3_41 = arith.constant 3 : index
    %93 = arith.index_cast %83 : i32 to index
    %c0_42 = arith.constant 0 : index
    %94 = vector.load %arg11[%c3_41, %93, %c0_42] : memref<6x8x128xf32, #tpu.memory_space<vmem>>, vector<1x8x128xf32>
    %95 = vector.shape_cast %94 : vector<1x8x128xf32> to vector<8x128xf32>
    %c4_43 = arith.constant 4 : index
    %96 = arith.index_cast %83 : i32 to index
    %c0_44 = arith.constant 0 : index
    %97 = vector.load %arg11[%c4_43, %96, %c0_44] : memref<6x8x128xf32, #tpu.memory_space<vmem>>, vector<1x8x128xf32>
    %98 = vector.shape_cast %97 : vector<1x8x128xf32> to vector<8x128xf32>
    %c5_45 = arith.constant 5 : index
    %99 = arith.index_cast %83 : i32 to index
    %c0_46 = arith.constant 0 : index
    %100 = vector.load %arg11[%c5_45, %99, %c0_46] : memref<6x8x128xf32, #tpu.memory_space<vmem>>, vector<1x8x128xf32>
    %101 = vector.shape_cast %100 : vector<1x8x128xf32> to vector<8x128xf32>
    %102 = arith.index_cast %83 : i32 to index
    %c0_47 = arith.constant 0 : index
    %c0_48 = arith.constant 0 : index
    %103 = vector.load %arg4[%102, %c0_47, %c0_48] : memref<8x128x128xf32, #tpu.memory_space<vmem>>, vector<8x128x128xf32>
    %104 = vector.shape_cast %95 : vector<8x128xf32> to vector<8x1x128xf32>
    %105 = vector.broadcast %104 : vector<8x1x128xf32> to vector<8x128x128xf32>
    %106 = arith.mulf %103, %105 : vector<8x128x128xf32>
    %cst_49 = arith.constant dense<0.000000e+00> : vector<8x128xf32>
    %107 = vector.multi_reduction <add>, %106, %cst_49 [2] : vector<8x128x128xf32> to vector<8x128xf32>
    %108 = vector.shape_cast %86 : vector<8x128xf32> to vector<8x128x1xf32>
    %109 = vector.broadcast %108 : vector<8x128x1xf32> to vector<8x128x128xf32>
    %110 = arith.mulf %109, %103 : vector<8x128x128xf32>
    %111 = vector.shape_cast %89 : vector<8x128xf32> to vector<8x128x1xf32>
    %112 = vector.shape_cast %92 : vector<8x128xf32> to vector<8x1x128xf32>
    %113 = vector.broadcast %111 : vector<8x128x1xf32> to vector<8x128x128xf32>
    %114 = vector.broadcast %112 : vector<8x1x128xf32> to vector<8x128x128xf32>
    %115 = arith.mulf %113, %114 : vector<8x128x128xf32>
    %116 = arith.addf %110, %115 : vector<8x128x128xf32>
    %117 = arith.index_cast %83 : i32 to index
    %c0_50 = arith.constant 0 : index
    %c0_51 = arith.constant 0 : index
    %118 = vector.load %arg8[%117, %c0_50, %c0_51] : memref<8x128x128xf32, #tpu.memory_space<vmem>>, vector<8x128x128xf32>
    tpu.vector_store %arg8[%117, %c0_50, %c0_51], %116 {strides = array<i32>} : memref<8x128x128xf32, #tpu.memory_space<vmem>>, vector<8x128x128xf32>,
    %119 = arith.mulf %98, %107 : vector<8x128xf32>
    %120 = arith.addf %119, %101 : vector<8x128xf32>
    %121 = arith.index_cast %83 : i32 to index
    %c0_52 = arith.constant 0 : index
    %122 = vector.load %arg7[%121, %c0_52] : memref<8x128xf32, #tpu.memory_space<vmem>>, vector<8x128xf32>
    tpu.vector_store %arg7[%121, %c0_52], %120 {strides = array<i32>} : memref<8x128xf32, #tpu.memory_space<vmem>>, vector<8x128xf32>,
    %c1_i32 = arith.constant 1 : i32
    return
  }
  func.func @transform_0(%arg0: i32) -> (i32, i32) {
    %c0_i32 = arith.constant 0 : i32
    %c0_i32_0 = arith.constant 0 : i32
    return %arg0, %c0_i32 : i32, i32
  }
  func.func @transform_1(%arg0: i32) -> (i32, i32) {
    %c0_i32 = arith.constant 0 : i32
    %c0_i32_0 = arith.constant 0 : i32
    %c0_i32_1 = arith.constant 0 : i32
    return %c0_i32, %c0_i32_0 : i32, i32
  }
  func.func @transform_2(%arg0: i32) -> (i32, i32) {
    %c0_i32 = arith.constant 0 : i32
    %c0_i32_0 = arith.constant 0 : i32
    %c0_i32_1 = arith.constant 0 : i32
    return %c0_i32, %c0_i32_0 : i32, i32
  }
  func.func @transform_3(%arg0: i32) -> (i32, i32, i32) {
    %c0_i32 = arith.constant 0 : i32
    %c0_i32_0 = arith.constant 0 : i32
    %c0_i32_1 = arith.constant 0 : i32
    return %arg0, %c0_i32, %c0_i32_0 : i32, i32, i32
  }
  func.func @transform_4(%arg0: i32) -> (i32, i32) {
    %c0_i32 = arith.constant 0 : i32
    %c0_i32_0 = arith.constant 0 : i32
    return %arg0, %c0_i32 : i32, i32
  }
  func.func @transform_5(%arg0: i32) -> (i32, i32) {
    %c0_i32 = arith.constant 0 : i32
    %c0_i32_0 = arith.constant 0 : i32
    return %arg0, %c0_i32 : i32, i32
  }
  func.func @transform_6(%arg0: i32) -> (i32, i32) {
    %c0_i32 = arith.constant 0 : i32
    %c0_i32_0 = arith.constant 0 : i32
    return %arg0, %c0_i32 : i32, i32
  }
  func.func @transform_7(%arg0: i32) -> (i32, i32, i32) {
    %c0_i32 = arith.constant 0 : i32
    %c0_i32_0 = arith.constant 0 : i32
    %c0_i32_1 = arith.constant 0 : i32
    return %arg0, %c0_i32, %c0_i32_0 : i32, i32, i32
  }
  func.func @transform_8(%arg0: i32) -> (i32, i32) {
    %c0_i32 = arith.constant 0 : i32
    %c0_i32_0 = arith.constant 0 : i32
    return %arg0, %c0_i32 : i32, i32
  }
  func.func @transform_9(%arg0: i32) -> (i32, i32) {
    %c0_i32 = arith.constant 0 : i32
    %c0_i32_0 = arith.constant 0 : i32
    return %arg0, %c0_i32 : i32, i32
  }
}

</mosaic_0001>

<llo_original>
// kernel: tpu_custom_call.1
$region0: #{tpu_custom_call.1}
  #allocation0 [shape = 'u32[]', space=smem, size = 0x4, offset = 0x4, fixed_abs, tag = 'smem constant byte address 0x4 - core index']
  #allocation1 [shape = 'u32[144,128]{1,0:T(1,128)}', space=vmem, size = 0x12000, scoped, tag = 'internal scratch']
  #allocation2 [shape = 'f32[6,8,128]{2,1,0:T(8,128)}', space=vmem, size = 0x6000, scoped, tag = 'scratch operand']
  %s0 = inlined_call_operand.hbm [shape: f32[16,64], index: 0, kind: input, shape index: {}]
  %s1 = inlined_call_operand.hbm [shape: f32[64,768], index: 1, kind: input, shape index: {}]
  %s2 = inlined_call_operand.hbm [shape: f32[1,768], index: 2, kind: input, shape index: {}]
  %s3 = inlined_call_operand.hbm [shape: f32[16,128,128], index: 3, kind: input, shape index: {}]
  %s4 = inlined_call_operand.hbm [shape: f32[16,128], index: 4, kind: input, shape index: {}]
  %s5 = inlined_call_operand.vmem [shape: f32[16,128], index: 5, kind: input, shape index: {}]
  %s6 = inlined_call_operand.hbm [shape: f32[16,128], index: 6, kind: output, shape index: {0}]
  %s7 = inlined_call_operand.hbm [shape: f32[16,128,128], index: 7, kind: output, shape index: {1}]
  %s8 = inlined_call_operand.hbm [shape: f32[16,128], index: 8, kind: output, shape index: {2}]
  %s9 = inlined_call_operand.hbm [shape: f32[16,128], index: 9, kind: output, shape index: {3}]
  %10 = xla_tuple %s6, %s7, %s8, %s9
  %s11 = sld [smem:[#allocation0]]
  $region101: #{tpu_custom_call.1} parent=0
    _
  %s13 = ssub.s32 1, %s11
  %s14 = scalar_select 0, %s13, %s11
  $region1: #{tpu_custom_call.1} parent=0
    #allocation3 [shape = 'u8[8192]{0}', space=vmem, size = 0x2000, scoped, tag = 'input window, operand 0']
    #allocation4 [shape = 's32[2]{0}', space=sflag, size = 0x8, scoped, tag = 'scoped memory for tpu_custom_call.1']
    #allocation5 [shape = 's32[2]{0}', space=sflag, size = 0x8, scoped, tag = 'scoped memory for tpu_custom_call.1']
    #allocation6 [shape = 'u8[196608]{0}', space=vmem, size = 0x30000, scoped, tag = 'input window, operand 1, single buffered']
    #allocation7 [shape = 's32[1]{0}', space=sflag, size = 0x4, scoped, tag = 'scoped memory for tpu_custom_call.1']
    #allocation8 [shape = 'u8[3072]{0}', space=vmem, size = 0xc00, scoped, tag = 'input window, operand 2, single buffered']
    #allocation9 [shape = 'u8[1048576]{0}', space=vmem, size = 0x100000, scoped, tag = 'input window, operand 3']
    #allocation10 [shape = 's32[2]{0}', space=sflag, size = 0x8, scoped, tag = 'scoped memory for tpu_custom_call.1']
    #allocation11 [shape = 'u8[8192]{0}', space=vmem, size = 0x2000, scoped, tag = 'input window, operand 4']
    #allocation12 [shape = 'u8[8192]{0}', space=vmem, size = 0x2000, scoped, tag = 'output window, operand 0']
    #allocation13 [shape = 'u8[1048576]{0}', space=vmem, size = 0x100000, scoped, tag = 'output window, operand 1']
    #allocation14 [shape = 's32[2]{0}', space=sflag, size = 0x8, scoped, tag = 'scoped memory for tpu_custom_call.1']
    #allocation15 [shape = 'u8[8192]{0}', space=vmem, size = 0x2000, scoped, tag = 'output window, operand 2']
    #allocation16 [shape = 'u8[8192]{0}', space=vmem, size = 0x2000, scoped, tag = 'output window, operand 3']
    #allocation17 [shape = 's32[2]{0}', space=sflag, size = 0x8, scoped, tag = 'scoped memory for tpu_custom_call.1']
    %15 = vsyncpa [#allocation4], 0
    %s16 = scalar_lea.sflag [#allocation4], 1
    %17 = vsyncpa %s16, 0
    %18 = vsyncpa [#allocation7], 0
    %19 = vsyncpa [#allocation10], 0
    %s20 = scalar_lea.sflag [#allocation10], 1
    %21 = vsyncpa %s20, 0
    %22 = vsyncpa [#allocation5], 0
    %s23 = scalar_lea.sflag [#allocation5], 1
    %24 = vsyncpa %s23, 0
    %25 = vsyncpa [#allocation14], 0
    %s26 = scalar_lea.sflag [#allocation14], 1
    %27 = vsyncpa %s26, 0
    %28 = vsyncpa [#allocation17], 0
    %s29 = scalar_lea.sflag [#allocation17], 1
    %30 = vsyncpa %s29, 0
    loop: start=0, step=1, limit=4
    $region2: #{tpu_custom_call.1} parent=1 // loop_pre_header
      _
    $region3: #{tpu_custom_call.1} parent=1 // loop_header
      %s32 = sphi 0, %s36
      %p33 = scmp.ge.s32.totalorder %s32, 4
      %s42 = sphi 0, %s44
      %s45 = sphi 0, %s42
      %s46 = sphi 0, %s45
      %s62 = sphi 0, %s46
      %s66 = sphi 0, %s66
      %s68 = sphi 0, %s66
      %s69 = sphi 0, %s68
      %s83 = sphi 0, %s69
      %s87 = sphi 0, %s87
      %s89 = sphi 0, %s87
      %s90 = sphi 0, %s89
      %s104 = sphi 0, %s90
      %s110 = sphi 0, %s112
      %s113 = sphi 0, %s110
      %s114 = sphi 0, %s113
      %s130 = sphi 0, %s114
      %s136 = sphi 0, %s138
      %s139 = sphi 0, %s136
      %s140 = sphi 0, %s139
      %s156 = sphi 0, %s140
      %s162 = sphi 0, %s164
      %s165 = sphi 0, %s162
      %s166 = sphi 0, %s165
      %s182 = sphi 0, %s166
      %s188 = sphi 0, %s190
      %s191 = sphi 0, %s188
      %s192 = sphi 0, %s191
      %s208 = sphi 0, %s192
      %s214 = sphi 0, %s216
      %s217 = sphi 0, %s214
      %s218 = sphi 0, %s217
      %s234 = sphi 0, %s218
      %s240 = sphi 0, %s242
      %s243 = sphi 0, %s240
      %s244 = sphi 0, %s243
      %s260 = sphi 0, %s244
      %s266 = sphi 0, %s268
      %s269 = sphi 0, %s266
      %s270 = sphi 0, %s269
      %s286 = sphi 0, %s270
    $region4: #{tpu_custom_call.1} parent=1 // loop_header_branch
      %35 = sbr.rel (%p33) target = $region8
    $region5: #{tpu_custom_call.1} parent=1 // loop_body
      %s37 = ssub.s32 %s32, 1
      %s38 = ssub.s32 %s32, 2
      %s39 = sadd.s32 %s32, 1
      %s40 = ssub.s32 %s32, %s39
      %p41 = scmp.eq.s32.totalorder %s40, 0
      %s43 = sadd.s32 %s42, 1
      %s44 = scalar_select %p41, %s42, %s43
      %p47 = pneg %p41
      %p48 = scmp.eq.s32.totalorder %s32, 1
      %p49 = por %p47, %p48
      %p50 = scmp.ne.s32.totalorder %s42, %s45
      %p51 = scmp.eq.s32.totalorder %s32, 0
      %p52 = por %p50, %p51
      %p53 = scmp.ne.s32.totalorder %s42, %s45
      %p54 = scmp.eq.s32.totalorder %s37, 1
      %p55 = por %p53, %p54
      %p56 = scmp.ne.s32.totalorder %s45, %s46
      %p57 = scmp.eq.s32.totalorder %s37, 0
      %p58 = por %p56, %p57
      %p59 = scmp.ne.s32.totalorder %s45, %s46
      %p60 = scmp.eq.s32.totalorder %s38, 1
      %p61 = por %p59, %p60
      %p63 = scmp.ne.s32.totalorder %s46, %s62
      %p64 = scmp.eq.s32.totalorder %s38, 0
      %p65 = por %p63, %p64
      %s67 = sadd.s32 %s66, 1
      %p70 = scmp.eq.s32.totalorder %s32, 1
      %p71 = scmp.ne.s32.totalorder %s66, %s68
      %p72 = scmp.eq.s32.totalorder %s32, 0
      %p73 = por %p71, %p72
      %p74 = scmp.ne.s32.totalorder %s66, %s68
      %p75 = scmp.eq.s32.totalorder %s37, 1
      %p76 = por %p74, %p75
      %p77 = scmp.ne.s32.totalorder %s68, %s69
      %p78 = scmp.eq.s32.totalorder %s37, 0
      %p79 = por %p77, %p78
      %p80 = scmp.ne.s32.totalorder %s68, %s69
      %p81 = scmp.eq.s32.totalorder %s38, 1
      %p82 = por %p80, %p81
      %p84 = scmp.ne.s32.totalorder %s69, %s83
      %p85 = scmp.eq.s32.totalorder %s38, 0
      %p86 = por %p84, %p85
      %s88 = sadd.s32 %s87, 1
      %p91 = scmp.eq.s32.totalorder %s32, 1
      %p92 = scmp.ne.s32.totalorder %s87, %s89
      %p93 = scmp.eq.s32.totalorder %s32, 0
      %p94 = por %p92, %p93
      %p95 = scmp.ne.s32.totalorder %s87, %s89
      %p96 = scmp.eq.s32.totalorder %s37, 1
      %p97 = por %p95, %p96
      %p98 = scmp.ne.s32.totalorder %s89, %s90
      %p99 = scmp.eq.s32.totalorder %s37, 0
      %p100 = por %p98, %p99
      %p101 = scmp.ne.s32.totalorder %s89, %s90
      %p102 = scmp.eq.s32.totalorder %s38, 1
      %p103 = por %p101, %p102
      %p105 = scmp.ne.s32.totalorder %s90, %s104
      %p106 = scmp.eq.s32.totalorder %s38, 0
      %p107 = por %p105, %p106
      %s108 = ssub.s32 %s32, %s39
      %p109 = scmp.eq.s32.totalorder %s108, 0
      %s111 = sadd.s32 %s110, 1
      %s112 = scalar_select %p109, %s110, %s111
      %p115 = pneg %p109
      %p116 = scmp.eq.s32.totalorder %s32, 1
      %p117 = por %p115, %p116
      %p118 = scmp.ne.s32.totalorder %s110, %s113
      %p119 = scmp.eq.s32.totalorder %s32, 0
      %p120 = por %p118, %p119
      %p121 = scmp.ne.s32.totalorder %s110, %s113
      %p122 = scmp.eq.s32.totalorder %s37, 1
      %p123 = por %p121, %p122
      %p124 = scmp.ne.s32.totalorder %s113, %s114
      %p125 = scmp.eq.s32.totalorder %s37, 0
      %p126 = por %p124, %p125
      %p127 = scmp.ne.s32.totalorder %s113, %s114
      %p128 = scmp.eq.s32.totalorder %s38, 1
      %p129 = por %p127, %p128
      %p131 = scmp.ne.s32.totalorder %s114, %s130
      %p132 = scmp.eq.s32.totalorder %s38, 0
      %p133 = por %p131, %p132
      %s134 = ssub.s32 %s32, %s39
      %p135 = scmp.eq.s32.totalorder %s134, 0
      %s137 = sadd.s32 %s136, 1
      %s138 = scalar_select %p135, %s136, %s137
      %p141 = pneg %p135
      %p142 = scmp.eq.s32.totalorder %s32, 1
      %p143 = por %p141, %p142
      %p144 = scmp.ne.s32.totalorder %s136, %s139
      %p145 = scmp.eq.s32.totalorder %s32, 0
      %p146 = por %p144, %p145
      %p147 = scmp.ne.s32.totalorder %s136, %s139
      %p148 = scmp.eq.s32.totalorder %s37, 1
      %p149 = por %p147, %p148
      %p150 = scmp.ne.s32.totalorder %s139, %s140
      %p151 = scmp.eq.s32.totalorder %s37, 0
      %p152 = por %p150, %p151
      %p153 = scmp.ne.s32.totalorder %s139, %s140
      %p154 = scmp.eq.s32.totalorder %s38, 1
      %p155 = por %p153, %p154
      %p157 = scmp.ne.s32.totalorder %s140, %s156
      %p158 = scmp.eq.s32.totalorder %s38, 0
      %p159 = por %p157, %p158
      %s160 = ssub.s32 %s32, %s39
      %p161 = scmp.eq.s32.totalorder %s160, 0
      %s163 = sadd.s32 %s162, 1
      %s164 = scalar_select %p161, %s162, %s163
      %p167 = pneg %p161
      %p168 = scmp.eq.s32.totalorder %s32, 1
      %p169 = por %p167, %p168
      %p170 = scmp.ne.s32.totalorder %s162, %s165
      %p171 = scmp.eq.s32.totalorder %s32, 0
      %p172 = por %p170, %p171
      %p173 = scmp.ne.s32.totalorder %s162, %s165
      %p174 = scmp.eq.s32.totalorder %s37, 1
      %p175 = por %p173, %p174
      %p176 = scmp.ne.s32.totalorder %s165, %s166
      %p177 = scmp.eq.s32.totalorder %s37, 0
      %p178 = por %p176, %p177
      %p179 = scmp.ne.s32.totalorder %s165, %s166
      %p180 = scmp.eq.s32.totalorder %s38, 1
      %p181 = por %p179, %p180
      %p183 = scmp.ne.s32.totalorder %s166, %s182
      %p184 = scmp.eq.s32.totalorder %s38, 0
      %p185 = por %p183, %p184
      %s186 = ssub.s32 %s32, %s39
      %p187 = scmp.eq.s32.totalorder %s186, 0
      %s189 = sadd.s32 %s188, 1
      %s190 = scalar_select %p187, %s188, %s189
      %p193 = pneg %p187
      %p194 = scmp.eq.s32.totalorder %s32, 1
      %p195 = por %p193, %p194
      %p196 = scmp.ne.s32.totalorder %s188, %s191
      %p197 = scmp.eq.s32.totalorder %s32, 0
      %p198 = por %p196, %p197
      %p199 = scmp.ne.s32.totalorder %s188, %s191
      %p200 = scmp.eq.s32.totalorder %s37, 1
      %p201 = por %p199, %p200
      %p202 = scmp.ne.s32.totalorder %s191, %s192
      %p203 = scmp.eq.s32.totalorder %s37, 0
      %p204 = por %p202, %p203
      %p205 = scmp.ne.s32.totalorder %s191, %s192
      %p206 = scmp.eq.s32.totalorder %s38, 1
      %p207 = por %p205, %p206
      %p209 = scmp.ne.s32.totalorder %s192, %s208
      %p210 = scmp.eq.s32.totalorder %s38, 0
      %p211 = por %p209, %p210
      %s212 = ssub.s32 %s32, %s39
      %p213 = scmp.eq.s32.totalorder %s212, 0
      %s215 = sadd.s32 %s214, 1
      %s216 = scalar_select %p213, %s214, %s215
      %p219 = pneg %p213
      %p220 = scmp.eq.s32.totalorder %s32, 1
      %p221 = por %p219, %p220
      %p222 = scmp.ne.s32.totalorder %s214, %s217
      %p223 = scmp.eq.s32.totalorder %s32, 0
      %p224 = por %p222, %p223
      %p225 = scmp.ne.s32.totalorder %s214, %s217
      %p226 = scmp.eq.s32.totalorder %s37, 1
      %p227 = por %p225, %p226
      %p228 = scmp.ne.s32.totalorder %s217, %s218
      %p229 = scmp.eq.s32.totalorder %s37, 0
      %p230 = por %p228, %p229
      %p231 = scmp.ne.s32.totalorder %s217, %s218
      %p232 = scmp.eq.s32.totalorder %s38, 1
      %p233 = por %p231, %p232
      %p235 = scmp.ne.s32.totalorder %s218, %s234
      %p236 = scmp.eq.s32.totalorder %s38, 0
      %p237 = por %p235, %p236
      %s238 = ssub.s32 %s32, %s39
      %p239 = scmp.eq.s32.totalorder %s238, 0
      %s241 = sadd.s32 %s240, 1
      %s242 = scalar_select %p239, %s240, %s241
      %p245 = pneg %p239
      %p246 = scmp.eq.s32.totalorder %s32, 1
      %p247 = por %p245, %p246
      %p248 = scmp.ne.s32.totalorder %s240, %s243
      %p249 = scmp.eq.s32.totalorder %s32, 0
      %p250 = por %p248, %p249
      %p251 = scmp.ne.s32.totalorder %s240, %s243
      %p252 = scmp.eq.s32.totalorder %s37, 1
      %p253 = por %p251, %p252
      %p254 = scmp.ne.s32.totalorder %s243, %s244
      %p255 = scmp.eq.s32.totalorder %s37, 0
      %p256 = por %p254, %p255
      %p257 = scmp.ne.s32.totalorder %s243, %s244
      %p258 = scmp.eq.s32.totalorder %s38, 1
      %p259 = por %p257, %p258
      %p261 = scmp.ne.s32.totalorder %s244, %s260
      %p262 = scmp.eq.s32.totalorder %s38, 0
      %p263 = por %p261, %p262
      %s264 = ssub.s32 %s32, %s39
      %p265 = scmp.eq.s32.totalorder %s264, 0
      %s267 = sadd.s32 %s266, 1
      %s268 = scalar_select %p265, %s266, %s267
      %p271 = pneg %p265
      %p272 = scmp.eq.s32.totalorder %s32, 1
      %p273 = por %p271, %p272
      %p274 = scmp.ne.s32.totalorder %s266, %s269
      %p275 = scmp.eq.s32.totalorder %s32, 0
      %p276 = por %p274, %p275
      %p277 = scmp.ne.s32.totalorder %s266, %s269
      %p278 = scmp.eq.s32.totalorder %s37, 1
      %p279 = por %p277, %p278
      %p280 = scmp.ne.s32.totalorder %s269, %s270
      %p281 = scmp.eq.s32.totalorder %s37, 0
      %p282 = por %p280, %p281
      %p283 = scmp.ne.s32.totalorder %s269, %s270
      %p284 = scmp.eq.s32.totalorder %s38, 1
      %p285 = por %p283, %p284
      %p287 = scmp.ne.s32.totalorder %s270, %s286
      %p288 = scmp.eq.s32.totalorder %s38, 0
      %p289 = por %p287, %p288
      %p290 = scmp.le.s32.totalorder 1, %s32
      %p291 = scmp.lt.s32.totalorder %s32, 3
      %p292 = pnand %p290, %p291
      %p293 = pneg %p292
      // Predicated region
      $region9: #{tpu_custom_call.1} parent=5 // pred_check
        _
      $region10: #{tpu_custom_call.1} parent=5 // pred_check_branch
        %295 = sbr.rel (%p292) target = $region12
      $region11: #{tpu_custom_call.1} parent=5 // pred_region
        %s296 = ssub.s32 %s32, 1
        // Predicated region
        $region13: #{tpu_custom_call.1} parent=11 // pred_check
          %p297 = pneg %p79
        $region14: #{tpu_custom_call.1} parent=11 // pred_check_branch
          %299 = sbr.rel (%p297) target = $region16
        $region15: #{tpu_custom_call.1} parent=11 // pred_region
          %s301 = ssub.s32 6144, 6144
          %302 = vsyncadd [#allocation7], %s301
          %s303 = sshll.u32 [#allocation6], 4
          %s304 = int_to_ptr.vmem [resolvable:$true] %s303
          %309 = dma.hbm_to_vmem [thread:$0]  %s1, 6144, %s304, [#allocation7], 768, 768, 48
        $region16: #{tpu_custom_call.1} parent=11 // pred_fallthru
          _
        // Predicated region
        $region17: #{tpu_custom_call.1} parent=11 // pred_check
          %p310 = pneg %p100
        $region18: #{tpu_custom_call.1} parent=11 // pred_check_branch
          %312 = sbr.rel (%p310) target = $region20
        $region19: #{tpu_custom_call.1} parent=11 // pred_region
          %s314 = ssub.s32 96, 96
          %315 = vsyncadd [#allocation7], %s314
          %s317 = sshll.u32 [#allocation8], 4
          %s318 = int_to_ptr.vmem [resolvable:$true] %s317
          %320 = dma.hbm_to_vmem [thread:$0]  %s2, 96, %s318, [#allocation7]
        $region20: #{tpu_custom_call.1} parent=11 // pred_fallthru
          _
      $region12: #{tpu_custom_call.1} parent=5 // pred_fallthru
        _
      %p321 = scmp.lt.s32.totalorder %s32, 2
      // Predicated region
      $region21: #{tpu_custom_call.1} parent=5 // pred_check
        %p322 = pneg %p321
      $region22: #{tpu_custom_call.1} parent=5 // pred_check_branch
        %324 = sbr.rel (%p322) target = $region24
      $region23: #{tpu_custom_call.1} parent=5 // pred_region
        // Predicated region
        $region25: #{tpu_custom_call.1} parent=23 // pred_check
          %p325 = pneg %p52
        $region26: #{tpu_custom_call.1} parent=23 // pred_check_branch
          %327 = sbr.rel (%p325) target = $region28
        $region27: #{tpu_custom_call.1} parent=23 // pred_region
          %s328 = sand.u32 %s42, 1
          %s329 = scalar_lea.sflag [#allocation4], %s328
          %s330 = sand.u32 %s42, 1
          %s331 = smul.addr %s330, 8
          %s332 = scalar_lea.vmem [#allocation3], %s331
          %s334 = ssub.s32 128, 128
          %335 = vsyncadd %s329, %s334
          %s336 = smul.addr %s32, 128
          %s337 = scalar_lea.hbm %s0, %s336
          %s339 = sshll.u32 %s332, 4
          %s340 = int_to_ptr.vmem [resolvable:$true] %s339
          %342 = dma.hbm_to_vmem [thread:$0]  %s337, 128, %s340, %s329
        $region28: #{tpu_custom_call.1} parent=23 // pred_fallthru
          _
        // Predicated region
        $region29: #{tpu_custom_call.1} parent=23 // pred_check
          %p343 = pneg %p120
        $region30: #{tpu_custom_call.1} parent=23 // pred_check_branch
          %345 = sbr.rel (%p343) target = $region32
        $region31: #{tpu_custom_call.1} parent=23 // pred_region
          %s346 = sand.u32 %s32, 1
          %s347 = scalar_lea.sflag [#allocation10], %s346
          %s348 = sand.u32 %s110, 1
          %s349 = smul.addr %s348, 1024
          %s350 = scalar_lea.vmem [#allocation9], %s349
          %s351 = smul.u32 8, %s32
          %s353 = ssub.s32 16384, 16384
          %354 = vsyncadd %s347, %s353
          %s355 = smul.addr %s351, 16
          %s356 = smul.addr %s355, 128
          %s357 = scalar_lea.hbm %s3, %s356
          %s358 = sshll.u32 %s350, 4
          %s359 = int_to_ptr.vmem [resolvable:$true] %s358
          %364 = dma.hbm_to_vmem [thread:$0]  %s357, 16384, %s359, %s347, 128, 128, 8
        $region32: #{tpu_custom_call.1} parent=23 // pred_fallthru
          _
        // Predicated region
        $region33: #{tpu_custom_call.1} parent=23 // pred_check
          %p365 = pneg %p146
        $region34: #{tpu_custom_call.1} parent=23 // pred_check_branch
          %367 = sbr.rel (%p365) target = $region36
        $region35: #{tpu_custom_call.1} parent=23 // pred_region
          %s368 = sand.u32 %s32, 1
          %s369 = scalar_lea.sflag [#allocation10], %s368
          %s370 = sand.u32 %s136, 1
          %s371 = smul.addr %s370, 8
          %s372 = scalar_lea.vmem [#allocation11], %s371
          %s374 = ssub.s32 128, 128
          %375 = vsyncadd %s369, %s374
          %s376 = smul.addr %s32, 128
          %s377 = scalar_lea.hbm %s4, %s376
          %s379 = sshll.u32 %s372, 4
          %s380 = int_to_ptr.vmem [resolvable:$true] %s379
          %382 = dma.hbm_to_vmem [thread:$0]  %s377, 128, %s380, %s369
        $region36: #{tpu_custom_call.1} parent=23 // pred_fallthru
          _
        // Predicated region
        $region37: #{tpu_custom_call.1} parent=23 // pred_check
          %p383 = pneg %p172
        $region38: #{tpu_custom_call.1} parent=23 // pred_check_branch
          %385 = sbr.rel (%p383) target = $region40
        $region39: #{tpu_custom_call.1} parent=23 // pred_region
          %p386 = scmp.lt.s32.totalorder %s32, 1
          %s387 = scalar_select %p386, %s32, 1
          %s388 = smul.addr %s387, 8
          %s389 = scalar_lea.vmem %s5, %s388
        $region40: #{tpu_custom_call.1} parent=23 // pred_fallthru
          _
      $region24: #{tpu_custom_call.1} parent=5 // pred_fallthru
        _
      %p390 = scmp.le.s32.totalorder 1, %s32
      %p391 = scmp.lt.s32.totalorder %s32, 3
      %p392 = pnand %p390, %p391
      %p393 = pneg %p392
      // Predicated region
      $region41: #{tpu_custom_call.1} parent=5 // pred_check
        _
      $region42: #{tpu_custom_call.1} parent=5 // pred_check_branch
        %395 = sbr.rel (%p392) target = $region44
      $region43: #{tpu_custom_call.1} parent=5 // pred_region
        %s396 = ssub.s32 %s32, 1
        %s397 = sand.u32 %s45, 1
        %s398 = scalar_lea.sflag [#allocation4], %s397
        %s399 = sand.u32 %s45, 1
        %s400 = smul.addr %s399, 8
        %s401 = scalar_lea.vmem [#allocation3], %s400
        // Predicated region
        $region45: #{tpu_custom_call.1} parent=43 // pred_check
          %p402 = pneg %p58
        $region46: #{tpu_custom_call.1} parent=43 // pred_check_branch
          %404 = sbr.rel (%p402) target = $region48
        $region47: #{tpu_custom_call.1} parent=43 // pred_region
          %405 = dma.done %s398, 128
        $region48: #{tpu_custom_call.1} parent=43 // pred_fallthru
          _
        // Predicated region
        $region49: #{tpu_custom_call.1} parent=43 // pred_check
          %p406 = pneg %p79
        $region50: #{tpu_custom_call.1} parent=43 // pred_check_branch
          %408 = sbr.rel (%p406) target = $region52
        $region51: #{tpu_custom_call.1} parent=43 // pred_region
          %409 = dma.done [#allocation7], 6144
        $region52: #{tpu_custom_call.1} parent=43 // pred_fallthru
          _
        // Predicated region
        $region53: #{tpu_custom_call.1} parent=43 // pred_check
          %p410 = pneg %p100
        $region54: #{tpu_custom_call.1} parent=43 // pred_check_branch
          %412 = sbr.rel (%p410) target = $region56
        $region55: #{tpu_custom_call.1} parent=43 // pred_region
          %413 = dma.done [#allocation7], 96
        $region56: #{tpu_custom_call.1} parent=43 // pred_fallthru
          _
        %s414 = sand.u32 %s37, 1
        %s415 = scalar_lea.sflag [#allocation10], %s414
        %s416 = sand.u32 %s113, 1
        %s417 = smul.addr %s416, 1024
        %s418 = scalar_lea.vmem [#allocation9], %s417
        // Predicated region
        $region57: #{tpu_custom_call.1} parent=43 // pred_check
          %p419 = pneg %p126
        $region58: #{tpu_custom_call.1} parent=43 // pred_check_branch
          %421 = sbr.rel (%p419) target = $region60
        $region59: #{tpu_custom_call.1} parent=43 // pred_region
          %422 = dma.done %s415, 16384
        $region60: #{tpu_custom_call.1} parent=43 // pred_fallthru
          _
        %s423 = sand.u32 %s37, 1
        %s424 = scalar_lea.sflag [#allocation10], %s423
        %s425 = sand.u32 %s139, 1
        %s426 = smul.addr %s425, 8
        %s427 = scalar_lea.vmem [#allocation11], %s426
        // Predicated region
        $region61: #{tpu_custom_call.1} parent=43 // pred_check
          %p428 = pneg %p152
        $region62: #{tpu_custom_call.1} parent=43 // pred_check_branch
          %430 = sbr.rel (%p428) target = $region64
        $region63: #{tpu_custom_call.1} parent=43 // pred_region
          %431 = dma.done %s424, 128
        $region64: #{tpu_custom_call.1} parent=43 // pred_fallthru
          _
        %s432 = sand.u32 %s45, 1
        %s433 = scalar_lea.sflag [#allocation4], %s432
        %s434 = sand.u32 %s45, 1
        %s435 = smul.addr %s434, 8
        %s436 = scalar_lea.vmem [#allocation3], %s435
        %p437 = pneg %p58
        %p438 = pneg %p55
        %p439 = pneg %p79
        %p440 = pneg %p76
        %p441 = pneg %p100
        %p442 = pneg %p97
        %s443 = sand.u32 %s37, 1
        %s444 = scalar_lea.sflag [#allocation10], %s443
        %s445 = sand.u32 %s113, 1
        %s446 = smul.addr %s445, 1024
        %s447 = scalar_lea.vmem [#allocation9], %s446
        %p448 = pneg %p126
        %p449 = pneg %p123
        %s450 = sand.u32 %s37, 1
        %s451 = scalar_lea.sflag [#allocation10], %s450
        %s452 = sand.u32 %s139, 1
        %s453 = smul.addr %s452, 8
        %s454 = scalar_lea.vmem [#allocation11], %s453
        %p455 = pneg %p152
        %p456 = pneg %p149
        %p457 = scmp.lt.s32.totalorder %s37, 1
        %s458 = scalar_select %p457, %s37, 1
        %s459 = smul.addr %s458, 8
        %s460 = scalar_lea.vmem %s5, %s459
        %p461 = pneg %p178
        %p462 = pneg %p175
        %p463 = pneg %p204
        %p464 = pneg %p201
        %s465 = sand.u32 %s191, 1
        %s466 = scalar_lea.sflag [#allocation5], %s465
        %s467 = sand.u32 %s191, 1
        %s468 = smul.addr %s467, 8
        %s469 = scalar_lea.vmem [#allocation12], %s468
        %p470 = pneg %p230
        %p471 = pneg %p227
        %s472 = sand.u32 %s37, 1
        %s473 = scalar_lea.sflag [#allocation14], %s472
        %s474 = sand.u32 %s217, 1
        %s475 = smul.addr %s474, 1024
        %s476 = scalar_lea.vmem [#allocation13], %s475
        %p477 = pneg %p256
        %p478 = pneg %p253
        %s479 = sand.u32 %s37, 1
        %s480 = scalar_lea.sflag [#allocation14], %s479
        %s481 = sand.u32 %s243, 1
        %s482 = smul.addr %s481, 8
        %s483 = scalar_lea.vmem [#allocation15], %s482
        %p484 = pneg %p282
        %p485 = pneg %p279
        %s486 = sand.u32 %s269, 1
        %s487 = scalar_lea.sflag [#allocation17], %s486
        %s488 = sand.u32 %s269, 1
        %s489 = smul.addr %s488, 8
        %s490 = scalar_lea.vmem [#allocation16], %s489
        %s491 = smul.u32 8, %s37
        %p492 = scmp.lt.s32.totalorder %s37, 1
        %s493 = scalar_select %p492, %s37, 1
        %s494 = smul.addr %s493, 8
        %s495 = scalar_lea.vmem %s5, %s494
        %s496 = smul.u32 8, %s37
        %v497 = vld [vmem:[%s401] sm:$0xff]
        %v498 = vld [vmem:[#allocation6] sm:$0xff]
        %v499 = vld [vmem:[#allocation6 + $0x8] sm:$0xff]
        %v500 = vld [vmem:[#allocation6 + $0x10] sm:$0xff]
        %v501 = vld [vmem:[#allocation6 + $0x18] sm:$0xff]
        %v502 = vld [vmem:[#allocation6 + $0x20] sm:$0xff]
        %v503 = vld [vmem:[#allocation6 + $0x28] sm:$0xff]
        %v504 = vld [vmem:[#allocation6 + $0x30] sm:$0xff]
        %v505 = vld [vmem:[#allocation6 + $0x38] sm:$0xff]
        %v506 = vld [vmem:[#allocation6 + $0x40] sm:$0xff]
        %v507 = vld [vmem:[#allocation6 + $0x48] sm:$0xff]
        %v508 = vld [vmem:[#allocation6 + $0x50] sm:$0xff]
        %v509 = vld [vmem:[#allocation6 + $0x58] sm:$0xff]
        %v510 = vld [vmem:[#allocation6 + $0x60] sm:$0xff]
        %v511 = vld [vmem:[#allocation6 + $0x68] sm:$0xff]
        %v512 = vld [vmem:[#allocation6 + $0x70] sm:$0xff]
        %v513 = vld [vmem:[#allocation6 + $0x78] sm:$0xff]
        %v514 = vld [vmem:[#allocation6 + $0x80] sm:$0xff]
        %v515 = vld [vmem:[#allocation6 + $0x88] sm:$0xff]
        %v516 = vld [vmem:[#allocation6 + $0x90] sm:$0xff]
        %v517 = vld [vmem:[#allocation6 + $0x98] sm:$0xff]
        %v518 = vld [vmem:[#allocation6 + $0xa0] sm:$0xff]
        %v519 = vld [vmem:[#allocation6 + $0xa8] sm:$0xff]
        %v520 = vld [vmem:[#allocation6 + $0xb0] sm:$0xff]
        %v521 = vld [vmem:[#allocation6 + $0xb8] sm:$0xff]
        %v522 = vld [vmem:[#allocation6 + $0xc0] sm:$0xff]
        %v523 = vld [vmem:[#allocation6 + $0xc8] sm:$0xff]
        %v524 = vld [vmem:[#allocation6 + $0xd0] sm:$0xff]
        %v525 = vld [vmem:[#allocation6 + $0xd8] sm:$0xff]
        %v526 = vld [vmem:[#allocation6 + $0xe0] sm:$0xff]
        %v527 = vld [vmem:[#allocation6 + $0xe8] sm:$0xff]
        %v528 = vld [vmem:[#allocation6 + $0xf0] sm:$0xff]
        %v529 = vld [vmem:[#allocation6 + $0xf8] sm:$0xff]
        %v530 = vld [vmem:[#allocation6 + $0x100] sm:$0xff]
        %v531 = vld [vmem:[#allocation6 + $0x108] sm:$0xff]
        %v532 = vld [vmem:[#allocation6 + $0x110] sm:$0xff]
        %v533 = vld [vmem:[#allocation6 + $0x118] sm:$0xff]
        %v534 = vld [vmem:[#allocation6 + $0x120] sm:$0xff]
        %v535 = vld [vmem:[#allocation6 + $0x128] sm:$0xff]
        %v536 = vld [vmem:[#allocation6 + $0x130] sm:$0xff]
        %v537 = vld [vmem:[#allocation6 + $0x138] sm:$0xff]
        %v538 = vld [vmem:[#allocation6 + $0x140] sm:$0xff]
        %v539 = vld [vmem:[#allocation6 + $0x148] sm:$0xff]
        %v540 = vld [vmem:[#allocation6 + $0x150] sm:$0xff]
        %v541 = vld [vmem:[#allocation6 + $0x158] sm:$0xff]
        %v542 = vld [vmem:[#allocation6 + $0x160] sm:$0xff]
        %v543 = vld [vmem:[#allocation6 + $0x168] sm:$0xff]
        %v544 = vld [vmem:[#allocation6 + $0x170] sm:$0xff]
        %v545 = vld [vmem:[#allocation6 + $0x178] sm:$0xff]
        %v546 = vld [vmem:[#allocation8] sm:$0x3f]
        %v548 = vlaneseq
        %v549 = vshrl.u32 %v548, 7
        %v550 = vsub.s32 0, %v549
        %v551 = vrot.slane %v546, %v550
        %v552 = vlaneseq
        %v553 = vshrl.u32 %v552, 7
        %v554 = vsub.s32 1, %v553
        %v555 = vrot.slane %v546, %v554
        %v556 = vlaneseq
        %v557 = vshrl.u32 %v556, 7
        %v558 = vsub.s32 2, %v557
        %v559 = vrot.slane %v546, %v558
        %v560 = vlaneseq
        %v561 = vshrl.u32 %v560, 7
        %v562 = vsub.s32 3, %v561
        %v563 = vrot.slane %v546, %v562
        %v564 = vlaneseq
        %v565 = vshrl.u32 %v564, 7
        %v566 = vsub.s32 4, %v565
        %v567 = vrot.slane %v546, %v566
        %v568 = vlaneseq
        %v569 = vshrl.u32 %v568, 7
        %v570 = vsub.s32 5, %v569
        %v571 = vrot.slane %v546, %v570
        %vm578 = vcmask 523264
        %v580 = vsel %vm578, %v497, 0
        %582 = vmatprep.subr.mxu0 %v499
        %583 = vmatpush1.msra.mxu0 %v498
        %584 = vmatprep.subr.mxu0 %v505
        %585 = vmatpush1.msra.mxu0 %v504
        %586 = vmatprep.subr.mxu0 %v511
        %587 = vmatpush1.msra.mxu0 %v510
        %588 = vmatprep.subr.mxu0 %v517
        %589 = vmatpush1.msra.mxu0 %v516
        %590 = vmatprep.subr.mxu0 %v523
        %591 = vmatpush1.msra.mxu0 %v522
        %592 = vmatprep.subr.mxu0 %v529
        %593 = vmatpush1.msra.mxu0 %v528
        %594 = vmatprep.subr.mxu0 %v535
        %595 = vmatpush1.msra.mxu0 %v534
        %596 = vmatprep.subr.mxu0 %v541
        %597 = vmatpush1.msra.mxu0 %v540
        %598 = vmatprep.subr.mxu0 0.0
        %599 = vmatpush1.msra.mxu0 0.0
        %600 = vmatprep.subr.mxu0 0.0
        %601 = vmatpush1.msra.mxu0 0.0
        %602 = vmatprep.subr.mxu0 0.0
        %603 = vmatpush1.msra.mxu0 0.0
        %604 = vmatprep.subr.mxu0 0.0
        %605 = vmatpush1.msra.mxu0 0.0
        %606 = vmatprep.subr.mxu0 0.0
        %607 = vmatpush1.msra.mxu0 0.0
        %608 = vmatprep.subr.mxu0 0.0
        %609 = vmatpush1.msra.mxu0 0.0
        %610 = vmatprep.subr.mxu0 0.0
        %611 = vmatpush1.msra.mxu0 0.0
        %612 = vmatprep.subr.mxu0 0.0
        %613 = vmatpush1.msra.mxu0 0.0
        %614 = vmatprep.subr.mxu0 0.0
        %615 = vmatpush1.msra.mxu0 0.0
        %616 = vmatprep.subr.mxu0 0.0
        %617 = vmatpush1.msra.mxu0 0.0
        %618 = vmatprep.subr.mxu0 0.0
        %619 = vmatpush1.msra.mxu0 0.0
        %620 = vmatprep.subr.mxu0 0.0
        %621 = vmatpush1.msra.mxu0 0.0
        %622 = vmatprep.subr.mxu0 0.0
        %623 = vmatpush1.msra.mxu0 0.0
        %624 = vmatprep.subr.mxu0 0.0
        %625 = vmatpush1.msra.mxu0 0.0
        %626 = vmatprep.subr.mxu0 0.0
        %627 = vmatpush1.msra.mxu0 0.0
        %628 = vmatprep.subr.mxu0 0.0
        %629 = vmatpush1.msra.mxu0 0.0
        %630 = vmatprep.subr.mxu0 0.0
        %631 = vmatpush1.msra.mxu0 0.0
        %632 = vmatprep.subr.mxu0 0.0
        %633 = vmatpush1.msra.mxu0 0.0
        %634 = vmatprep.subr.mxu0 0.0
        %635 = vmatpush1.msra.mxu0 0.0
        %636 = vmatprep.subr.mxu0 0.0
        %637 = vmatpush1.msra.mxu0 0.0
        %638 = vmatprep.subr.mxu0 0.0
        %639 = vmatpush1.msra.mxu0 0.0
        %640 = vmatprep.subr.mxu0 0.0
        %641 = vmatpush1.msra.mxu0 0.0
        %642 = vmatprep.subr.mxu0 0.0
        %643 = vmatpush1.msra.mxu0 0.0
        %644 = vmatprep.subr.mxu0 0.0
        %645 = vmatpush1.msra.mxu0 0.0
        %646 = vmatprep.mubr.f32.mxu0 0.0
        %647 = vmatmul.mubr.f32.gmra.mrb[0].mxu0 %v580
        %v648 = vpop.f32.mrb[0].mxu0
        %v649 = vadd.f32 %v551, %v648
        %v650 = vpop.f32.mrb[0].mxu0
        %v651 = vadd.f32 %v555, %v650
        %652 = vdwg.mxu0
        %653 = vmatprep.subr.mxu0 %v501
        %654 = vmatpush1.msra.mxu0 %v500
        %655 = vmatprep.subr.mxu0 %v507
        %656 = vmatpush1.msra.mxu0 %v506
        %657 = vmatprep.subr.mxu0 %v513
        %658 = vmatpush1.msra.mxu0 %v512
        %659 = vmatprep.subr.mxu0 %v519
        %660 = vmatpush1.msra.mxu0 %v518
        %661 = vmatprep.subr.mxu0 %v525
        %662 = vmatpush1.msra.mxu0 %v524
        %663 = vmatprep.subr.mxu0 %v531
        %664 = vmatpush1.msra.mxu0 %v530
        %665 = vmatprep.subr.mxu0 %v537
        %666 = vmatpush1.msra.mxu0 %v536
        %667 = vmatprep.subr.mxu0 %v543
        %668 = vmatpush1.msra.mxu0 %v542
        %669 = vmatprep.subr.mxu0 0.0
        %670 = vmatpush1.msra.mxu0 0.0
        %671 = vmatprep.subr.mxu0 0.0
        %672 = vmatpush1.msra.mxu0 0.0
        %673 = vmatprep.subr.mxu0 0.0
        %674 = vmatpush1.msra.mxu0 0.0
        %675 = vmatprep.subr.mxu0 0.0
        %676 = vmatpush1.msra.mxu0 0.0
        %677 = vmatprep.subr.mxu0 0.0
        %678 = vmatpush1.msra.mxu0 0.0
        %679 = vmatprep.subr.mxu0 0.0
        %680 = vmatpush1.msra.mxu0 0.0
        %681 = vmatprep.subr.mxu0 0.0
        %682 = vmatpush1.msra.mxu0 0.0
        %683 = vmatprep.subr.mxu0 0.0
        %684 = vmatpush1.msra.mxu0 0.0
        %685 = vmatprep.subr.mxu0 0.0
        %686 = vmatpush1.msra.mxu0 0.0
        %687 = vmatprep.subr.mxu0 0.0
        %688 = vmatpush1.msra.mxu0 0.0
        %689 = vmatprep.subr.mxu0 0.0
        %690 = vmatpush1.msra.mxu0 0.0
        %691 = vmatprep.subr.mxu0 0.0
        %692 = vmatpush1.msra.mxu0 0.0
        %693 = vmatprep.subr.mxu0 0.0
        %694 = vmatpush1.msra.mxu0 0.0
        %695 = vmatprep.subr.mxu0 0.0
        %696 = vmatpush1.msra.mxu0 0.0
        %697 = vmatprep.subr.mxu0 0.0
        %698 = vmatpush1.msra.mxu0 0.0
        %699 = vmatprep.subr.mxu0 0.0
        %700 = vmatpush1.msra.mxu0 0.0
        %701 = vmatprep.subr.mxu0 0.0
        %702 = vmatpush1.msra.mxu0 0.0
        %703 = vmatprep.subr.mxu0 0.0
        %704 = vmatpush1.msra.mxu0 0.0
        %705 = vmatprep.subr.mxu0 0.0
        %706 = vmatpush1.msra.mxu0 0.0
        %707 = vmatprep.subr.mxu0 0.0
        %708 = vmatpush1.msra.mxu0 0.0
        %709 = vmatprep.subr.mxu0 0.0
        %710 = vmatpush1.msra.mxu0 0.0
        %711 = vmatprep.subr.mxu0 0.0
        %712 = vmatpush1.msra.mxu0 0.0
        %713 = vmatprep.subr.mxu0 0.0
        %714 = vmatpush1.msra.mxu0 0.0
        %715 = vmatprep.subr.mxu0 0.0
        %716 = vmatpush1.msra.mxu0 0.0
        %717 = vmatprep.mubr.f32.mxu0 0.0
        %718 = vmatmul.mubr.f32.gmra.mrb[0].mxu0 %v580
        %v719 = vpop.f32.mrb[0].mxu0
        %v720 = vadd.f32 %v559, %v719
        %v721 = vpop.f32.mrb[0].mxu0
        %v722 = vadd.f32 %v563, %v721
        %723 = vdwg.mxu0
        %724 = vmatprep.subr.mxu0 %v503
        %725 = vmatpush1.msra.mxu0 %v502
        %726 = vmatprep.subr.mxu0 %v509
        %727 = vmatpush1.msra.mxu0 %v508
        %728 = vmatprep.subr.mxu0 %v515
        %729 = vmatpush1.msra.mxu0 %v514
        %730 = vmatprep.subr.mxu0 %v521
        %731 = vmatpush1.msra.mxu0 %v520
        %732 = vmatprep.subr.mxu0 %v527
        %733 = vmatpush1.msra.mxu0 %v526
        %734 = vmatprep.subr.mxu0 %v533
        %735 = vmatpush1.msra.mxu0 %v532
        %736 = vmatprep.subr.mxu0 %v539
        %737 = vmatpush1.msra.mxu0 %v538
        %738 = vmatprep.subr.mxu0 %v545
        %739 = vmatpush1.msra.mxu0 %v544
        %740 = vmatprep.subr.mxu0 0.0
        %741 = vmatpush1.msra.mxu0 0.0
        %742 = vmatprep.subr.mxu0 0.0
        %743 = vmatpush1.msra.mxu0 0.0
        %744 = vmatprep.subr.mxu0 0.0
        %745 = vmatpush1.msra.mxu0 0.0
        %746 = vmatprep.subr.mxu0 0.0
        %747 = vmatpush1.msra.mxu0 0.0
        %748 = vmatprep.subr.mxu0 0.0
        %749 = vmatpush1.msra.mxu0 0.0
        %750 = vmatprep.subr.mxu0 0.0
        %751 = vmatpush1.msra.mxu0 0.0
        %752 = vmatprep.subr.mxu0 0.0
        %753 = vmatpush1.msra.mxu0 0.0
        %754 = vmatprep.subr.mxu0 0.0
        %755 = vmatpush1.msra.mxu0 0.0
        %756 = vmatprep.subr.mxu0 0.0
        %757 = vmatpush1.msra.mxu0 0.0
        %758 = vmatprep.subr.mxu0 0.0
        %759 = vmatpush1.msra.mxu0 0.0
        %760 = vmatprep.subr.mxu0 0.0
        %761 = vmatpush1.msra.mxu0 0.0
        %762 = vmatprep.subr.mxu0 0.0
        %763 = vmatpush1.msra.mxu0 0.0
        %764 = vmatprep.subr.mxu0 0.0
        %765 = vmatpush1.msra.mxu0 0.0
        %766 = vmatprep.subr.mxu0 0.0
        %767 = vmatpush1.msra.mxu0 0.0
        %768 = vmatprep.subr.mxu0 0.0
        %769 = vmatpush1.msra.mxu0 0.0
        %770 = vmatprep.subr.mxu0 0.0
        %771 = vmatpush1.msra.mxu0 0.0
        %772 = vmatprep.subr.mxu0 0.0
        %773 = vmatpush1.msra.mxu0 0.0
        %774 = vmatprep.subr.mxu0 0.0
        %775 = vmatpush1.msra.mxu0 0.0
        %776 = vmatprep.subr.mxu0 0.0
        %777 = vmatpush1.msra.mxu0 0.0
        %778 = vmatprep.subr.mxu0 0.0
        %779 = vmatpush1.msra.mxu0 0.0
        %780 = vmatprep.subr.mxu0 0.0
        %781 = vmatpush1.msra.mxu0 0.0
        %782 = vmatprep.subr.mxu0 0.0
        %783 = vmatpush1.msra.mxu0 0.0
        %784 = vmatprep.subr.mxu0 0.0
        %785 = vmatpush1.msra.mxu0 0.0
        %786 = vmatprep.subr.mxu0 0.0
        %787 = vmatpush1.msra.mxu0 0.0
        %788 = vmatprep.mubr.f32.mxu0 0.0
        %789 = vmatmul.mubr.f32.gmra.mrb[0].mxu0 %v580
        %v790 = vpop.f32.mrb[0].mxu0
        %v791 = vadd.f32 %v567, %v790
        %v792 = vpop.f32.mrb[0].mxu0
        %v793 = vadd.f32 %v571, %v792
        %794 = vdwg.mxu0
        %v795 = vxor.u32 %v651, 2147483648
        %v796 = vmul.f32 %v795, 1.442695
        %v797 = vpow.pop %v796
        %v798 = vadd.f32 %v797, 1.0
        %v799 = vrcp.pop %v798
        %v800 = vmul.f32 1.0, %v799
        %v801 = vxor.u32 %v720, 2147483648
        %v802 = vmul.f32 %v801, 1.442695
        %v803 = vpow.pop %v802
        %v804 = vadd.f32 %v803, 1.0
        %v805 = vrcp.pop %v804
        %v806 = vmul.f32 1.0, %v805
        %v807 = vmin.f32 %v651, 0.0
        %v808 = vand.u32 2147483647, %v651
        %v809 = vsub.f32 0.0, %v808
        %v810 = vmul.f32 %v809, 1.442695
        %v811 = vpow.pop %v810
        %v812 = vadd.f32 %v811, 1.0
        %v813 = vlog2.pop %v812
        %v814 = vmul.f32 %v813, 0.6931472
        %v815 = vsub.f32 %v807, %v814
        %v816 = vld [vmem:[%s495] sm:$0xff]
        %v817 = vadd.f32 %v815, %v816
        %v818 = vmax.f32 %v817, %v649
        %v819 = vsub.f32 %v649, %v818
        %v820 = vmul.f32 %v819, 1.442695
        %v821 = vpow.pop %v820
        %v822 = vmul.f32 %v821, %v793
        %v823 = vld [vmem:[%s427] sm:$0xff]
        %v824 = vmul.f32 %v800, %v823
        %v825 = vmul.f32 %v821, %v791
        %v826 = vadd.f32 %v824, %v825
        %v827 = vmul.f32 %v826, %v722
        %828 = vadd.xlane.f32.xlu0 %v827
        %v829 = vpop.xlane.xlu0 %828
        %v830 = vand.u32 2147483647, %v829
        %v831 = vmax.f32 %v830, 1.0
        %v832 = vrcp.pop %v831
        %v833 = vmul.f32 %v831, %v832
        %v834 = vsub.f32 2.0, %v833
        %v835 = vmul.f32 %v832, %v834
        %v836 = vmul.f32 %v791, %v722
        %837 = vadd.xlane.f32.xlu0 %v836
        %v838 = vpop.xlane.xlu0 %837
        %v839 = vmul.f32 %v806, %v835
        %v840 = vmul.f32 %v839, %v800
        %v841 = vmul.f32 %v839, %v822
        %v842 = vmul.f32 %v841, %v838
        %843 = vst [vmem:[%s483] sm:$0xff] %v826
        %844 = vst [vmem:[%s490] sm:$0xff] %v818
        %845 = vst [vmem:[#allocation2] sm:$0xff] %v800
        %s846 = scalar_lea.vmem [#allocation2], 8
        %847 = vst [vmem:[%s846] sm:$0xff] %v822
        %s848 = scalar_lea.vmem [#allocation2], 16
        %849 = vst [vmem:[%s848] sm:$0xff] %v791
        %s850 = scalar_lea.vmem [#allocation2], 24
        %851 = vst [vmem:[%s850] sm:$0xff] %v722
        %s852 = scalar_lea.vmem [#allocation2], 32
        %853 = vst [vmem:[%s852] sm:$0xff] %v840
        %s854 = scalar_lea.vmem [#allocation2], 40
        %855 = vst [vmem:[%s854] sm:$0xff] %v842
        %v856 = vld [vmem:[#allocation2] sm:$0xff]
        %s857 = sadd.s32 0, 8
        %s858 = scalar_lea.vmem [#allocation2], %s857
        %v859 = vld [vmem:[%s858] sm:$0xff]
        %s860 = sadd.s32 0, 16
        %s861 = scalar_lea.vmem [#allocation2], %s860
        %v862 = vld [vmem:[%s861] sm:$0xff]
        %s863 = sadd.s32 0, 24
        %s864 = scalar_lea.vmem [#allocation2], %s863
        %v865 = vld [vmem:[%s864] sm:$0xff]
        %s866 = sadd.s32 0, 32
        %s867 = scalar_lea.vmem [#allocation2], %s866
        %v868 = vld [vmem:[%s867] sm:$0xff]
        %s869 = sadd.s32 0, 40
        %s870 = scalar_lea.vmem [#allocation2], %s869
        %v871 = vld [vmem:[%s870] sm:$0xff]
        %s872 = smul.u32 0, 128
        %s873 = scalar_lea.vmem %s418, %s872 [#allocation9]
        %v874 = vld [vmem:[%s873] sm:$0xff]
        %v875 = vld [vmem:[%s873 + $0x8] sm:$0xff]
        %v876 = vld [vmem:[%s873 + $0x10] sm:$0xff]
        %v877 = vld [vmem:[%s873 + $0x18] sm:$0xff]
        %v878 = vld [vmem:[%s873 + $0x20] sm:$0xff]
        %v879 = vld [vmem:[%s873 + $0x28] sm:$0xff]
        %v880 = vld [vmem:[%s873 + $0x30] sm:$0xff]
        %v881 = vld [vmem:[%s873 + $0x38] sm:$0xff]
        %v882 = vld [vmem:[%s873 + $0x40] sm:$0xff]
        %v883 = vld [vmem:[%s873 + $0x48] sm:$0xff]
        %v884 = vld [vmem:[%s873 + $0x50] sm:$0xff]
        %v885 = vld [vmem:[%s873 + $0x58] sm:$0xff]
        %v886 = vld [vmem:[%s873 + $0x60] sm:$0xff]
        %v887 = vld [vmem:[%s873 + $0x68] sm:$0xff]
        %v888 = vld [vmem:[%s873 + $0x70] sm:$0xff]
        %v889 = vld [vmem:[%s873 + $0x78] sm:$0xff]
        %v890 = vld [vmem:[%s873 + $0x80] sm:$0xff]
        %v891 = vld [vmem:[%s873 + $0x88] sm:$0xff]
        %v892 = vld [vmem:[%s873 + $0x90] sm:$0xff]
        %v893 = vld [vmem:[%s873 + $0x98] sm:$0xff]
        %v894 = vld [vmem:[%s873 + $0xa0] sm:$0xff]
        %v895 = vld [vmem:[%s873 + $0xa8] sm:$0xff]
        %v896 = vld [vmem:[%s873 + $0xb0] sm:$0xff]
        %v897 = vld [vmem:[%s873 + $0xb8] sm:$0xff]
        %v898 = vld [vmem:[%s873 + $0xc0] sm:$0xff]
        %v899 = vld [vmem:[%s873 + $0xc8] sm:$0xff]
        %v900 = vld [vmem:[%s873 + $0xd0] sm:$0xff]
        %v901 = vld [vmem:[%s873 + $0xd8] sm:$0xff]
        %v902 = vld [vmem:[%s873 + $0xe0] sm:$0xff]
        %v903 = vld [vmem:[%s873 + $0xe8] sm:$0xff]
        %v904 = vld [vmem:[%s873 + $0xf0] sm:$0xff]
        %v905 = vld [vmem:[%s873 + $0xf8] sm:$0xff]
        %v906 = vld [vmem:[%s873 + $0x100] sm:$0xff]
        %v907 = vld [vmem:[%s873 + $0x108] sm:$0xff]
        %v908 = vld [vmem:[%s873 + $0x110] sm:$0xff]
        %v909 = vld [vmem:[%s873 + $0x118] sm:$0xff]
        %v910 = vld [vmem:[%s873 + $0x120] sm:$0xff]
        %v911 = vld [vmem:[%s873 + $0x128] sm:$0xff]
        %v912 = vld [vmem:[%s873 + $0x130] sm:$0xff]
        %v913 = vld [vmem:[%s873 + $0x138] sm:$0xff]
        %v914 = vld [vmem:[%s873 + $0x140] sm:$0xff]
        %v915 = vld [vmem:[%s873 + $0x148] sm:$0xff]
        %v916 = vld [vmem:[%s873 + $0x150] sm:$0xff]
        %v917 = vld [vmem:[%s873 + $0x158] sm:$0xff]
        %v918 = vld [vmem:[%s873 + $0x160] sm:$0xff]
        %v919 = vld [vmem:[%s873 + $0x168] sm:$0xff]
        %v920 = vld [vmem:[%s873 + $0x170] sm:$0xff]
        %v921 = vld [vmem:[%s873 + $0x178] sm:$0xff]
        %v922 = vld [vmem:[%s873 + $0x180] sm:$0xff]
        %v923 = vld [vmem:[%s873 + $0x188] sm:$0xff]
        %v924 = vld [vmem:[%s873 + $0x190] sm:$0xff]
        %v925 = vld [vmem:[%s873 + $0x198] sm:$0xff]
        %v926 = vld [vmem:[%s873 + $0x1a0] sm:$0xff]
        %v927 = vld [vmem:[%s873 + $0x1a8] sm:$0xff]
        %v928 = vld [vmem:[%s873 + $0x1b0] sm:$0xff]
        %v929 = vld [vmem:[%s873 + $0x1b8] sm:$0xff]
        %v930 = vld [vmem:[%s873 + $0x1c0] sm:$0xff]
        %v931 = vld [vmem:[%s873 + $0x1c8] sm:$0xff]
        %v932 = vld [vmem:[%s873 + $0x1d0] sm:$0xff]
        %v933 = vld [vmem:[%s873 + $0x1d8] sm:$0xff]
        %v934 = vld [vmem:[%s873 + $0x1e0] sm:$0xff]
        %v935 = vld [vmem:[%s873 + $0x1e8] sm:$0xff]
        %v936 = vld [vmem:[%s873 + $0x1f0] sm:$0xff]
        %v937 = vld [vmem:[%s873 + $0x1f8] sm:$0xff]
        %v938 = vld [vmem:[%s873 + $0x200] sm:$0xff]
        %v939 = vld [vmem:[%s873 + $0x208] sm:$0xff]
        %v940 = vld [vmem:[%s873 + $0x210] sm:$0xff]
        %v941 = vld [vmem:[%s873 + $0x218] sm:$0xff]
        %v942 = vld [vmem:[%s873 + $0x220] sm:$0xff]
        %v943 = vld [vmem:[%s873 + $0x228] sm:$0xff]
        %v944 = vld [vmem:[%s873 + $0x230] sm:$0xff]
        %v945 = vld [vmem:[%s873 + $0x238] sm:$0xff]
        %v946 = vld [vmem:[%s873 + $0x240] sm:$0xff]
        %v947 = vld [vmem:[%s873 + $0x248] sm:$0xff]
        %v948 = vld [vmem:[%s873 + $0x250] sm:$0xff]
        %v949 = vld [vmem:[%s873 + $0x258] sm:$0xff]
        %v950 = vld [vmem:[%s873 + $0x260] sm:$0xff]
        %v951 = vld [vmem:[%s873 + $0x268] sm:$0xff]
        %v952 = vld [vmem:[%s873 + $0x270] sm:$0xff]
        %v953 = vld [vmem:[%s873 + $0x278] sm:$0xff]
        %v954 = vld [vmem:[%s873 + $0x280] sm:$0xff]
        %v955 = vld [vmem:[%s873 + $0x288] sm:$0xff]
        %v956 = vld [vmem:[%s873 + $0x290] sm:$0xff]
        %v957 = vld [vmem:[%s873 + $0x298] sm:$0xff]
        %v958 = vld [vmem:[%s873 + $0x2a0] sm:$0xff]
        %v959 = vld [vmem:[%s873 + $0x2a8] sm:$0xff]
        %v960 = vld [vmem:[%s873 + $0x2b0] sm:$0xff]
        %v961 = vld [vmem:[%s873 + $0x2b8] sm:$0xff]
        %v962 = vld [vmem:[%s873 + $0x2c0] sm:$0xff]
        %v963 = vld [vmem:[%s873 + $0x2c8] sm:$0xff]
        %v964 = vld [vmem:[%s873 + $0x2d0] sm:$0xff]
        %v965 = vld [vmem:[%s873 + $0x2d8] sm:$0xff]
        %v966 = vld [vmem:[%s873 + $0x2e0] sm:$0xff]
        %v967 = vld [vmem:[%s873 + $0x2e8] sm:$0xff]
        %v968 = vld [vmem:[%s873 + $0x2f0] sm:$0xff]
        %v969 = vld [vmem:[%s873 + $0x2f8] sm:$0xff]
        %v970 = vld [vmem:[%s873 + $0x300] sm:$0xff]
        %v971 = vld [vmem:[%s873 + $0x308] sm:$0xff]
        %v972 = vld [vmem:[%s873 + $0x310] sm:$0xff]
        %v973 = vld [vmem:[%s873 + $0x318] sm:$0xff]
        %v974 = vld [vmem:[%s873 + $0x320] sm:$0xff]
        %v975 = vld [vmem:[%s873 + $0x328] sm:$0xff]
        %v976 = vld [vmem:[%s873 + $0x330] sm:$0xff]
        %v977 = vld [vmem:[%s873 + $0x338] sm:$0xff]
        %v978 = vld [vmem:[%s873 + $0x340] sm:$0xff]
        %v979 = vld [vmem:[%s873 + $0x348] sm:$0xff]
        %v980 = vld [vmem:[%s873 + $0x350] sm:$0xff]
        %v981 = vld [vmem:[%s873 + $0x358] sm:$0xff]
        %v982 = vld [vmem:[%s873 + $0x360] sm:$0xff]
        %v983 = vld [vmem:[%s873 + $0x368] sm:$0xff]
        %v984 = vld [vmem:[%s873 + $0x370] sm:$0xff]
        %v985 = vld [vmem:[%s873 + $0x378] sm:$0xff]
        %v986 = vld [vmem:[%s873 + $0x380] sm:$0xff]
        %v987 = vld [vmem:[%s873 + $0x388] sm:$0xff]
        %v988 = vld [vmem:[%s873 + $0x390] sm:$0xff]
        %v989 = vld [vmem:[%s873 + $0x398] sm:$0xff]
        %v990 = vld [vmem:[%s873 + $0x3a0] sm:$0xff]
        %v991 = vld [vmem:[%s873 + $0x3a8] sm:$0xff]
        %v992 = vld [vmem:[%s873 + $0x3b0] sm:$0xff]
        %v993 = vld [vmem:[%s873 + $0x3b8] sm:$0xff]
        %v994 = vld [vmem:[%s873 + $0x3c0] sm:$0xff]
        %v995 = vld [vmem:[%s873 + $0x3c8] sm:$0xff]
        %v996 = vld [vmem:[%s873 + $0x3d0] sm:$0xff]
        %v997 = vld [vmem:[%s873 + $0x3d8] sm:$0xff]
        %v998 = vld [vmem:[%s873 + $0x3e0] sm:$0xff]
        %v999 = vld [vmem:[%s873 + $0x3e8] sm:$0xff]
        %v1000 = vld [vmem:[%s873 + $0x3f0] sm:$0xff]
        %v1001 = vld [vmem:[%s873 + $0x3f8] sm:$0xff]
        %v1003 = vcombine.high %v865, %v865
        %v1005 = vunpack.c.l.s4 1966171168
        %v1006 = vunpack.c.0.s8 %v1005
        %v1007 = vlaneseq
        %v1008 = vshrl.u32 %v1007, 7
        %v1009 = vsub.s32 %v1006, %v1008
        %v1010 = vrot.slane %v865, %v1009
        %v1012 = vunpack.c.l.s4 1966171168
        %v1013 = vunpack.c.0.s8 %v1012
        %v1014 = vlaneseq
        %v1015 = vshrl.u32 %v1014, 7
        %v1016 = vsub.s32 %v1013, %v1015
        %v1017 = vrot.slane %v1003, %v1016
        %v1018 = vcombine.high %v1010, %v1010
        %v1019 = vcombine.high %v1017, %v1017
        %v1021 = vunpack.c.l.s4 1966171168
        %v1022 = vunpack.c.0.s8 %v1021
        %v1023 = vlaneseq
        %v1024 = vshrl.u32 %v1023, 7
        %v1025 = vsub.s32 %v1022, %v1024
        %v1026 = vrot.slane %v1010, %v1025
        %v1028 = vunpack.c.l.s4 1966171168
        %v1029 = vunpack.c.0.s8 %v1028
        %v1030 = vlaneseq
        %v1031 = vshrl.u32 %v1030, 7
        %v1032 = vsub.s32 %v1029, %v1031
        %v1033 = vrot.slane %v1017, %v1032
        %v1035 = vunpack.c.l.s4 1966171168
        %v1036 = vunpack.c.0.s8 %v1035
        %v1037 = vlaneseq
        %v1038 = vshrl.u32 %v1037, 7
        %v1039 = vsub.s32 %v1036, %v1038
        %v1040 = vrot.slane %v1018, %v1039
        %v1042 = vunpack.c.l.s4 1966171168
        %v1043 = vunpack.c.0.s8 %v1042
        %v1044 = vlaneseq
        %v1045 = vshrl.u32 %v1044, 7
        %v1046 = vsub.s32 %v1043, %v1045
        %v1047 = vrot.slane %v1019, %v1046
        %v1048 = vcombine.high %v1026, %v1026
        %v1049 = vcombine.high %v1033, %v1033
        %v1050 = vcombine.high %v1040, %v1040
        %v1051 = vcombine.high %v1047, %v1047
        %v1052 = vlaneseq
        %v1053 = vshrl.u32 %v1052, 7
        %v1054 = vsub.s32 0, %v1053
        %v1055 = vrot.slane %v1026, %v1054
        %v1056 = vlaneseq
        %v1057 = vshrl.u32 %v1056, 7
        %v1058 = vsub.s32 0, %v1057
        %v1059 = vrot.slane %v1040, %v1058
        %v1060 = vlaneseq
        %v1061 = vshrl.u32 %v1060, 7
        %v1062 = vsub.s32 0, %v1061
        %v1063 = vrot.slane %v1048, %v1062
        %v1064 = vlaneseq
        %v1065 = vshrl.u32 %v1064, 7
        %v1066 = vsub.s32 0, %v1065
        %v1067 = vrot.slane %v1050, %v1066
        %v1068 = vlaneseq
        %v1069 = vshrl.u32 %v1068, 7
        %v1070 = vsub.s32 0, %v1069
        %v1071 = vrot.slane %v1033, %v1070
        %v1072 = vlaneseq
        %v1073 = vshrl.u32 %v1072, 7
        %v1074 = vsub.s32 0, %v1073
        %v1075 = vrot.slane %v1047, %v1074
        %v1076 = vlaneseq
        %v1077 = vshrl.u32 %v1076, 7
        %v1078 = vsub.s32 0, %v1077
        %v1079 = vrot.slane %v1049, %v1078
        %v1080 = vlaneseq
        %v1081 = vshrl.u32 %v1080, 7
        %v1082 = vsub.s32 0, %v1081
        %v1083 = vrot.slane %v1051, %v1082
        %v1092 = vmul.f32 %v874, %v1055
        %v1093 = vmul.f32 %v875, %v1055
        %v1094 = vmul.f32 %v876, %v1055
        %v1095 = vmul.f32 %v877, %v1055
        %v1096 = vmul.f32 %v878, %v1055
        %v1097 = vmul.f32 %v879, %v1055
        %v1098 = vmul.f32 %v880, %v1055
        %v1099 = vmul.f32 %v881, %v1055
        %v1100 = vmul.f32 %v882, %v1055
        %v1101 = vmul.f32 %v883, %v1055
        %v1102 = vmul.f32 %v884, %v1055
        %v1103 = vmul.f32 %v885, %v1055
        %v1104 = vmul.f32 %v886, %v1055
        %v1105 = vmul.f32 %v887, %v1055
        %v1106 = vmul.f32 %v888, %v1055
        %v1107 = vmul.f32 %v889, %v1055
        %v1108 = vmul.f32 %v890, %v1059
        %v1109 = vmul.f32 %v891, %v1059
        %v1110 = vmul.f32 %v892, %v1059
        %v1111 = vmul.f32 %v893, %v1059
        %v1112 = vmul.f32 %v894, %v1059
        %v1113 = vmul.f32 %v895, %v1059
        %v1114 = vmul.f32 %v896, %v1059
        %v1115 = vmul.f32 %v897, %v1059
        %v1116 = vmul.f32 %v898, %v1059
        %v1117 = vmul.f32 %v899, %v1059
        %v1118 = vmul.f32 %v900, %v1059
        %v1119 = vmul.f32 %v901, %v1059
        %v1120 = vmul.f32 %v902, %v1059
        %v1121 = vmul.f32 %v903, %v1059
        %v1122 = vmul.f32 %v904, %v1059
        %v1123 = vmul.f32 %v905, %v1059
        %v1124 = vmul.f32 %v906, %v1063
        %v1125 = vmul.f32 %v907, %v1063
        %v1126 = vmul.f32 %v908, %v1063
        %v1127 = vmul.f32 %v909, %v1063
        %v1128 = vmul.f32 %v910, %v1063
        %v1129 = vmul.f32 %v911, %v1063
        %v1130 = vmul.f32 %v912, %v1063
        %v1131 = vmul.f32 %v913, %v1063
        %v1132 = vmul.f32 %v914, %v1063
        %v1133 = vmul.f32 %v915, %v1063
        %v1134 = vmul.f32 %v916, %v1063
        %v1135 = vmul.f32 %v917, %v1063
        %v1136 = vmul.f32 %v918, %v1063
        %v1137 = vmul.f32 %v919, %v1063
        %v1138 = vmul.f32 %v920, %v1063
        %v1139 = vmul.f32 %v921, %v1063
        %v1140 = vmul.f32 %v922, %v1067
        %v1141 = vmul.f32 %v923, %v1067
        %v1142 = vmul.f32 %v924, %v1067
        %v1143 = vmul.f32 %v925, %v1067
        %v1144 = vmul.f32 %v926, %v1067
        %v1145 = vmul.f32 %v927, %v1067
        %v1146 = vmul.f32 %v928, %v1067
        %v1147 = vmul.f32 %v929, %v1067
        %v1148 = vmul.f32 %v930, %v1067
        %v1149 = vmul.f32 %v931, %v1067
        %v1150 = vmul.f32 %v932, %v1067
        %v1151 = vmul.f32 %v933, %v1067
        %v1152 = vmul.f32 %v934, %v1067
        %v1153 = vmul.f32 %v935, %v1067
        %v1154 = vmul.f32 %v936, %v1067
        %v1155 = vmul.f32 %v937, %v1067
        %v1156 = vmul.f32 %v938, %v1071
        %v1157 = vmul.f32 %v939, %v1071
        %v1158 = vmul.f32 %v940, %v1071
        %v1159 = vmul.f32 %v941, %v1071
        %v1160 = vmul.f32 %v942, %v1071
        %v1161 = vmul.f32 %v943, %v1071
        %v1162 = vmul.f32 %v944, %v1071
        %v1163 = vmul.f32 %v945, %v1071
        %v1164 = vmul.f32 %v946, %v1071
        %v1165 = vmul.f32 %v947, %v1071
        %v1166 = vmul.f32 %v948, %v1071
        %v1167 = vmul.f32 %v949, %v1071
        %v1168 = vmul.f32 %v950, %v1071
        %v1169 = vmul.f32 %v951, %v1071
        %v1170 = vmul.f32 %v952, %v1071
        %v1171 = vmul.f32 %v953, %v1071
        %v1172 = vmul.f32 %v954, %v1075
        %v1173 = vmul.f32 %v955, %v1075
        %v1174 = vmul.f32 %v956, %v1075
        %v1175 = vmul.f32 %v957, %v1075
        %v1176 = vmul.f32 %v958, %v1075
        %v1177 = vmul.f32 %v959, %v1075
        %v1178 = vmul.f32 %v960, %v1075
        %v1179 = vmul.f32 %v961, %v1075
        %v1180 = vmul.f32 %v962, %v1075
        %v1181 = vmul.f32 %v963, %v1075
        %v1182 = vmul.f32 %v964, %v1075
        %v1183 = vmul.f32 %v965, %v1075
        %v1184 = vmul.f32 %v966, %v1075
        %v1185 = vmul.f32 %v967, %v1075
        %v1186 = vmul.f32 %v968, %v1075
        %v1187 = vmul.f32 %v969, %v1075
        %v1188 = vmul.f32 %v970, %v1079
        %v1189 = vmul.f32 %v971, %v1079
        %v1190 = vmul.f32 %v972, %v1079
        %v1191 = vmul.f32 %v973, %v1079
        %v1192 = vmul.f32 %v974, %v1079
        %v1193 = vmul.f32 %v975, %v1079
        %v1194 = vmul.f32 %v976, %v1079
        %v1195 = vmul.f32 %v977, %v1079
        %v1196 = vmul.f32 %v978, %v1079
        %v1197 = vmul.f32 %v979, %v1079
        %v1198 = vmul.f32 %v980, %v1079
        %v1199 = vmul.f32 %v981, %v1079
        %v1200 = vmul.f32 %v982, %v1079
        %v1201 = vmul.f32 %v983, %v1079
        %v1202 = vmul.f32 %v984, %v1079
        %v1203 = vmul.f32 %v985, %v1079
        %v1204 = vmul.f32 %v986, %v1083
        %v1205 = vmul.f32 %v987, %v1083
        %v1206 = vmul.f32 %v988, %v1083
        %v1207 = vmul.f32 %v989, %v1083
        %v1208 = vmul.f32 %v990, %v1083
        %v1209 = vmul.f32 %v991, %v1083
        %v1210 = vmul.f32 %v992, %v1083
        %v1211 = vmul.f32 %v993, %v1083
        %v1212 = vmul.f32 %v994, %v1083
        %v1213 = vmul.f32 %v995, %v1083
        %v1214 = vmul.f32 %v996, %v1083
        %v1215 = vmul.f32 %v997, %v1083
        %v1216 = vmul.f32 %v998, %v1083
        %v1217 = vmul.f32 %v999, %v1083
        %v1218 = vmul.f32 %v1000, %v1083
        %v1219 = vmul.f32 %v1001, %v1083
        %1220 = vadd.xlane.f32.xlu0 %v1092
        %v1221 = vpop.xlane.xlu0 %1220
        %1222 = vadd.xlane.f32.xlu0 %v1093
        %v1223 = vpop.xlane.xlu0 %1222
        %1224 = vadd.xlane.f32.xlu0 %v1094
        %v1225 = vpop.xlane.xlu0 %1224
        %1226 = vadd.xlane.f32.xlu0 %v1095
        %v1227 = vpop.xlane.xlu0 %1226
        %1228 = vadd.xlane.f32.xlu0 %v1096
        %v1229 = vpop.xlane.xlu0 %1228
        %1230 = vadd.xlane.f32.xlu0 %v1097
        %v1231 = vpop.xlane.xlu0 %1230
        %1232 = vadd.xlane.f32.xlu0 %v1098
        %v1233 = vpop.xlane.xlu0 %1232
        %1234 = vadd.xlane.f32.xlu0 %v1099
        %v1235 = vpop.xlane.xlu0 %1234
        %1236 = vadd.xlane.f32.xlu0 %v1100
        %v1237 = vpop.xlane.xlu0 %1236
        %1238 = vadd.xlane.f32.xlu0 %v1101
        %v1239 = vpop.xlane.xlu0 %1238
        %1240 = vadd.xlane.f32.xlu0 %v1102
        %v1241 = vpop.xlane.xlu0 %1240
        %1242 = vadd.xlane.f32.xlu0 %v1103
        %v1243 = vpop.xlane.xlu0 %1242
        %1244 = vadd.xlane.f32.xlu0 %v1104
        %v1245 = vpop.xlane.xlu0 %1244
        %1246 = vadd.xlane.f32.xlu0 %v1105
        %v1247 = vpop.xlane.xlu0 %1246
        %1248 = vadd.xlane.f32.xlu0 %v1106
        %v1249 = vpop.xlane.xlu0 %1248
        %1250 = vadd.xlane.f32.xlu0 %v1107
        %v1251 = vpop.xlane.xlu0 %1250
        %1252 = vadd.xlane.f32.xlu0 %v1108
        %v1253 = vpop.xlane.xlu0 %1252
        %1254 = vadd.xlane.f32.xlu0 %v1109
        %v1255 = vpop.xlane.xlu0 %1254
        %1256 = vadd.xlane.f32.xlu0 %v1110
        %v1257 = vpop.xlane.xlu0 %1256
        %1258 = vadd.xlane.f32.xlu0 %v1111
        %v1259 = vpop.xlane.xlu0 %1258
        %1260 = vadd.xlane.f32.xlu0 %v1112
        %v1261 = vpop.xlane.xlu0 %1260
        %1262 = vadd.xlane.f32.xlu0 %v1113
        %v1263 = vpop.xlane.xlu0 %1262
        %1264 = vadd.xlane.f32.xlu0 %v1114
        %v1265 = vpop.xlane.xlu0 %1264
        %1266 = vadd.xlane.f32.xlu0 %v1115
        %v1267 = vpop.xlane.xlu0 %1266
        %1268 = vadd.xlane.f32.xlu0 %v1116
        %v1269 = vpop.xlane.xlu0 %1268
        %1270 = vadd.xlane.f32.xlu0 %v1117
        %v1271 = vpop.xlane.xlu0 %1270
        %1272 = vadd.xlane.f32.xlu0 %v1118
        %v1273 = vpop.xlane.xlu0 %1272
        %1274 = vadd.xlane.f32.xlu0 %v1119
        %v1275 = vpop.xlane.xlu0 %1274
        %1276 = vadd.xlane.f32.xlu0 %v1120
        %v1277 = vpop.xlane.xlu0 %1276
        %1278 = vadd.xlane.f32.xlu0 %v1121
        %v1279 = vpop.xlane.xlu0 %1278
        %1280 = vadd.xlane.f32.xlu0 %v1122
        %v1281 = vpop.xlane.xlu0 %1280
        %1282 = vadd.xlane.f32.xlu0 %v1123
        %v1283 = vpop.xlane.xlu0 %1282
        %1284 = vadd.xlane.f32.xlu0 %v1124
        %v1285 = vpop.xlane.xlu0 %1284
        %1286 = vadd.xlane.f32.xlu0 %v1125
        %v1287 = vpop.xlane.xlu0 %1286
        %1288 = vadd.xlane.f32.xlu0 %v1126
        %v1289 = vpop.xlane.xlu0 %1288
        %1290 = vadd.xlane.f32.xlu0 %v1127
        %v1291 = vpop.xlane.xlu0 %1290
        %1292 = vadd.xlane.f32.xlu0 %v1128
        %v1293 = vpop.xlane.xlu0 %1292
        %1294 = vadd.xlane.f32.xlu0 %v1129
        %v1295 = vpop.xlane.xlu0 %1294
        %1296 = vadd.xlane.f32.xlu0 %v1130
        %v1297 = vpop.xlane.xlu0 %1296
        %1298 = vadd.xlane.f32.xlu0 %v1131
        %v1299 = vpop.xlane.xlu0 %1298
        %1300 = vadd.xlane.f32.xlu0 %v1132
        %v1301 = vpop.xlane.xlu0 %1300
        %1302 = vadd.xlane.f32.xlu0 %v1133
        %v1303 = vpop.xlane.xlu0 %1302
        %1304 = vadd.xlane.f32.xlu0 %v1134
        %v1305 = vpop.xlane.xlu0 %1304
        %1306 = vadd.xlane.f32.xlu0 %v1135
        %v1307 = vpop.xlane.xlu0 %1306
        %1308 = vadd.xlane.f32.xlu0 %v1136
        %v1309 = vpop.xlane.xlu0 %1308
        %1310 = vadd.xlane.f32.xlu0 %v1137
        %v1311 = vpop.xlane.xlu0 %1310
        %1312 = vadd.xlane.f32.xlu0 %v1138
        %v1313 = vpop.xlane.xlu0 %1312
        %1314 = vadd.xlane.f32.xlu0 %v1139
        %v1315 = vpop.xlane.xlu0 %1314
        %1316 = vadd.xlane.f32.xlu0 %v1140
        %v1317 = vpop.xlane.xlu0 %1316
        %1318 = vadd.xlane.f32.xlu0 %v1141
        %v1319 = vpop.xlane.xlu0 %1318
        %1320 = vadd.xlane.f32.xlu0 %v1142
        %v1321 = vpop.xlane.xlu0 %1320
        %1322 = vadd.xlane.f32.xlu0 %v1143
        %v1323 = vpop.xlane.xlu0 %1322
        %1324 = vadd.xlane.f32.xlu0 %v1144
        %v1325 = vpop.xlane.xlu0 %1324
        %1326 = vadd.xlane.f32.xlu0 %v1145
        %v1327 = vpop.xlane.xlu0 %1326
        %1328 = vadd.xlane.f32.xlu0 %v1146
        %v1329 = vpop.xlane.xlu0 %1328
        %1330 = vadd.xlane.f32.xlu0 %v1147
        %v1331 = vpop.xlane.xlu0 %1330
        %1332 = vadd.xlane.f32.xlu0 %v1148
        %v1333 = vpop.xlane.xlu0 %1332
        %1334 = vadd.xlane.f32.xlu0 %v1149
        %v1335 = vpop.xlane.xlu0 %1334
        %1336 = vadd.xlane.f32.xlu0 %v1150
        %v1337 = vpop.xlane.xlu0 %1336
        %1338 = vadd.xlane.f32.xlu0 %v1151
        %v1339 = vpop.xlane.xlu0 %1338
        %1340 = vadd.xlane.f32.xlu0 %v1152
        %v1341 = vpop.xlane.xlu0 %1340
        %1342 = vadd.xlane.f32.xlu0 %v1153
        %v1343 = vpop.xlane.xlu0 %1342
        %1344 = vadd.xlane.f32.xlu0 %v1154
        %v1345 = vpop.xlane.xlu0 %1344
        %1346 = vadd.xlane.f32.xlu0 %v1155
        %v1347 = vpop.xlane.xlu0 %1346
        %1348 = vadd.xlane.f32.xlu0 %v1156
        %v1349 = vpop.xlane.xlu0 %1348
        %1350 = vadd.xlane.f32.xlu0 %v1157
        %v1351 = vpop.xlane.xlu0 %1350
        %1352 = vadd.xlane.f32.xlu0 %v1158
        %v1353 = vpop.xlane.xlu0 %1352
        %1354 = vadd.xlane.f32.xlu0 %v1159
        %v1355 = vpop.xlane.xlu0 %1354
        %1356 = vadd.xlane.f32.xlu0 %v1160
        %v1357 = vpop.xlane.xlu0 %1356
        %1358 = vadd.xlane.f32.xlu0 %v1161
        %v1359 = vpop.xlane.xlu0 %1358
        %1360 = vadd.xlane.f32.xlu0 %v1162
        %v1361 = vpop.xlane.xlu0 %1360
        %1362 = vadd.xlane.f32.xlu0 %v1163
        %v1363 = vpop.xlane.xlu0 %1362
        %1364 = vadd.xlane.f32.xlu0 %v1164
        %v1365 = vpop.xlane.xlu0 %1364
        %1366 = vadd.xlane.f32.xlu0 %v1165
        %v1367 = vpop.xlane.xlu0 %1366
        %1368 = vadd.xlane.f32.xlu0 %v1166
        %v1369 = vpop.xlane.xlu0 %1368
        %1370 = vadd.xlane.f32.xlu0 %v1167
        %v1371 = vpop.xlane.xlu0 %1370
        %1372 = vadd.xlane.f32.xlu0 %v1168
        %v1373 = vpop.xlane.xlu0 %1372
        %1374 = vadd.xlane.f32.xlu0 %v1169
        %v1375 = vpop.xlane.xlu0 %1374
        %1376 = vadd.xlane.f32.xlu0 %v1170
        %v1377 = vpop.xlane.xlu0 %1376
        %1378 = vadd.xlane.f32.xlu0 %v1171
        %v1379 = vpop.xlane.xlu0 %1378
        %1380 = vadd.xlane.f32.xlu0 %v1172
        %v1381 = vpop.xlane.xlu0 %1380
        %1382 = vadd.xlane.f32.xlu0 %v1173
        %v1383 = vpop.xlane.xlu0 %1382
        %1384 = vadd.xlane.f32.xlu0 %v1174
        %v1385 = vpop.xlane.xlu0 %1384
        %1386 = vadd.xlane.f32.xlu0 %v1175
        %v1387 = vpop.xlane.xlu0 %1386
        %1388 = vadd.xlane.f32.xlu0 %v1176
        %v1389 = vpop.xlane.xlu0 %1388
        %1390 = vadd.xlane.f32.xlu0 %v1177
        %v1391 = vpop.xlane.xlu0 %1390
        %1392 = vadd.xlane.f32.xlu0 %v1178
        %v1393 = vpop.xlane.xlu0 %1392
        %1394 = vadd.xlane.f32.xlu0 %v1179
        %v1395 = vpop.xlane.xlu0 %1394
        %1396 = vadd.xlane.f32.xlu0 %v1180
        %v1397 = vpop.xlane.xlu0 %1396
        %1398 = vadd.xlane.f32.xlu0 %v1181
        %v1399 = vpop.xlane.xlu0 %1398
        %1400 = vadd.xlane.f32.xlu0 %v1182
        %v1401 = vpop.xlane.xlu0 %1400
        %1402 = vadd.xlane.f32.xlu0 %v1183
        %v1403 = vpop.xlane.xlu0 %1402
        %1404 = vadd.xlane.f32.xlu0 %v1184
        %v1405 = vpop.xlane.xlu0 %1404
        %1406 = vadd.xlane.f32.xlu0 %v1185
        %v1407 = vpop.xlane.xlu0 %1406
        %1408 = vadd.xlane.f32.xlu0 %v1186
        %v1409 = vpop.xlane.xlu0 %1408
        %1410 = vadd.xlane.f32.xlu0 %v1187
        %v1411 = vpop.xlane.xlu0 %1410
        %1412 = vadd.xlane.f32.xlu0 %v1188
        %v1413 = vpop.xlane.xlu0 %1412
        %1414 = vadd.xlane.f32.xlu0 %v1189
        %v1415 = vpop.xlane.xlu0 %1414
        %1416 = vadd.xlane.f32.xlu0 %v1190
        %v1417 = vpop.xlane.xlu0 %1416
        %1418 = vadd.xlane.f32.xlu0 %v1191
        %v1419 = vpop.xlane.xlu0 %1418
        %1420 = vadd.xlane.f32.xlu0 %v1192
        %v1421 = vpop.xlane.xlu0 %1420
        %1422 = vadd.xlane.f32.xlu0 %v1193
        %v1423 = vpop.xlane.xlu0 %1422
        %1424 = vadd.xlane.f32.xlu0 %v1194
        %v1425 = vpop.xlane.xlu0 %1424
        %1426 = vadd.xlane.f32.xlu0 %v1195
        %v1427 = vpop.xlane.xlu0 %1426
        %1428 = vadd.xlane.f32.xlu0 %v1196
        %v1429 = vpop.xlane.xlu0 %1428
        %1430 = vadd.xlane.f32.xlu0 %v1197
        %v1431 = vpop.xlane.xlu0 %1430
        %1432 = vadd.xlane.f32.xlu0 %v1198
        %v1433 = vpop.xlane.xlu0 %1432
        %1434 = vadd.xlane.f32.xlu0 %v1199
        %v1435 = vpop.xlane.xlu0 %1434
        %1436 = vadd.xlane.f32.xlu0 %v1200
        %v1437 = vpop.xlane.xlu0 %1436
        %1438 = vadd.xlane.f32.xlu0 %v1201
        %v1439 = vpop.xlane.xlu0 %1438
        %1440 = vadd.xlane.f32.xlu0 %v1202
        %v1441 = vpop.xlane.xlu0 %1440
        %1442 = vadd.xlane.f32.xlu0 %v1203
        %v1443 = vpop.xlane.xlu0 %1442
        %1444 = vadd.xlane.f32.xlu0 %v1204
        %v1445 = vpop.xlane.xlu0 %1444
        %1446 = vadd.xlane.f32.xlu0 %v1205
        %v1447 = vpop.xlane.xlu0 %1446
        %1448 = vadd.xlane.f32.xlu0 %v1206
        %v1449 = vpop.xlane.xlu0 %1448
        %1450 = vadd.xlane.f32.xlu0 %v1207
        %v1451 = vpop.xlane.xlu0 %1450
        %1452 = vadd.xlane.f32.xlu0 %v1208
        %v1453 = vpop.xlane.xlu0 %1452
        %1454 = vadd.xlane.f32.xlu0 %v1209
        %v1455 = vpop.xlane.xlu0 %1454
        %1456 = vadd.xlane.f32.xlu0 %v1210
        %v1457 = vpop.xlane.xlu0 %1456
        %1458 = vadd.xlane.f32.xlu0 %v1211
        %v1459 = vpop.xlane.xlu0 %1458
        %1460 = vadd.xlane.f32.xlu0 %v1212
        %v1461 = vpop.xlane.xlu0 %1460
        %1462 = vadd.xlane.f32.xlu0 %v1213
        %v1463 = vpop.xlane.xlu0 %1462
        %1464 = vadd.xlane.f32.xlu0 %v1214
        %v1465 = vpop.xlane.xlu0 %1464
        %1466 = vadd.xlane.f32.xlu0 %v1215
        %v1467 = vpop.xlane.xlu0 %1466
        %1468 = vadd.xlane.f32.xlu0 %v1216
        %v1469 = vpop.xlane.xlu0 %1468
        %1470 = vadd.xlane.f32.xlu0 %v1217
        %v1471 = vpop.xlane.xlu0 %1470
        %1472 = vadd.xlane.f32.xlu0 %v1218
        %v1473 = vpop.xlane.xlu0 %1472
        %1474 = vadd.xlane.f32.xlu0 %v1219
        %v1475 = vpop.xlane.xlu0 %1474
        %v1476 = vlaneseq
        %v1477 = vshrl.u32 %v1476, 7
        %v1478 = vsub.s32 0, %v1477
        %v1479 = vrot.slane %v856, %v1478
        %1481 = vbcast.lane.b32.xlu0 %v1479, 256
        %v1482 = vpop.permute.xlu0 %1481
        %s1484 = sor.u32 256, 8
        %1485 = vbcast.lane.b32.xlu0 %v1479, %s1484
        %v1486 = vpop.permute.xlu0 %1485
        %s1488 = sor.u32 256, 16
        %1489 = vbcast.lane.b32.xlu0 %v1479, %s1488
        %v1490 = vpop.permute.xlu0 %1489
        %s1492 = sor.u32 256, 24
        %1493 = vbcast.lane.b32.xlu0 %v1479, %s1492
        %v1494 = vpop.permute.xlu0 %1493
        %s1496 = sor.u32 256, 32
        %1497 = vbcast.lane.b32.xlu0 %v1479, %s1496
        %v1498 = vpop.permute.xlu0 %1497
        %s1500 = sor.u32 256, 40
        %1501 = vbcast.lane.b32.xlu0 %v1479, %s1500
        %v1502 = vpop.permute.xlu0 %1501
        %s1504 = sor.u32 256, 48
        %1505 = vbcast.lane.b32.xlu0 %v1479, %s1504
        %v1506 = vpop.permute.xlu0 %1505
        %s1508 = sor.u32 256, 56
        %1509 = vbcast.lane.b32.xlu0 %v1479, %s1508
        %v1510 = vpop.permute.xlu0 %1509
        %s1512 = sor.u32 256, 64
        %1513 = vbcast.lane.b32.xlu0 %v1479, %s1512
        %v1514 = vpop.permute.xlu0 %1513
        %s1516 = sor.u32 256, 72
        %1517 = vbcast.lane.b32.xlu0 %v1479, %s1516
        %v1518 = vpop.permute.xlu0 %1517
        %s1520 = sor.u32 256, 80
        %1521 = vbcast.lane.b32.xlu0 %v1479, %s1520
        %v1522 = vpop.permute.xlu0 %1521
        %s1524 = sor.u32 256, 88
        %1525 = vbcast.lane.b32.xlu0 %v1479, %s1524
        %v1526 = vpop.permute.xlu0 %1525
        %s1528 = sor.u32 256, 96
        %1529 = vbcast.lane.b32.xlu0 %v1479, %s1528
        %v1530 = vpop.permute.xlu0 %1529
        %s1532 = sor.u32 256, 104
        %1533 = vbcast.lane.b32.xlu0 %v1479, %s1532
        %v1534 = vpop.permute.xlu0 %1533
        %s1536 = sor.u32 256, 112
        %1537 = vbcast.lane.b32.xlu0 %v1479, %s1536
        %v1538 = vpop.permute.xlu0 %1537
        %s1540 = sor.u32 256, 120
        %1541 = vbcast.lane.b32.xlu0 %v1479, %s1540
        %v1542 = vpop.permute.xlu0 %1541
        %v1543 = vlaneseq
        %v1544 = vshrl.u32 %v1543, 7
        %v1545 = vsub.s32 1, %v1544
        %v1546 = vrot.slane %v856, %v1545
        %1548 = vbcast.lane.b32.xlu0 %v1546, 256
        %v1549 = vpop.permute.xlu0 %1548
        %s1551 = sor.u32 256, 8
        %1552 = vbcast.lane.b32.xlu0 %v1546, %s1551
        %v1553 = vpop.permute.xlu0 %1552
        %s1555 = sor.u32 256, 16
        %1556 = vbcast.lane.b32.xlu0 %v1546, %s1555
        %v1557 = vpop.permute.xlu0 %1556
        %s1559 = sor.u32 256, 24
        %1560 = vbcast.lane.b32.xlu0 %v1546, %s1559
        %v1561 = vpop.permute.xlu0 %1560
        %s1563 = sor.u32 256, 32
        %1564 = vbcast.lane.b32.xlu0 %v1546, %s1563
        %v1565 = vpop.permute.xlu0 %1564
        %s1567 = sor.u32 256, 40
        %1568 = vbcast.lane.b32.xlu0 %v1546, %s1567
        %v1569 = vpop.permute.xlu0 %1568
        %s1571 = sor.u32 256, 48
        %1572 = vbcast.lane.b32.xlu0 %v1546, %s1571
        %v1573 = vpop.permute.xlu0 %1572
        %s1575 = sor.u32 256, 56
        %1576 = vbcast.lane.b32.xlu0 %v1546, %s1575
        %v1577 = vpop.permute.xlu0 %1576
        %s1579 = sor.u32 256, 64
        %1580 = vbcast.lane.b32.xlu0 %v1546, %s1579
        %v1581 = vpop.permute.xlu0 %1580
        %s1583 = sor.u32 256, 72
        %1584 = vbcast.lane.b32.xlu0 %v1546, %s1583
        %v1585 = vpop.permute.xlu0 %1584
        %s1587 = sor.u32 256, 80
        %1588 = vbcast.lane.b32.xlu0 %v1546, %s1587
        %v1589 = vpop.permute.xlu0 %1588
        %s1591 = sor.u32 256, 88
        %1592 = vbcast.lane.b32.xlu0 %v1546, %s1591
        %v1593 = vpop.permute.xlu0 %1592
        %s1595 = sor.u32 256, 96
        %1596 = vbcast.lane.b32.xlu0 %v1546, %s1595
        %v1597 = vpop.permute.xlu0 %1596
        %s1599 = sor.u32 256, 104
        %1600 = vbcast.lane.b32.xlu0 %v1546, %s1599
        %v1601 = vpop.permute.xlu0 %1600
        %s1603 = sor.u32 256, 112
        %1604 = vbcast.lane.b32.xlu0 %v1546, %s1603
        %v1605 = vpop.permute.xlu0 %1604
        %s1607 = sor.u32 256, 120
        %1608 = vbcast.lane.b32.xlu0 %v1546, %s1607
        %v1609 = vpop.permute.xlu0 %1608
        %v1610 = vlaneseq
        %v1611 = vshrl.u32 %v1610, 7
        %v1612 = vsub.s32 2, %v1611
        %v1613 = vrot.slane %v856, %v1612
        %1615 = vbcast.lane.b32.xlu0 %v1613, 256
        %v1616 = vpop.permute.xlu0 %1615
        %s1618 = sor.u32 256, 8
        %1619 = vbcast.lane.b32.xlu0 %v1613, %s1618
        %v1620 = vpop.permute.xlu0 %1619
        %s1622 = sor.u32 256, 16
        %1623 = vbcast.lane.b32.xlu0 %v1613, %s1622
        %v1624 = vpop.permute.xlu0 %1623
        %s1626 = sor.u32 256, 24
        %1627 = vbcast.lane.b32.xlu0 %v1613, %s1626
        %v1628 = vpop.permute.xlu0 %1627
        %s1630 = sor.u32 256, 32
        %1631 = vbcast.lane.b32.xlu0 %v1613, %s1630
        %v1632 = vpop.permute.xlu0 %1631
        %s1634 = sor.u32 256, 40
        %1635 = vbcast.lane.b32.xlu0 %v1613, %s1634
        %v1636 = vpop.permute.xlu0 %1635
        %s1638 = sor.u32 256, 48
        %1639 = vbcast.lane.b32.xlu0 %v1613, %s1638
        %v1640 = vpop.permute.xlu0 %1639
        %s1642 = sor.u32 256, 56
        %1643 = vbcast.lane.b32.xlu0 %v1613, %s1642
        %v1644 = vpop.permute.xlu0 %1643
        %s1646 = sor.u32 256, 64
        %1647 = vbcast.lane.b32.xlu0 %v1613, %s1646
        %v1648 = vpop.permute.xlu0 %1647
        %s1650 = sor.u32 256, 72
        %1651 = vbcast.lane.b32.xlu0 %v1613, %s1650
        %v1652 = vpop.permute.xlu0 %1651
        %s1654 = sor.u32 256, 80
        %1655 = vbcast.lane.b32.xlu0 %v1613, %s1654
        %v1656 = vpop.permute.xlu0 %1655
        %s1658 = sor.u32 256, 88
        %1659 = vbcast.lane.b32.xlu0 %v1613, %s1658
        %v1660 = vpop.permute.xlu0 %1659
        %s1662 = sor.u32 256, 96
        %1663 = vbcast.lane.b32.xlu0 %v1613, %s1662
        %v1664 = vpop.permute.xlu0 %1663
        %s1666 = sor.u32 256, 104
        %1667 = vbcast.lane.b32.xlu0 %v1613, %s1666
        %v1668 = vpop.permute.xlu0 %1667
        %s1670 = sor.u32 256, 112
        %1671 = vbcast.lane.b32.xlu0 %v1613, %s1670
        %v1672 = vpop.permute.xlu0 %1671
        %s1674 = sor.u32 256, 120
        %1675 = vbcast.lane.b32.xlu0 %v1613, %s1674
        %v1676 = vpop.permute.xlu0 %1675
        %v1677 = vlaneseq
        %v1678 = vshrl.u32 %v1677, 7
        %v1679 = vsub.s32 3, %v1678
        %v1680 = vrot.slane %v856, %v1679
        %1682 = vbcast.lane.b32.xlu0 %v1680, 256
        %v1683 = vpop.permute.xlu0 %1682
        %s1685 = sor.u32 256, 8
        %1686 = vbcast.lane.b32.xlu0 %v1680, %s1685
        %v1687 = vpop.permute.xlu0 %1686
        %s1689 = sor.u32 256, 16
        %1690 = vbcast.lane.b32.xlu0 %v1680, %s1689
        %v1691 = vpop.permute.xlu0 %1690
        %s1693 = sor.u32 256, 24
        %1694 = vbcast.lane.b32.xlu0 %v1680, %s1693
        %v1695 = vpop.permute.xlu0 %1694
        %s1697 = sor.u32 256, 32
        %1698 = vbcast.lane.b32.xlu0 %v1680, %s1697
        %v1699 = vpop.permute.xlu0 %1698
        %s1701 = sor.u32 256, 40
        %1702 = vbcast.lane.b32.xlu0 %v1680, %s1701
        %v1703 = vpop.permute.xlu0 %1702
        %s1705 = sor.u32 256, 48
        %1706 = vbcast.lane.b32.xlu0 %v1680, %s1705
        %v1707 = vpop.permute.xlu0 %1706
        %s1709 = sor.u32 256, 56
        %1710 = vbcast.lane.b32.xlu0 %v1680, %s1709
        %v1711 = vpop.permute.xlu0 %1710
        %s1713 = sor.u32 256, 64
        %1714 = vbcast.lane.b32.xlu0 %v1680, %s1713
        %v1715 = vpop.permute.xlu0 %1714
        %s1717 = sor.u32 256, 72
        %1718 = vbcast.lane.b32.xlu0 %v1680, %s1717
        %v1719 = vpop.permute.xlu0 %1718
        %s1721 = sor.u32 256, 80
        %1722 = vbcast.lane.b32.xlu0 %v1680, %s1721
        %v1723 = vpop.permute.xlu0 %1722
        %s1725 = sor.u32 256, 88
        %1726 = vbcast.lane.b32.xlu0 %v1680, %s1725
        %v1727 = vpop.permute.xlu0 %1726
        %s1729 = sor.u32 256, 96
        %1730 = vbcast.lane.b32.xlu0 %v1680, %s1729
        %v1731 = vpop.permute.xlu0 %1730
        %s1733 = sor.u32 256, 104
        %1734 = vbcast.lane.b32.xlu0 %v1680, %s1733
        %v1735 = vpop.permute.xlu0 %1734
        %s1737 = sor.u32 256, 112
        %1738 = vbcast.lane.b32.xlu0 %v1680, %s1737
        %v1739 = vpop.permute.xlu0 %1738
        %s1741 = sor.u32 256, 120
        %1742 = vbcast.lane.b32.xlu0 %v1680, %s1741
        %v1743 = vpop.permute.xlu0 %1742
        %v1744 = vlaneseq
        %v1745 = vshrl.u32 %v1744, 7
        %v1746 = vsub.s32 4, %v1745
        %v1747 = vrot.slane %v856, %v1746
        %1749 = vbcast.lane.b32.xlu0 %v1747, 256
        %v1750 = vpop.permute.xlu0 %1749
        %s1752 = sor.u32 256, 8
        %1753 = vbcast.lane.b32.xlu0 %v1747, %s1752
        %v1754 = vpop.permute.xlu0 %1753
        %s1756 = sor.u32 256, 16
        %1757 = vbcast.lane.b32.xlu0 %v1747, %s1756
        %v1758 = vpop.permute.xlu0 %1757
        %s1760 = sor.u32 256, 24
        %1761 = vbcast.lane.b32.xlu0 %v1747, %s1760
        %v1762 = vpop.permute.xlu0 %1761
        %s1764 = sor.u32 256, 32
        %1765 = vbcast.lane.b32.xlu0 %v1747, %s1764
        %v1766 = vpop.permute.xlu0 %1765
        %s1768 = sor.u32 256, 40
        %1769 = vbcast.lane.b32.xlu0 %v1747, %s1768
        %v1770 = vpop.permute.xlu0 %1769
        %s1772 = sor.u32 256, 48
        %1773 = vbcast.lane.b32.xlu0 %v1747, %s1772
        %v1774 = vpop.permute.xlu0 %1773
        %s1776 = sor.u32 256, 56
        %1777 = vbcast.lane.b32.xlu0 %v1747, %s1776
        %v1778 = vpop.permute.xlu0 %1777
        %s1780 = sor.u32 256, 64
        %1781 = vbcast.lane.b32.xlu0 %v1747, %s1780
        %v1782 = vpop.permute.xlu0 %1781
        %s1784 = sor.u32 256, 72
        %1785 = vbcast.lane.b32.xlu0 %v1747, %s1784
        %v1786 = vpop.permute.xlu0 %1785
        %s1788 = sor.u32 256, 80
        %1789 = vbcast.lane.b32.xlu0 %v1747, %s1788
        %v1790 = vpop.permute.xlu0 %1789
        %s1792 = sor.u32 256, 88
        %1793 = vbcast.lane.b32.xlu0 %v1747, %s1792
        %v1794 = vpop.permute.xlu0 %1793
        %s1796 = sor.u32 256, 96
        %1797 = vbcast.lane.b32.xlu0 %v1747, %s1796
        %v1798 = vpop.permute.xlu0 %1797
        %s1800 = sor.u32 256, 104
        %1801 = vbcast.lane.b32.xlu0 %v1747, %s1800
        %v1802 = vpop.permute.xlu0 %1801
        %s1804 = sor.u32 256, 112
        %1805 = vbcast.lane.b32.xlu0 %v1747, %s1804
        %v1806 = vpop.permute.xlu0 %1805
        %s1808 = sor.u32 256, 120
        %1809 = vbcast.lane.b32.xlu0 %v1747, %s1808
        %v1810 = vpop.permute.xlu0 %1809
        %v1811 = vlaneseq
        %v1812 = vshrl.u32 %v1811, 7
        %v1813 = vsub.s32 5, %v1812
        %v1814 = vrot.slane %v856, %v1813
        %1816 = vbcast.lane.b32.xlu0 %v1814, 256
        %v1817 = vpop.permute.xlu0 %1816
        %s1819 = sor.u32 256, 8
        %1820 = vbcast.lane.b32.xlu0 %v1814, %s1819
        %v1821 = vpop.permute.xlu0 %1820
        %s1823 = sor.u32 256, 16
        %1824 = vbcast.lane.b32.xlu0 %v1814, %s1823
        %v1825 = vpop.permute.xlu0 %1824
        %s1827 = sor.u32 256, 24
        %1828 = vbcast.lane.b32.xlu0 %v1814, %s1827
        %v1829 = vpop.permute.xlu0 %1828
        %s1831 = sor.u32 256, 32
        %1832 = vbcast.lane.b32.xlu0 %v1814, %s1831
        %v1833 = vpop.permute.xlu0 %1832
        %s1835 = sor.u32 256, 40
        %1836 = vbcast.lane.b32.xlu0 %v1814, %s1835
        %v1837 = vpop.permute.xlu0 %1836
        %s1839 = sor.u32 256, 48
        %1840 = vbcast.lane.b32.xlu0 %v1814, %s1839
        %v1841 = vpop.permute.xlu0 %1840
        %s1843 = sor.u32 256, 56
        %1844 = vbcast.lane.b32.xlu0 %v1814, %s1843
        %v1845 = vpop.permute.xlu0 %1844
        %s1847 = sor.u32 256, 64
        %1848 = vbcast.lane.b32.xlu0 %v1814, %s1847
        %v1849 = vpop.permute.xlu0 %1848
        %s1851 = sor.u32 256, 72
        %1852 = vbcast.lane.b32.xlu0 %v1814, %s1851
        %v1853 = vpop.permute.xlu0 %1852
        %s1855 = sor.u32 256, 80
        %1856 = vbcast.lane.b32.xlu0 %v1814, %s1855
        %v1857 = vpop.permute.xlu0 %1856
        %s1859 = sor.u32 256, 88
        %1860 = vbcast.lane.b32.xlu0 %v1814, %s1859
        %v1861 = vpop.permute.xlu0 %1860
        %s1863 = sor.u32 256, 96
        %1864 = vbcast.lane.b32.xlu0 %v1814, %s1863
        %v1865 = vpop.permute.xlu0 %1864
        %s1867 = sor.u32 256, 104
        %1868 = vbcast.lane.b32.xlu0 %v1814, %s1867
        %v1869 = vpop.permute.xlu0 %1868
        %s1871 = sor.u32 256, 112
        %1872 = vbcast.lane.b32.xlu0 %v1814, %s1871
        %v1873 = vpop.permute.xlu0 %1872
        %s1875 = sor.u32 256, 120
        %1876 = vbcast.lane.b32.xlu0 %v1814, %s1875
        %v1877 = vpop.permute.xlu0 %1876
        %v1878 = vlaneseq
        %v1879 = vshrl.u32 %v1878, 7
        %v1880 = vsub.s32 6, %v1879
        %v1881 = vrot.slane %v856, %v1880
        %1883 = vbcast.lane.b32.xlu0 %v1881, 256
        %v1884 = vpop.permute.xlu0 %1883
        %s1886 = sor.u32 256, 8
        %1887 = vbcast.lane.b32.xlu0 %v1881, %s1886
        %v1888 = vpop.permute.xlu0 %1887
        %s1890 = sor.u32 256, 16
        %1891 = vbcast.lane.b32.xlu0 %v1881, %s1890
        %v1892 = vpop.permute.xlu0 %1891
        %s1894 = sor.u32 256, 24
        %1895 = vbcast.lane.b32.xlu0 %v1881, %s1894
        %v1896 = vpop.permute.xlu0 %1895
        %s1898 = sor.u32 256, 32
        %1899 = vbcast.lane.b32.xlu0 %v1881, %s1898
        %v1900 = vpop.permute.xlu0 %1899
        %s1902 = sor.u32 256, 40
        %1903 = vbcast.lane.b32.xlu0 %v1881, %s1902
        %v1904 = vpop.permute.xlu0 %1903
        %s1906 = sor.u32 256, 48
        %1907 = vbcast.lane.b32.xlu0 %v1881, %s1906
        %v1908 = vpop.permute.xlu0 %1907
        %s1910 = sor.u32 256, 56
        %1911 = vbcast.lane.b32.xlu0 %v1881, %s1910
        %v1912 = vpop.permute.xlu0 %1911
        %s1914 = sor.u32 256, 64
        %1915 = vbcast.lane.b32.xlu0 %v1881, %s1914
        %v1916 = vpop.permute.xlu0 %1915
        %s1918 = sor.u32 256, 72
        %1919 = vbcast.lane.b32.xlu0 %v1881, %s1918
        %v1920 = vpop.permute.xlu0 %1919
        %s1922 = sor.u32 256, 80
        %1923 = vbcast.lane.b32.xlu0 %v1881, %s1922
        %v1924 = vpop.permute.xlu0 %1923
        %s1926 = sor.u32 256, 88
        %1927 = vbcast.lane.b32.xlu0 %v1881, %s1926
        %v1928 = vpop.permute.xlu0 %1927
        %s1930 = sor.u32 256, 96
        %1931 = vbcast.lane.b32.xlu0 %v1881, %s1930
        %v1932 = vpop.permute.xlu0 %1931
        %s1934 = sor.u32 256, 104
        %1935 = vbcast.lane.b32.xlu0 %v1881, %s1934
        %v1936 = vpop.permute.xlu0 %1935
        %s1938 = sor.u32 256, 112
        %1939 = vbcast.lane.b32.xlu0 %v1881, %s1938
        %v1940 = vpop.permute.xlu0 %1939
        %s1942 = sor.u32 256, 120
        %1943 = vbcast.lane.b32.xlu0 %v1881, %s1942
        %v1944 = vpop.permute.xlu0 %1943
        %v1945 = vlaneseq
        %v1946 = vshrl.u32 %v1945, 7
        %v1947 = vsub.s32 7, %v1946
        %v1948 = vrot.slane %v856, %v1947
        %1950 = vbcast.lane.b32.xlu0 %v1948, 256
        %v1951 = vpop.permute.xlu0 %1950
        %s1953 = sor.u32 256, 8
        %1954 = vbcast.lane.b32.xlu0 %v1948, %s1953
        %v1955 = vpop.permute.xlu0 %1954
        %s1957 = sor.u32 256, 16
        %1958 = vbcast.lane.b32.xlu0 %v1948, %s1957
        %v1959 = vpop.permute.xlu0 %1958
        %s1961 = sor.u32 256, 24
        %1962 = vbcast.lane.b32.xlu0 %v1948, %s1961
        %v1963 = vpop.permute.xlu0 %1962
        %s1965 = sor.u32 256, 32
        %1966 = vbcast.lane.b32.xlu0 %v1948, %s1965
        %v1967 = vpop.permute.xlu0 %1966
        %s1969 = sor.u32 256, 40
        %1970 = vbcast.lane.b32.xlu0 %v1948, %s1969
        %v1971 = vpop.permute.xlu0 %1970
        %s1973 = sor.u32 256, 48
        %1974 = vbcast.lane.b32.xlu0 %v1948, %s1973
        %v1975 = vpop.permute.xlu0 %1974
        %s1977 = sor.u32 256, 56
        %1978 = vbcast.lane.b32.xlu0 %v1948, %s1977
        %v1979 = vpop.permute.xlu0 %1978
        %s1981 = sor.u32 256, 64
        %1982 = vbcast.lane.b32.xlu0 %v1948, %s1981
        %v1983 = vpop.permute.xlu0 %1982
        %s1985 = sor.u32 256, 72
        %1986 = vbcast.lane.b32.xlu0 %v1948, %s1985
        %v1987 = vpop.permute.xlu0 %1986
        %s1989 = sor.u32 256, 80
        %1990 = vbcast.lane.b32.xlu0 %v1948, %s1989
        %v1991 = vpop.permute.xlu0 %1990
        %s1993 = sor.u32 256, 88
        %1994 = vbcast.lane.b32.xlu0 %v1948, %s1993
        %v1995 = vpop.permute.xlu0 %1994
        %s1997 = sor.u32 256, 96
        %1998 = vbcast.lane.b32.xlu0 %v1948, %s1997
        %v1999 = vpop.permute.xlu0 %1998
        %s2001 = sor.u32 256, 104
        %2002 = vbcast.lane.b32.xlu0 %v1948, %s2001
        %v2003 = vpop.permute.xlu0 %2002
        %s2005 = sor.u32 256, 112
        %2006 = vbcast.lane.b32.xlu0 %v1948, %s2005
        %v2007 = vpop.permute.xlu0 %2006
        %s2009 = sor.u32 256, 120
        %2010 = vbcast.lane.b32.xlu0 %v1948, %s2009
        %v2011 = vpop.permute.xlu0 %2010
        %v2012 = vmul.f32 %v1482, %v874
        %v2013 = vmul.f32 %v1486, %v875
        %v2014 = vmul.f32 %v1490, %v876
        %v2015 = vmul.f32 %v1494, %v877
        %v2016 = vmul.f32 %v1498, %v878
        %v2017 = vmul.f32 %v1502, %v879
        %v2018 = vmul.f32 %v1506, %v880
        %v2019 = vmul.f32 %v1510, %v881
        %v2020 = vmul.f32 %v1514, %v882
        %v2021 = vmul.f32 %v1518, %v883
        %v2022 = vmul.f32 %v1522, %v884
        %v2023 = vmul.f32 %v1526, %v885
        %v2024 = vmul.f32 %v1530, %v886
        %v2025 = vmul.f32 %v1534, %v887
        %v2026 = vmul.f32 %v1538, %v888
        %v2027 = vmul.f32 %v1542, %v889
        %v2028 = vmul.f32 %v1549, %v890
        %v2029 = vmul.f32 %v1553, %v891
        %v2030 = vmul.f32 %v1557, %v892
        %v2031 = vmul.f32 %v1561, %v893
        %v2032 = vmul.f32 %v1565, %v894
        %v2033 = vmul.f32 %v1569, %v895
        %v2034 = vmul.f32 %v1573, %v896
        %v2035 = vmul.f32 %v1577, %v897
        %v2036 = vmul.f32 %v1581, %v898
        %v2037 = vmul.f32 %v1585, %v899
        %v2038 = vmul.f32 %v1589, %v900
        %v2039 = vmul.f32 %v1593, %v901
        %v2040 = vmul.f32 %v1597, %v902
        %v2041 = vmul.f32 %v1601, %v903
        %v2042 = vmul.f32 %v1605, %v904
        %v2043 = vmul.f32 %v1609, %v905
        %v2044 = vmul.f32 %v1616, %v906
        %v2045 = vmul.f32 %v1620, %v907
        %v2046 = vmul.f32 %v1624, %v908
        %v2047 = vmul.f32 %v1628, %v909
        %v2048 = vmul.f32 %v1632, %v910
        %v2049 = vmul.f32 %v1636, %v911
        %v2050 = vmul.f32 %v1640, %v912
        %v2051 = vmul.f32 %v1644, %v913
        %v2052 = vmul.f32 %v1648, %v914
        %v2053 = vmul.f32 %v1652, %v915
        %v2054 = vmul.f32 %v1656, %v916
        %v2055 = vmul.f32 %v1660, %v917
        %v2056 = vmul.f32 %v1664, %v918
        %v2057 = vmul.f32 %v1668, %v919
        %v2058 = vmul.f32 %v1672, %v920
        %v2059 = vmul.f32 %v1676, %v921
        %v2060 = vmul.f32 %v1683, %v922
        %v2061 = vmul.f32 %v1687, %v923
        %v2062 = vmul.f32 %v1691, %v924
        %v2063 = vmul.f32 %v1695, %v925
        %v2064 = vmul.f32 %v1699, %v926
        %v2065 = vmul.f32 %v1703, %v927
        %v2066 = vmul.f32 %v1707, %v928
        %v2067 = vmul.f32 %v1711, %v929
        %v2068 = vmul.f32 %v1715, %v930
        %v2069 = vmul.f32 %v1719, %v931
        %v2070 = vmul.f32 %v1723, %v932
        %v2071 = vmul.f32 %v1727, %v933
        %v2072 = vmul.f32 %v1731, %v934
        %v2073 = vmul.f32 %v1735, %v935
        %v2074 = vmul.f32 %v1739, %v936
        %v2075 = vmul.f32 %v1743, %v937
        %v2076 = vmul.f32 %v1750, %v938
        %v2077 = vmul.f32 %v1754, %v939
        %v2078 = vmul.f32 %v1758, %v940
        %v2079 = vmul.f32 %v1762, %v941
        %v2080 = vmul.f32 %v1766, %v942
        %v2081 = vmul.f32 %v1770, %v943
        %v2082 = vmul.f32 %v1774, %v944
        %v2083 = vmul.f32 %v1778, %v945
        %v2084 = vmul.f32 %v1782, %v946
        %v2085 = vmul.f32 %v1786, %v947
        %v2086 = vmul.f32 %v1790, %v948
        %v2087 = vmul.f32 %v1794, %v949
        %v2088 = vmul.f32 %v1798, %v950
        %v2089 = vmul.f32 %v1802, %v951
        %v2090 = vmul.f32 %v1806, %v952
        %v2091 = vmul.f32 %v1810, %v953
        %v2092 = vmul.f32 %v1817, %v954
        %v2093 = vmul.f32 %v1821, %v955
        %v2094 = vmul.f32 %v1825, %v956
        %v2095 = vmul.f32 %v1829, %v957
        %v2096 = vmul.f32 %v1833, %v958
        %v2097 = vmul.f32 %v1837, %v959
        %v2098 = vmul.f32 %v1841, %v960
        %v2099 = vmul.f32 %v1845, %v961
        %v2100 = vmul.f32 %v1849, %v962
        %v2101 = vmul.f32 %v1853, %v963
        %v2102 = vmul.f32 %v1857, %v964
        %v2103 = vmul.f32 %v1861, %v965
        %v2104 = vmul.f32 %v1865, %v966
        %v2105 = vmul.f32 %v1869, %v967
        %v2106 = vmul.f32 %v1873, %v968
        %v2107 = vmul.f32 %v1877, %v969
        %v2108 = vmul.f32 %v1884, %v970
        %v2109 = vmul.f32 %v1888, %v971
        %v2110 = vmul.f32 %v1892, %v972
        %v2111 = vmul.f32 %v1896, %v973
        %v2112 = vmul.f32 %v1900, %v974
        %v2113 = vmul.f32 %v1904, %v975
        %v2114 = vmul.f32 %v1908, %v976
        %v2115 = vmul.f32 %v1912, %v977
        %v2116 = vmul.f32 %v1916, %v978
        %v2117 = vmul.f32 %v1920, %v979
        %v2118 = vmul.f32 %v1924, %v980
        %v2119 = vmul.f32 %v1928, %v981
        %v2120 = vmul.f32 %v1932, %v982
        %v2121 = vmul.f32 %v1936, %v983
        %v2122 = vmul.f32 %v1940, %v984
        %v2123 = vmul.f32 %v1944, %v985
        %v2124 = vmul.f32 %v1951, %v986
        %v2125 = vmul.f32 %v1955, %v987
        %v2126 = vmul.f32 %v1959, %v988
        %v2127 = vmul.f32 %v1963, %v989
        %v2128 = vmul.f32 %v1967, %v990
        %v2129 = vmul.f32 %v1971, %v991
        %v2130 = vmul.f32 %v1975, %v992
        %v2131 = vmul.f32 %v1979, %v993
        %v2132 = vmul.f32 %v1983, %v994
        %v2133 = vmul.f32 %v1987, %v995
        %v2134 = vmul.f32 %v1991, %v996
        %v2135 = vmul.f32 %v1995, %v997
        %v2136 = vmul.f32 %v1999, %v998
        %v2137 = vmul.f32 %v2003, %v999
        %v2138 = vmul.f32 %v2007, %v1000
        %v2139 = vmul.f32 %v2011, %v1001
        %v2140 = vlaneseq
        %v2141 = vshrl.u32 %v2140, 7
        %v2142 = vsub.s32 0, %v2141
        %v2143 = vrot.slane %v859, %v2142
        %2145 = vbcast.lane.b32.xlu0 %v2143, 256
        %v2146 = vpop.permute.xlu0 %2145
        %s2148 = sor.u32 256, 8
        %2149 = vbcast.lane.b32.xlu0 %v2143, %s2148
        %v2150 = vpop.permute.xlu0 %2149
        %s2152 = sor.u32 256, 16
        %2153 = vbcast.lane.b32.xlu0 %v2143, %s2152
        %v2154 = vpop.permute.xlu0 %2153
        %s2156 = sor.u32 256, 24
        %2157 = vbcast.lane.b32.xlu0 %v2143, %s2156
        %v2158 = vpop.permute.xlu0 %2157
        %s2160 = sor.u32 256, 32
        %2161 = vbcast.lane.b32.xlu0 %v2143, %s2160
        %v2162 = vpop.permute.xlu0 %2161
        %s2164 = sor.u32 256, 40
        %2165 = vbcast.lane.b32.xlu0 %v2143, %s2164
        %v2166 = vpop.permute.xlu0 %2165
        %s2168 = sor.u32 256, 48
        %2169 = vbcast.lane.b32.xlu0 %v2143, %s2168
        %v2170 = vpop.permute.xlu0 %2169
        %s2172 = sor.u32 256, 56
        %2173 = vbcast.lane.b32.xlu0 %v2143, %s2172
        %v2174 = vpop.permute.xlu0 %2173
        %s2176 = sor.u32 256, 64
        %2177 = vbcast.lane.b32.xlu0 %v2143, %s2176
        %v2178 = vpop.permute.xlu0 %2177
        %s2180 = sor.u32 256, 72
        %2181 = vbcast.lane.b32.xlu0 %v2143, %s2180
        %v2182 = vpop.permute.xlu0 %2181
        %s2184 = sor.u32 256, 80
        %2185 = vbcast.lane.b32.xlu0 %v2143, %s2184
        %v2186 = vpop.permute.xlu0 %2185
        %s2188 = sor.u32 256, 88
        %2189 = vbcast.lane.b32.xlu0 %v2143, %s2188
        %v2190 = vpop.permute.xlu0 %2189
        %s2192 = sor.u32 256, 96
        %2193 = vbcast.lane.b32.xlu0 %v2143, %s2192
        %v2194 = vpop.permute.xlu0 %2193
        %s2196 = sor.u32 256, 104
        %2197 = vbcast.lane.b32.xlu0 %v2143, %s2196
        %v2198 = vpop.permute.xlu0 %2197
        %s2200 = sor.u32 256, 112
        %2201 = vbcast.lane.b32.xlu0 %v2143, %s2200
        %v2202 = vpop.permute.xlu0 %2201
        %s2204 = sor.u32 256, 120
        %2205 = vbcast.lane.b32.xlu0 %v2143, %s2204
        %v2206 = vpop.permute.xlu0 %2205
        %v2207 = vlaneseq
        %v2208 = vshrl.u32 %v2207, 7
        %v2209 = vsub.s32 1, %v2208
        %v2210 = vrot.slane %v859, %v2209
        %2212 = vbcast.lane.b32.xlu0 %v2210, 256
        %v2213 = vpop.permute.xlu0 %2212
        %s2215 = sor.u32 256, 8
        %2216 = vbcast.lane.b32.xlu0 %v2210, %s2215
        %v2217 = vpop.permute.xlu0 %2216
        %s2219 = sor.u32 256, 16
        %2220 = vbcast.lane.b32.xlu0 %v2210, %s2219
        %v2221 = vpop.permute.xlu0 %2220
        %s2223 = sor.u32 256, 24
        %2224 = vbcast.lane.b32.xlu0 %v2210, %s2223
        %v2225 = vpop.permute.xlu0 %2224
        %s2227 = sor.u32 256, 32
        %2228 = vbcast.lane.b32.xlu0 %v2210, %s2227
        %v2229 = vpop.permute.xlu0 %2228
        %s2231 = sor.u32 256, 40
        %2232 = vbcast.lane.b32.xlu0 %v2210, %s2231
        %v2233 = vpop.permute.xlu0 %2232
        %s2235 = sor.u32 256, 48
        %2236 = vbcast.lane.b32.xlu0 %v2210, %s2235
        %v2237 = vpop.permute.xlu0 %2236
        %s2239 = sor.u32 256, 56
        %2240 = vbcast.lane.b32.xlu0 %v2210, %s2239
        %v2241 = vpop.permute.xlu0 %2240
        %s2243 = sor.u32 256, 64
        %2244 = vbcast.lane.b32.xlu0 %v2210, %s2243
        %v2245 = vpop.permute.xlu0 %2244
        %s2247 = sor.u32 256, 72
        %2248 = vbcast.lane.b32.xlu0 %v2210, %s2247
        %v2249 = vpop.permute.xlu0 %2248
        %s2251 = sor.u32 256, 80
        %2252 = vbcast.lane.b32.xlu0 %v2210, %s2251
        %v2253 = vpop.permute.xlu0 %2252
        %s2255 = sor.u32 256, 88
        %2256 = vbcast.lane.b32.xlu0 %v2210, %s2255
        %v2257 = vpop.permute.xlu0 %2256
        %s2259 = sor.u32 256, 96
        %2260 = vbcast.lane.b32.xlu0 %v2210, %s2259
        %v2261 = vpop.permute.xlu0 %2260
        %s2263 = sor.u32 256, 104
        %2264 = vbcast.lane.b32.xlu0 %v2210, %s2263
        %v2265 = vpop.permute.xlu0 %2264
        %s2267 = sor.u32 256, 112
        %2268 = vbcast.lane.b32.xlu0 %v2210, %s2267
        %v2269 = vpop.permute.xlu0 %2268
        %s2271 = sor.u32 256, 120
        %2272 = vbcast.lane.b32.xlu0 %v2210, %s2271
        %v2273 = vpop.permute.xlu0 %2272
        %v2274 = vlaneseq
        %v2275 = vshrl.u32 %v2274, 7
        %v2276 = vsub.s32 2, %v2275
        %v2277 = vrot.slane %v859, %v2276
        %2279 = vbcast.lane.b32.xlu0 %v2277, 256
        %v2280 = vpop.permute.xlu0 %2279
        %s2282 = sor.u32 256, 8
        %2283 = vbcast.lane.b32.xlu0 %v2277, %s2282
        %v2284 = vpop.permute.xlu0 %2283
        %s2286 = sor.u32 256, 16
        %2287 = vbcast.lane.b32.xlu0 %v2277, %s2286
        %v2288 = vpop.permute.xlu0 %2287
        %s2290 = sor.u32 256, 24
        %2291 = vbcast.lane.b32.xlu0 %v2277, %s2290
        %v2292 = vpop.permute.xlu0 %2291
        %s2294 = sor.u32 256, 32
        %2295 = vbcast.lane.b32.xlu0 %v2277, %s2294
        %v2296 = vpop.permute.xlu0 %2295
        %s2298 = sor.u32 256, 40
        %2299 = vbcast.lane.b32.xlu0 %v2277, %s2298
        %v2300 = vpop.permute.xlu0 %2299
        %s2302 = sor.u32 256, 48
        %2303 = vbcast.lane.b32.xlu0 %v2277, %s2302
        %v2304 = vpop.permute.xlu0 %2303
        %s2306 = sor.u32 256, 56
        %2307 = vbcast.lane.b32.xlu0 %v2277, %s2306
        %v2308 = vpop.permute.xlu0 %2307
        %s2310 = sor.u32 256, 64
        %2311 = vbcast.lane.b32.xlu0 %v2277, %s2310
        %v2312 = vpop.permute.xlu0 %2311
        %s2314 = sor.u32 256, 72
        %2315 = vbcast.lane.b32.xlu0 %v2277, %s2314
        %v2316 = vpop.permute.xlu0 %2315
        %s2318 = sor.u32 256, 80
        %2319 = vbcast.lane.b32.xlu0 %v2277, %s2318
        %v2320 = vpop.permute.xlu0 %2319
        %s2322 = sor.u32 256, 88
        %2323 = vbcast.lane.b32.xlu0 %v2277, %s2322
        %v2324 = vpop.permute.xlu0 %2323
        %s2326 = sor.u32 256, 96
        %2327 = vbcast.lane.b32.xlu0 %v2277, %s2326
        %v2328 = vpop.permute.xlu0 %2327
        %s2330 = sor.u32 256, 104
        %2331 = vbcast.lane.b32.xlu0 %v2277, %s2330
        %v2332 = vpop.permute.xlu0 %2331
        %s2334 = sor.u32 256, 112
        %2335 = vbcast.lane.b32.xlu0 %v2277, %s2334
        %v2336 = vpop.permute.xlu0 %2335
        %s2338 = sor.u32 256, 120
        %2339 = vbcast.lane.b32.xlu0 %v2277, %s2338
        %v2340 = vpop.permute.xlu0 %2339
        %v2341 = vlaneseq
        %v2342 = vshrl.u32 %v2341, 7
        %v2343 = vsub.s32 3, %v2342
        %v2344 = vrot.slane %v859, %v2343
        %2346 = vbcast.lane.b32.xlu0 %v2344, 256
        %v2347 = vpop.permute.xlu0 %2346
        %s2349 = sor.u32 256, 8
        %2350 = vbcast.lane.b32.xlu0 %v2344, %s2349
        %v2351 = vpop.permute.xlu0 %2350
        %s2353 = sor.u32 256, 16
        %2354 = vbcast.lane.b32.xlu0 %v2344, %s2353
        %v2355 = vpop.permute.xlu0 %2354
        %s2357 = sor.u32 256, 24
        %2358 = vbcast.lane.b32.xlu0 %v2344, %s2357
        %v2359 = vpop.permute.xlu0 %2358
        %s2361 = sor.u32 256, 32
        %2362 = vbcast.lane.b32.xlu0 %v2344, %s2361
        %v2363 = vpop.permute.xlu0 %2362
        %s2365 = sor.u32 256, 40
        %2366 = vbcast.lane.b32.xlu0 %v2344, %s2365
        %v2367 = vpop.permute.xlu0 %2366
        %s2369 = sor.u32 256, 48
        %2370 = vbcast.lane.b32.xlu0 %v2344, %s2369
        %v2371 = vpop.permute.xlu0 %2370
        %s2373 = sor.u32 256, 56
        %2374 = vbcast.lane.b32.xlu0 %v2344, %s2373
        %v2375 = vpop.permute.xlu0 %2374
        %s2377 = sor.u32 256, 64
        %2378 = vbcast.lane.b32.xlu0 %v2344, %s2377
        %v2379 = vpop.permute.xlu0 %2378
        %s2381 = sor.u32 256, 72
        %2382 = vbcast.lane.b32.xlu0 %v2344, %s2381
        %v2383 = vpop.permute.xlu0 %2382
        %s2385 = sor.u32 256, 80
        %2386 = vbcast.lane.b32.xlu0 %v2344, %s2385
        %v2387 = vpop.permute.xlu0 %2386
        %s2389 = sor.u32 256, 88
        %2390 = vbcast.lane.b32.xlu0 %v2344, %s2389
        %v2391 = vpop.permute.xlu0 %2390
        %s2393 = sor.u32 256, 96
        %2394 = vbcast.lane.b32.xlu0 %v2344, %s2393
        %v2395 = vpop.permute.xlu0 %2394
        %s2397 = sor.u32 256, 104
        %2398 = vbcast.lane.b32.xlu0 %v2344, %s2397
        %v2399 = vpop.permute.xlu0 %2398
        %s2401 = sor.u32 256, 112
        %2402 = vbcast.lane.b32.xlu0 %v2344, %s2401
        %v2403 = vpop.permute.xlu0 %2402
        %s2405 = sor.u32 256, 120
        %2406 = vbcast.lane.b32.xlu0 %v2344, %s2405
        %v2407 = vpop.permute.xlu0 %2406
        %v2408 = vlaneseq
        %v2409 = vshrl.u32 %v2408, 7
        %v2410 = vsub.s32 4, %v2409
        %v2411 = vrot.slane %v859, %v2410
        %2413 = vbcast.lane.b32.xlu0 %v2411, 256
        %v2414 = vpop.permute.xlu0 %2413
        %s2416 = sor.u32 256, 8
        %2417 = vbcast.lane.b32.xlu0 %v2411, %s2416
        %v2418 = vpop.permute.xlu0 %2417
        %s2420 = sor.u32 256, 16
        %2421 = vbcast.lane.b32.xlu0 %v2411, %s2420
        %v2422 = vpop.permute.xlu0 %2421
        %s2424 = sor.u32 256, 24
        %2425 = vbcast.lane.b32.xlu0 %v2411, %s2424
        %v2426 = vpop.permute.xlu0 %2425
        %s2428 = sor.u32 256, 32
        %2429 = vbcast.lane.b32.xlu0 %v2411, %s2428
        %v2430 = vpop.permute.xlu0 %2429
        %s2432 = sor.u32 256, 40
        %2433 = vbcast.lane.b32.xlu0 %v2411, %s2432
        %v2434 = vpop.permute.xlu0 %2433
        %s2436 = sor.u32 256, 48
        %2437 = vbcast.lane.b32.xlu0 %v2411, %s2436
        %v2438 = vpop.permute.xlu0 %2437
        %s2440 = sor.u32 256, 56
        %2441 = vbcast.lane.b32.xlu0 %v2411, %s2440
        %v2442 = vpop.permute.xlu0 %2441
        %s2444 = sor.u32 256, 64
        %2445 = vbcast.lane.b32.xlu0 %v2411, %s2444
        %v2446 = vpop.permute.xlu0 %2445
        %s2448 = sor.u32 256, 72
        %2449 = vbcast.lane.b32.xlu0 %v2411, %s2448
        %v2450 = vpop.permute.xlu0 %2449
        %s2452 = sor.u32 256, 80
        %2453 = vbcast.lane.b32.xlu0 %v2411, %s2452
        %v2454 = vpop.permute.xlu0 %2453
        %s2456 = sor.u32 256, 88
        %2457 = vbcast.lane.b32.xlu0 %v2411, %s2456
        %v2458 = vpop.permute.xlu0 %2457
        %s2460 = sor.u32 256, 96
        %2461 = vbcast.lane.b32.xlu0 %v2411, %s2460
        %v2462 = vpop.permute.xlu0 %2461
        %s2464 = sor.u32 256, 104
        %2465 = vbcast.lane.b32.xlu0 %v2411, %s2464
        %v2466 = vpop.permute.xlu0 %2465
        %s2468 = sor.u32 256, 112
        %2469 = vbcast.lane.b32.xlu0 %v2411, %s2468
        %v2470 = vpop.permute.xlu0 %2469
        %s2472 = sor.u32 256, 120
        %2473 = vbcast.lane.b32.xlu0 %v2411, %s2472
        %v2474 = vpop.permute.xlu0 %2473
        %v2475 = vlaneseq
        %v2476 = vshrl.u32 %v2475, 7
        %v2477 = vsub.s32 5, %v2476
        %v2478 = vrot.slane %v859, %v2477
        %2480 = vbcast.lane.b32.xlu0 %v2478, 256
        %v2481 = vpop.permute.xlu0 %2480
        %s2483 = sor.u32 256, 8
        %2484 = vbcast.lane.b32.xlu0 %v2478, %s2483
        %v2485 = vpop.permute.xlu0 %2484
        %s2487 = sor.u32 256, 16
        %2488 = vbcast.lane.b32.xlu0 %v2478, %s2487
        %v2489 = vpop.permute.xlu0 %2488
        %s2491 = sor.u32 256, 24
        %2492 = vbcast.lane.b32.xlu0 %v2478, %s2491
        %v2493 = vpop.permute.xlu0 %2492
        %s2495 = sor.u32 256, 32
        %2496 = vbcast.lane.b32.xlu0 %v2478, %s2495
        %v2497 = vpop.permute.xlu0 %2496
        %s2499 = sor.u32 256, 40
        %2500 = vbcast.lane.b32.xlu0 %v2478, %s2499
        %v2501 = vpop.permute.xlu0 %2500
        %s2503 = sor.u32 256, 48
        %2504 = vbcast.lane.b32.xlu0 %v2478, %s2503
        %v2505 = vpop.permute.xlu0 %2504
        %s2507 = sor.u32 256, 56
        %2508 = vbcast.lane.b32.xlu0 %v2478, %s2507
        %v2509 = vpop.permute.xlu0 %2508
        %s2511 = sor.u32 256, 64
        %2512 = vbcast.lane.b32.xlu0 %v2478, %s2511
        %v2513 = vpop.permute.xlu0 %2512
        %s2515 = sor.u32 256, 72
        %2516 = vbcast.lane.b32.xlu0 %v2478, %s2515
        %v2517 = vpop.permute.xlu0 %2516
        %s2519 = sor.u32 256, 80
        %2520 = vbcast.lane.b32.xlu0 %v2478, %s2519
        %v2521 = vpop.permute.xlu0 %2520
        %s2523 = sor.u32 256, 88
        %2524 = vbcast.lane.b32.xlu0 %v2478, %s2523
        %v2525 = vpop.permute.xlu0 %2524
        %s2527 = sor.u32 256, 96
        %2528 = vbcast.lane.b32.xlu0 %v2478, %s2527
        %v2529 = vpop.permute.xlu0 %2528
        %s2531 = sor.u32 256, 104
        %2532 = vbcast.lane.b32.xlu0 %v2478, %s2531
        %v2533 = vpop.permute.xlu0 %2532
        %s2535 = sor.u32 256, 112
        %2536 = vbcast.lane.b32.xlu0 %v2478, %s2535
        %v2537 = vpop.permute.xlu0 %2536
        %s2539 = sor.u32 256, 120
        %2540 = vbcast.lane.b32.xlu0 %v2478, %s2539
        %v2541 = vpop.permute.xlu0 %2540
        %v2542 = vlaneseq
        %v2543 = vshrl.u32 %v2542, 7
        %v2544 = vsub.s32 6, %v2543
        %v2545 = vrot.slane %v859, %v2544
        %2547 = vbcast.lane.b32.xlu0 %v2545, 256
        %v2548 = vpop.permute.xlu0 %2547
        %s2550 = sor.u32 256, 8
        %2551 = vbcast.lane.b32.xlu0 %v2545, %s2550
        %v2552 = vpop.permute.xlu0 %2551
        %s2554 = sor.u32 256, 16
        %2555 = vbcast.lane.b32.xlu0 %v2545, %s2554
        %v2556 = vpop.permute.xlu0 %2555
        %s2558 = sor.u32 256, 24
        %2559 = vbcast.lane.b32.xlu0 %v2545, %s2558
        %v2560 = vpop.permute.xlu0 %2559
        %s2562 = sor.u32 256, 32
        %2563 = vbcast.lane.b32.xlu0 %v2545, %s2562
        %v2564 = vpop.permute.xlu0 %2563
        %s2566 = sor.u32 256, 40
        %2567 = vbcast.lane.b32.xlu0 %v2545, %s2566
        %v2568 = vpop.permute.xlu0 %2567
        %s2570 = sor.u32 256, 48
        %2571 = vbcast.lane.b32.xlu0 %v2545, %s2570
        %v2572 = vpop.permute.xlu0 %2571
        %s2574 = sor.u32 256, 56
        %2575 = vbcast.lane.b32.xlu0 %v2545, %s2574
        %v2576 = vpop.permute.xlu0 %2575
        %s2578 = sor.u32 256, 64
        %2579 = vbcast.lane.b32.xlu0 %v2545, %s2578
        %v2580 = vpop.permute.xlu0 %2579
        %s2582 = sor.u32 256, 72
        %2583 = vbcast.lane.b32.xlu0 %v2545, %s2582
        %v2584 = vpop.permute.xlu0 %2583
        %s2586 = sor.u32 256, 80
        %2587 = vbcast.lane.b32.xlu0 %v2545, %s2586
        %v2588 = vpop.permute.xlu0 %2587
        %s2590 = sor.u32 256, 88
        %2591 = vbcast.lane.b32.xlu0 %v2545, %s2590
        %v2592 = vpop.permute.xlu0 %2591
        %s2594 = sor.u32 256, 96
        %2595 = vbcast.lane.b32.xlu0 %v2545, %s2594
        %v2596 = vpop.permute.xlu0 %2595
        %s2598 = sor.u32 256, 104
        %2599 = vbcast.lane.b32.xlu0 %v2545, %s2598
        %v2600 = vpop.permute.xlu0 %2599
        %s2602 = sor.u32 256, 112
        %2603 = vbcast.lane.b32.xlu0 %v2545, %s2602
        %v2604 = vpop.permute.xlu0 %2603
        %s2606 = sor.u32 256, 120
        %2607 = vbcast.lane.b32.xlu0 %v2545, %s2606
        %v2608 = vpop.permute.xlu0 %2607
        %v2609 = vlaneseq
        %v2610 = vshrl.u32 %v2609, 7
        %v2611 = vsub.s32 7, %v2610
        %v2612 = vrot.slane %v859, %v2611
        %2614 = vbcast.lane.b32.xlu0 %v2612, 256
        %v2615 = vpop.permute.xlu0 %2614
        %s2617 = sor.u32 256, 8
        %2618 = vbcast.lane.b32.xlu0 %v2612, %s2617
        %v2619 = vpop.permute.xlu0 %2618
        %s2621 = sor.u32 256, 16
        %2622 = vbcast.lane.b32.xlu0 %v2612, %s2621
        %v2623 = vpop.permute.xlu0 %2622
        %s2625 = sor.u32 256, 24
        %2626 = vbcast.lane.b32.xlu0 %v2612, %s2625
        %v2627 = vpop.permute.xlu0 %2626
        %s2629 = sor.u32 256, 32
        %2630 = vbcast.lane.b32.xlu0 %v2612, %s2629
        %v2631 = vpop.permute.xlu0 %2630
        %s2633 = sor.u32 256, 40
        %2634 = vbcast.lane.b32.xlu0 %v2612, %s2633
        %v2635 = vpop.permute.xlu0 %2634
        %s2637 = sor.u32 256, 48
        %2638 = vbcast.lane.b32.xlu0 %v2612, %s2637
        %v2639 = vpop.permute.xlu0 %2638
        %s2641 = sor.u32 256, 56
        %2642 = vbcast.lane.b32.xlu0 %v2612, %s2641
        %v2643 = vpop.permute.xlu0 %2642
        %s2645 = sor.u32 256, 64
        %2646 = vbcast.lane.b32.xlu0 %v2612, %s2645
        %v2647 = vpop.permute.xlu0 %2646
        %s2649 = sor.u32 256, 72
        %2650 = vbcast.lane.b32.xlu0 %v2612, %s2649
        %v2651 = vpop.permute.xlu0 %2650
        %s2653 = sor.u32 256, 80
        %2654 = vbcast.lane.b32.xlu0 %v2612, %s2653
        %v2655 = vpop.permute.xlu0 %2654
        %s2657 = sor.u32 256, 88
        %2658 = vbcast.lane.b32.xlu0 %v2612, %s2657
        %v2659 = vpop.permute.xlu0 %2658
        %s2661 = sor.u32 256, 96
        %2662 = vbcast.lane.b32.xlu0 %v2612, %s2661
        %v2663 = vpop.permute.xlu0 %2662
        %s2665 = sor.u32 256, 104
        %2666 = vbcast.lane.b32.xlu0 %v2612, %s2665
        %v2667 = vpop.permute.xlu0 %2666
        %s2669 = sor.u32 256, 112
        %2670 = vbcast.lane.b32.xlu0 %v2612, %s2669
        %v2671 = vpop.permute.xlu0 %2670
        %s2673 = sor.u32 256, 120
        %2674 = vbcast.lane.b32.xlu0 %v2612, %s2673
        %v2675 = vpop.permute.xlu0 %2674
        %v2677 = vcombine.high %v862, %v862
        %v2679 = vunpack.c.l.s4 1966171168
        %v2680 = vunpack.c.0.s8 %v2679
        %v2681 = vlaneseq
        %v2682 = vshrl.u32 %v2681, 7
        %v2683 = vsub.s32 %v2680, %v2682
        %v2684 = vrot.slane %v862, %v2683
        %v2686 = vunpack.c.l.s4 1966171168
        %v2687 = vunpack.c.0.s8 %v2686
        %v2688 = vlaneseq
        %v2689 = vshrl.u32 %v2688, 7
        %v2690 = vsub.s32 %v2687, %v2689
        %v2691 = vrot.slane %v2677, %v2690
        %v2692 = vcombine.high %v2684, %v2684
        %v2693 = vcombine.high %v2691, %v2691
        %v2695 = vunpack.c.l.s4 1966171168
        %v2696 = vunpack.c.0.s8 %v2695
        %v2697 = vlaneseq
        %v2698 = vshrl.u32 %v2697, 7
        %v2699 = vsub.s32 %v2696, %v2698
        %v2700 = vrot.slane %v2684, %v2699
        %v2702 = vunpack.c.l.s4 1966171168
        %v2703 = vunpack.c.0.s8 %v2702
        %v2704 = vlaneseq
        %v2705 = vshrl.u32 %v2704, 7
        %v2706 = vsub.s32 %v2703, %v2705
        %v2707 = vrot.slane %v2691, %v2706
        %v2709 = vunpack.c.l.s4 1966171168
        %v2710 = vunpack.c.0.s8 %v2709
        %v2711 = vlaneseq
        %v2712 = vshrl.u32 %v2711, 7
        %v2713 = vsub.s32 %v2710, %v2712
        %v2714 = vrot.slane %v2692, %v2713
        %v2716 = vunpack.c.l.s4 1966171168
        %v2717 = vunpack.c.0.s8 %v2716
        %v2718 = vlaneseq
        %v2719 = vshrl.u32 %v2718, 7
        %v2720 = vsub.s32 %v2717, %v2719
        %v2721 = vrot.slane %v2693, %v2720
        %v2722 = vcombine.high %v2700, %v2700
        %v2723 = vcombine.high %v2707, %v2707
        %v2724 = vcombine.high %v2714, %v2714
        %v2725 = vcombine.high %v2721, %v2721
        %v2726 = vlaneseq
        %v2727 = vshrl.u32 %v2726, 7
        %v2728 = vsub.s32 0, %v2727
        %v2729 = vrot.slane %v2700, %v2728
        %v2730 = vlaneseq
        %v2731 = vshrl.u32 %v2730, 7
        %v2732 = vsub.s32 0, %v2731
        %v2733 = vrot.slane %v2714, %v2732
        %v2734 = vlaneseq
        %v2735 = vshrl.u32 %v2734, 7
        %v2736 = vsub.s32 0, %v2735
        %v2737 = vrot.slane %v2722, %v2736
        %v2738 = vlaneseq
        %v2739 = vshrl.u32 %v2738, 7
        %v2740 = vsub.s32 0, %v2739
        %v2741 = vrot.slane %v2724, %v2740
        %v2742 = vlaneseq
        %v2743 = vshrl.u32 %v2742, 7
        %v2744 = vsub.s32 0, %v2743
        %v2745 = vrot.slane %v2707, %v2744
        %v2746 = vlaneseq
        %v2747 = vshrl.u32 %v2746, 7
        %v2748 = vsub.s32 0, %v2747
        %v2749 = vrot.slane %v2721, %v2748
        %v2750 = vlaneseq
        %v2751 = vshrl.u32 %v2750, 7
        %v2752 = vsub.s32 0, %v2751
        %v2753 = vrot.slane %v2723, %v2752
        %v2754 = vlaneseq
        %v2755 = vshrl.u32 %v2754, 7
        %v2756 = vsub.s32 0, %v2755
        %v2757 = vrot.slane %v2725, %v2756
        %v2766 = vmul.f32 %v2146, %v2729
        %v2767 = vmul.f32 %v2150, %v2729
        %v2768 = vmul.f32 %v2154, %v2729
        %v2769 = vmul.f32 %v2158, %v2729
        %v2770 = vmul.f32 %v2162, %v2729
        %v2771 = vmul.f32 %v2166, %v2729
        %v2772 = vmul.f32 %v2170, %v2729
        %v2773 = vmul.f32 %v2174, %v2729
        %v2774 = vmul.f32 %v2178, %v2729
        %v2775 = vmul.f32 %v2182, %v2729
        %v2776 = vmul.f32 %v2186, %v2729
        %v2777 = vmul.f32 %v2190, %v2729
        %v2778 = vmul.f32 %v2194, %v2729
        %v2779 = vmul.f32 %v2198, %v2729
        %v2780 = vmul.f32 %v2202, %v2729
        %v2781 = vmul.f32 %v2206, %v2729
        %v2782 = vmul.f32 %v2213, %v2733
        %v2783 = vmul.f32 %v2217, %v2733
        %v2784 = vmul.f32 %v2221, %v2733
        %v2785 = vmul.f32 %v2225, %v2733
        %v2786 = vmul.f32 %v2229, %v2733
        %v2787 = vmul.f32 %v2233, %v2733
        %v2788 = vmul.f32 %v2237, %v2733
        %v2789 = vmul.f32 %v2241, %v2733
        %v2790 = vmul.f32 %v2245, %v2733
        %v2791 = vmul.f32 %v2249, %v2733
        %v2792 = vmul.f32 %v2253, %v2733
        %v2793 = vmul.f32 %v2257, %v2733
        %v2794 = vmul.f32 %v2261, %v2733
        %v2795 = vmul.f32 %v2265, %v2733
        %v2796 = vmul.f32 %v2269, %v2733
        %v2797 = vmul.f32 %v2273, %v2733
        %v2798 = vmul.f32 %v2280, %v2737
        %v2799 = vmul.f32 %v2284, %v2737
        %v2800 = vmul.f32 %v2288, %v2737
        %v2801 = vmul.f32 %v2292, %v2737
        %v2802 = vmul.f32 %v2296, %v2737
        %v2803 = vmul.f32 %v2300, %v2737
        %v2804 = vmul.f32 %v2304, %v2737
        %v2805 = vmul.f32 %v2308, %v2737
        %v2806 = vmul.f32 %v2312, %v2737
        %v2807 = vmul.f32 %v2316, %v2737
        %v2808 = vmul.f32 %v2320, %v2737
        %v2809 = vmul.f32 %v2324, %v2737
        %v2810 = vmul.f32 %v2328, %v2737
        %v2811 = vmul.f32 %v2332, %v2737
        %v2812 = vmul.f32 %v2336, %v2737
        %v2813 = vmul.f32 %v2340, %v2737
        %v2814 = vmul.f32 %v2347, %v2741
        %v2815 = vmul.f32 %v2351, %v2741
        %v2816 = vmul.f32 %v2355, %v2741
        %v2817 = vmul.f32 %v2359, %v2741
        %v2818 = vmul.f32 %v2363, %v2741
        %v2819 = vmul.f32 %v2367, %v2741
        %v2820 = vmul.f32 %v2371, %v2741
        %v2821 = vmul.f32 %v2375, %v2741
        %v2822 = vmul.f32 %v2379, %v2741
        %v2823 = vmul.f32 %v2383, %v2741
        %v2824 = vmul.f32 %v2387, %v2741
        %v2825 = vmul.f32 %v2391, %v2741
        %v2826 = vmul.f32 %v2395, %v2741
        %v2827 = vmul.f32 %v2399, %v2741
        %v2828 = vmul.f32 %v2403, %v2741
        %v2829 = vmul.f32 %v2407, %v2741
        %v2830 = vmul.f32 %v2414, %v2745
        %v2831 = vmul.f32 %v2418, %v2745
        %v2832 = vmul.f32 %v2422, %v2745
        %v2833 = vmul.f32 %v2426, %v2745
        %v2834 = vmul.f32 %v2430, %v2745
        %v2835 = vmul.f32 %v2434, %v2745
        %v2836 = vmul.f32 %v2438, %v2745
        %v2837 = vmul.f32 %v2442, %v2745
        %v2838 = vmul.f32 %v2446, %v2745
        %v2839 = vmul.f32 %v2450, %v2745
        %v2840 = vmul.f32 %v2454, %v2745
        %v2841 = vmul.f32 %v2458, %v2745
        %v2842 = vmul.f32 %v2462, %v2745
        %v2843 = vmul.f32 %v2466, %v2745
        %v2844 = vmul.f32 %v2470, %v2745
        %v2845 = vmul.f32 %v2474, %v2745
        %v2846 = vmul.f32 %v2481, %v2749
        %v2847 = vmul.f32 %v2485, %v2749
        %v2848 = vmul.f32 %v2489, %v2749
        %v2849 = vmul.f32 %v2493, %v2749
        %v2850 = vmul.f32 %v2497, %v2749
        %v2851 = vmul.f32 %v2501, %v2749
        %v2852 = vmul.f32 %v2505, %v2749
        %v2853 = vmul.f32 %v2509, %v2749
        %v2854 = vmul.f32 %v2513, %v2749
        %v2855 = vmul.f32 %v2517, %v2749
        %v2856 = vmul.f32 %v2521, %v2749
        %v2857 = vmul.f32 %v2525, %v2749
        %v2858 = vmul.f32 %v2529, %v2749
        %v2859 = vmul.f32 %v2533, %v2749
        %v2860 = vmul.f32 %v2537, %v2749
        %v2861 = vmul.f32 %v2541, %v2749
        %v2862 = vmul.f32 %v2548, %v2753
        %v2863 = vmul.f32 %v2552, %v2753
        %v2864 = vmul.f32 %v2556, %v2753
        %v2865 = vmul.f32 %v2560, %v2753
        %v2866 = vmul.f32 %v2564, %v2753
        %v2867 = vmul.f32 %v2568, %v2753
        %v2868 = vmul.f32 %v2572, %v2753
        %v2869 = vmul.f32 %v2576, %v2753
        %v2870 = vmul.f32 %v2580, %v2753
        %v2871 = vmul.f32 %v2584, %v2753
        %v2872 = vmul.f32 %v2588, %v2753
        %v2873 = vmul.f32 %v2592, %v2753
        %v2874 = vmul.f32 %v2596, %v2753
        %v2875 = vmul.f32 %v2600, %v2753
        %v2876 = vmul.f32 %v2604, %v2753
        %v2877 = vmul.f32 %v2608, %v2753
        %v2878 = vmul.f32 %v2615, %v2757
        %v2879 = vmul.f32 %v2619, %v2757
        %v2880 = vmul.f32 %v2623, %v2757
        %v2881 = vmul.f32 %v2627, %v2757
        %v2882 = vmul.f32 %v2631, %v2757
        %v2883 = vmul.f32 %v2635, %v2757
        %v2884 = vmul.f32 %v2639, %v2757
        %v2885 = vmul.f32 %v2643, %v2757
        %v2886 = vmul.f32 %v2647, %v2757
        %v2887 = vmul.f32 %v2651, %v2757
        %v2888 = vmul.f32 %v2655, %v2757
        %v2889 = vmul.f32 %v2659, %v2757
        %v2890 = vmul.f32 %v2663, %v2757
        %v2891 = vmul.f32 %v2667, %v2757
        %v2892 = vmul.f32 %v2671, %v2757
        %v2893 = vmul.f32 %v2675, %v2757
        %v2894 = vadd.f32 %v2012, %v2766
        %v2895 = vadd.f32 %v2013, %v2767
        %v2896 = vadd.f32 %v2014, %v2768
        %v2897 = vadd.f32 %v2015, %v2769
        %v2898 = vadd.f32 %v2016, %v2770
        %v2899 = vadd.f32 %v2017, %v2771
        %v2900 = vadd.f32 %v2018, %v2772
        %v2901 = vadd.f32 %v2019, %v2773
        %v2902 = vadd.f32 %v2020, %v2774
        %v2903 = vadd.f32 %v2021, %v2775
        %v2904 = vadd.f32 %v2022, %v2776
        %v2905 = vadd.f32 %v2023, %v2777
        %v2906 = vadd.f32 %v2024, %v2778
        %v2907 = vadd.f32 %v2025, %v2779
        %v2908 = vadd.f32 %v2026, %v2780
        %v2909 = vadd.f32 %v2027, %v2781
        %v2910 = vadd.f32 %v2028, %v2782
        %v2911 = vadd.f32 %v2029, %v2783
        %v2912 = vadd.f32 %v2030, %v2784
        %v2913 = vadd.f32 %v2031, %v2785
        %v2914 = vadd.f32 %v2032, %v2786
        %v2915 = vadd.f32 %v2033, %v2787
        %v2916 = vadd.f32 %v2034, %v2788
        %v2917 = vadd.f32 %v2035, %v2789
        %v2918 = vadd.f32 %v2036, %v2790
        %v2919 = vadd.f32 %v2037, %v2791
        %v2920 = vadd.f32 %v2038, %v2792
        %v2921 = vadd.f32 %v2039, %v2793
        %v2922 = vadd.f32 %v2040, %v2794
        %v2923 = vadd.f32 %v2041, %v2795
        %v2924 = vadd.f32 %v2042, %v2796
        %v2925 = vadd.f32 %v2043, %v2797
        %v2926 = vadd.f32 %v2044, %v2798
        %v2927 = vadd.f32 %v2045, %v2799
        %v2928 = vadd.f32 %v2046, %v2800
        %v2929 = vadd.f32 %v2047, %v2801
        %v2930 = vadd.f32 %v2048, %v2802
        %v2931 = vadd.f32 %v2049, %v2803
        %v2932 = vadd.f32 %v2050, %v2804
        %v2933 = vadd.f32 %v2051, %v2805
        %v2934 = vadd.f32 %v2052, %v2806
        %v2935 = vadd.f32 %v2053, %v2807
        %v2936 = vadd.f32 %v2054, %v2808
        %v2937 = vadd.f32 %v2055, %v2809
        %v2938 = vadd.f32 %v2056, %v2810
        %v2939 = vadd.f32 %v2057, %v2811
        %v2940 = vadd.f32 %v2058, %v2812
        %v2941 = vadd.f32 %v2059, %v2813
        %v2942 = vadd.f32 %v2060, %v2814
        %v2943 = vadd.f32 %v2061, %v2815
        %v2944 = vadd.f32 %v2062, %v2816
        %v2945 = vadd.f32 %v2063, %v2817
        %v2946 = vadd.f32 %v2064, %v2818
        %v2947 = vadd.f32 %v2065, %v2819
        %v2948 = vadd.f32 %v2066, %v2820
        %v2949 = vadd.f32 %v2067, %v2821
        %v2950 = vadd.f32 %v2068, %v2822
        %v2951 = vadd.f32 %v2069, %v2823
        %v2952 = vadd.f32 %v2070, %v2824
        %v2953 = vadd.f32 %v2071, %v2825
        %v2954 = vadd.f32 %v2072, %v2826
        %v2955 = vadd.f32 %v2073, %v2827
        %v2956 = vadd.f32 %v2074, %v2828
        %v2957 = vadd.f32 %v2075, %v2829
        %v2958 = vadd.f32 %v2076, %v2830
        %v2959 = vadd.f32 %v2077, %v2831
        %v2960 = vadd.f32 %v2078, %v2832
        %v2961 = vadd.f32 %v2079, %v2833
        %v2962 = vadd.f32 %v2080, %v2834
        %v2963 = vadd.f32 %v2081, %v2835
        %v2964 = vadd.f32 %v2082, %v2836
        %v2965 = vadd.f32 %v2083, %v2837
        %v2966 = vadd.f32 %v2084, %v2838
        %v2967 = vadd.f32 %v2085, %v2839
        %v2968 = vadd.f32 %v2086, %v2840
        %v2969 = vadd.f32 %v2087, %v2841
        %v2970 = vadd.f32 %v2088, %v2842
        %v2971 = vadd.f32 %v2089, %v2843
        %v2972 = vadd.f32 %v2090, %v2844
        %v2973 = vadd.f32 %v2091, %v2845
        %v2974 = vadd.f32 %v2092, %v2846
        %v2975 = vadd.f32 %v2093, %v2847
        %v2976 = vadd.f32 %v2094, %v2848
        %v2977 = vadd.f32 %v2095, %v2849
        %v2978 = vadd.f32 %v2096, %v2850
        %v2979 = vadd.f32 %v2097, %v2851
        %v2980 = vadd.f32 %v2098, %v2852
        %v2981 = vadd.f32 %v2099, %v2853
        %v2982 = vadd.f32 %v2100, %v2854
        %v2983 = vadd.f32 %v2101, %v2855
        %v2984 = vadd.f32 %v2102, %v2856
        %v2985 = vadd.f32 %v2103, %v2857
        %v2986 = vadd.f32 %v2104, %v2858
        %v2987 = vadd.f32 %v2105, %v2859
        %v2988 = vadd.f32 %v2106, %v2860
        %v2989 = vadd.f32 %v2107, %v2861
        %v2990 = vadd.f32 %v2108, %v2862
        %v2991 = vadd.f32 %v2109, %v2863
        %v2992 = vadd.f32 %v2110, %v2864
        %v2993 = vadd.f32 %v2111, %v2865
        %v2994 = vadd.f32 %v2112, %v2866
        %v2995 = vadd.f32 %v2113, %v2867
        %v2996 = vadd.f32 %v2114, %v2868
        %v2997 = vadd.f32 %v2115, %v2869
        %v2998 = vadd.f32 %v2116, %v2870
        %v2999 = vadd.f32 %v2117, %v2871
        %v3000 = vadd.f32 %v2118, %v2872
        %v3001 = vadd.f32 %v2119, %v2873
        %v3002 = vadd.f32 %v2120, %v2874
        %v3003 = vadd.f32 %v2121, %v2875
        %v3004 = vadd.f32 %v2122, %v2876
        %v3005 = vadd.f32 %v2123, %v2877
        %v3006 = vadd.f32 %v2124, %v2878
        %v3007 = vadd.f32 %v2125, %v2879
        %v3008 = vadd.f32 %v2126, %v2880
        %v3009 = vadd.f32 %v2127, %v2881
        %v3010 = vadd.f32 %v2128, %v2882
        %v3011 = vadd.f32 %v2129, %v2883
        %v3012 = vadd.f32 %v2130, %v2884
        %v3013 = vadd.f32 %v2131, %v2885
        %v3014 = vadd.f32 %v2132, %v2886
        %v3015 = vadd.f32 %v2133, %v2887
        %v3016 = vadd.f32 %v2134, %v2888
        %v3017 = vadd.f32 %v2135, %v2889
        %v3018 = vadd.f32 %v2136, %v2890
        %v3019 = vadd.f32 %v2137, %v2891
        %v3020 = vadd.f32 %v2138, %v2892
        %v3021 = vadd.f32 %v2139, %v2893
        %s3022 = scalar_lea.vmem %s476, %s872 [#allocation13]
        %3023 = vst [vmem:[%s3022] sm:$0xff] %v2894
        %3024 = vst [vmem:[%s3022 + $0x8] sm:$0xff] %v2895
        %3025 = vst [vmem:[%s3022 + $0x10] sm:$0xff] %v2896
        %3026 = vst [vmem:[%s3022 + $0x18] sm:$0xff] %v2897
        %3027 = vst [vmem:[%s3022 + $0x20] sm:$0xff] %v2898
        %3028 = vst [vmem:[%s3022 + $0x28] sm:$0xff] %v2899
        %3029 = vst [vmem:[%s3022 + $0x30] sm:$0xff] %v2900
        %3030 = vst [vmem:[%s3022 + $0x38] sm:$0xff] %v2901
        %3031 = vst [vmem:[%s3022 + $0x40] sm:$0xff] %v2902
        %3032 = vst [vmem:[%s3022 + $0x48] sm:$0xff] %v2903
        %3033 = vst [vmem:[%s3022 + $0x50] sm:$0xff] %v2904
        %3034 = vst [vmem:[%s3022 + $0x58] sm:$0xff] %v2905
        %3035 = vst [vmem:[%s3022 + $0x60] sm:$0xff] %v2906
        %3036 = vst [vmem:[%s3022 + $0x68] sm:$0xff] %v2907
        %3037 = vst [vmem:[%s3022 + $0x70] sm:$0xff] %v2908
        %3038 = vst [vmem:[%s3022 + $0x78] sm:$0xff] %v2909
        %3039 = vst [vmem:[%s3022 + $0x80] sm:$0xff] %v2910
        %3040 = vst [vmem:[%s3022 + $0x88] sm:$0xff] %v2911
        %3041 = vst [vmem:[%s3022 + $0x90] sm:$0xff] %v2912
        %3042 = vst [vmem:[%s3022 + $0x98] sm:$0xff] %v2913
        %3043 = vst [vmem:[%s3022 + $0xa0] sm:$0xff] %v2914
        %3044 = vst [vmem:[%s3022 + $0xa8] sm:$0xff] %v2915
        %3045 = vst [vmem:[%s3022 + $0xb0] sm:$0xff] %v2916
        %3046 = vst [vmem:[%s3022 + $0xb8] sm:$0xff] %v2917
        %3047 = vst [vmem:[%s3022 + $0xc0] sm:$0xff] %v2918
        %3048 = vst [vmem:[%s3022 + $0xc8] sm:$0xff] %v2919
        %3049 = vst [vmem:[%s3022 + $0xd0] sm:$0xff] %v2920
        %3050 = vst [vmem:[%s3022 + $0xd8] sm:$0xff] %v2921
        %3051 = vst [vmem:[%s3022 + $0xe0] sm:$0xff] %v2922
        %3052 = vst [vmem:[%s3022 + $0xe8] sm:$0xff] %v2923
        %3053 = vst [vmem:[%s3022 + $0xf0] sm:$0xff] %v2924
        %3054 = vst [vmem:[%s3022 + $0xf8] sm:$0xff] %v2925
        %3055 = vst [vmem:[%s3022 + $0x100] sm:$0xff] %v2926
        %3056 = vst [vmem:[%s3022 + $0x108] sm:$0xff] %v2927
        %3057 = vst [vmem:[%s3022 + $0x110] sm:$0xff] %v2928
        %3058 = vst [vmem:[%s3022 + $0x118] sm:$0xff] %v2929
        %3059 = vst [vmem:[%s3022 + $0x120] sm:$0xff] %v2930
        %3060 = vst [vmem:[%s3022 + $0x128] sm:$0xff] %v2931
        %3061 = vst [vmem:[%s3022 + $0x130] sm:$0xff] %v2932
        %3062 = vst [vmem:[%s3022 + $0x138] sm:$0xff] %v2933
        %3063 = vst [vmem:[%s3022 + $0x140] sm:$0xff] %v2934
        %3064 = vst [vmem:[%s3022 + $0x148] sm:$0xff] %v2935
        %3065 = vst [vmem:[%s3022 + $0x150] sm:$0xff] %v2936
        %3066 = vst [vmem:[%s3022 + $0x158] sm:$0xff] %v2937
        %3067 = vst [vmem:[%s3022 + $0x160] sm:$0xff] %v2938
        %3068 = vst [vmem:[%s3022 + $0x168] sm:$0xff] %v2939
        %3069 = vst [vmem:[%s3022 + $0x170] sm:$0xff] %v2940
        %3070 = vst [vmem:[%s3022 + $0x178] sm:$0xff] %v2941
        %3071 = vst [vmem:[%s3022 + $0x180] sm:$0xff] %v2942
        %3072 = vst [vmem:[%s3022 + $0x188] sm:$0xff] %v2943
        %3073 = vst [vmem:[%s3022 + $0x190] sm:$0xff] %v2944
        %3074 = vst [vmem:[%s3022 + $0x198] sm:$0xff] %v2945
        %3075 = vst [vmem:[%s3022 + $0x1a0] sm:$0xff] %v2946
        %3076 = vst [vmem:[%s3022 + $0x1a8] sm:$0xff] %v2947
        %3077 = vst [vmem:[%s3022 + $0x1b0] sm:$0xff] %v2948
        %3078 = vst [vmem:[%s3022 + $0x1b8] sm:$0xff] %v2949
        %3079 = vst [vmem:[%s3022 + $0x1c0] sm:$0xff] %v2950
        %3080 = vst [vmem:[%s3022 + $0x1c8] sm:$0xff] %v2951
        %3081 = vst [vmem:[%s3022 + $0x1d0] sm:$0xff] %v2952
        %3082 = vst [vmem:[%s3022 + $0x1d8] sm:$0xff] %v2953
        %3083 = vst [vmem:[%s3022 + $0x1e0] sm:$0xff] %v2954
        %3084 = vst [vmem:[%s3022 + $0x1e8] sm:$0xff] %v2955
        %3085 = vst [vmem:[%s3022 + $0x1f0] sm:$0xff] %v2956
        %3086 = vst [vmem:[%s3022 + $0x1f8] sm:$0xff] %v2957
        %3087 = vst [vmem:[%s3022 + $0x200] sm:$0xff] %v2958
        %3088 = vst [vmem:[%s3022 + $0x208] sm:$0xff] %v2959
        %3089 = vst [vmem:[%s3022 + $0x210] sm:$0xff] %v2960
        %3090 = vst [vmem:[%s3022 + $0x218] sm:$0xff] %v2961
        %3091 = vst [vmem:[%s3022 + $0x220] sm:$0xff] %v2962
        %3092 = vst [vmem:[%s3022 + $0x228] sm:$0xff] %v2963
        %3093 = vst [vmem:[%s3022 + $0x230] sm:$0xff] %v2964
        %3094 = vst [vmem:[%s3022 + $0x238] sm:$0xff] %v2965
        %3095 = vst [vmem:[%s3022 + $0x240] sm:$0xff] %v2966
        %3096 = vst [vmem:[%s3022 + $0x248] sm:$0xff] %v2967
        %3097 = vst [vmem:[%s3022 + $0x250] sm:$0xff] %v2968
        %3098 = vst [vmem:[%s3022 + $0x258] sm:$0xff] %v2969
        %3099 = vst [vmem:[%s3022 + $0x260] sm:$0xff] %v2970
        %3100 = vst [vmem:[%s3022 + $0x268] sm:$0xff] %v2971
        %3101 = vst [vmem:[%s3022 + $0x270] sm:$0xff] %v2972
        %3102 = vst [vmem:[%s3022 + $0x278] sm:$0xff] %v2973
        %3103 = vst [vmem:[%s3022 + $0x280] sm:$0xff] %v2974
        %3104 = vst [vmem:[%s3022 + $0x288] sm:$0xff] %v2975
        %3105 = vst [vmem:[%s3022 + $0x290] sm:$0xff] %v2976
        %3106 = vst [vmem:[%s3022 + $0x298] sm:$0xff] %v2977
        %3107 = vst [vmem:[%s3022 + $0x2a0] sm:$0xff] %v2978
        %3108 = vst [vmem:[%s3022 + $0x2a8] sm:$0xff] %v2979
        %3109 = vst [vmem:[%s3022 + $0x2b0] sm:$0xff] %v2980
        %3110 = vst [vmem:[%s3022 + $0x2b8] sm:$0xff] %v2981
        %3111 = vst [vmem:[%s3022 + $0x2c0] sm:$0xff] %v2982
        %3112 = vst [vmem:[%s3022 + $0x2c8] sm:$0xff] %v2983
        %3113 = vst [vmem:[%s3022 + $0x2d0] sm:$0xff] %v2984
        %3114 = vst [vmem:[%s3022 + $0x2d8] sm:$0xff] %v2985
        %3115 = vst [vmem:[%s3022 + $0x2e0] sm:$0xff] %v2986
        %3116 = vst [vmem:[%s3022 + $0x2e8] sm:$0xff] %v2987
        %3117 = vst [vmem:[%s3022 + $0x2f0] sm:$0xff] %v2988
        %3118 = vst [vmem:[%s3022 + $0x2f8] sm:$0xff] %v2989
        %3119 = vst [vmem:[%s3022 + $0x300] sm:$0xff] %v2990
        %3120 = vst [vmem:[%s3022 + $0x308] sm:$0xff] %v2991
        %3121 = vst [vmem:[%s3022 + $0x310] sm:$0xff] %v2992
        %3122 = vst [vmem:[%s3022 + $0x318] sm:$0xff] %v2993
        %3123 = vst [vmem:[%s3022 + $0x320] sm:$0xff] %v2994
        %3124 = vst [vmem:[%s3022 + $0x328] sm:$0xff] %v2995
        %3125 = vst [vmem:[%s3022 + $0x330] sm:$0xff] %v2996
        %3126 = vst [vmem:[%s3022 + $0x338] sm:$0xff] %v2997
        %3127 = vst [vmem:[%s3022 + $0x340] sm:$0xff] %v2998
        %3128 = vst [vmem:[%s3022 + $0x348] sm:$0xff] %v2999
        %3129 = vst [vmem:[%s3022 + $0x350] sm:$0xff] %v3000
        %3130 = vst [vmem:[%s3022 + $0x358] sm:$0xff] %v3001
        %3131 = vst [vmem:[%s3022 + $0x360] sm:$0xff] %v3002
        %3132 = vst [vmem:[%s3022 + $0x368] sm:$0xff] %v3003
        %3133 = vst [vmem:[%s3022 + $0x370] sm:$0xff] %v3004
        %3134 = vst [vmem:[%s3022 + $0x378] sm:$0xff] %v3005
        %3135 = vst [vmem:[%s3022 + $0x380] sm:$0xff] %v3006
        %3136 = vst [vmem:[%s3022 + $0x388] sm:$0xff] %v3007
        %3137 = vst [vmem:[%s3022 + $0x390] sm:$0xff] %v3008
        %3138 = vst [vmem:[%s3022 + $0x398] sm:$0xff] %v3009
        %3139 = vst [vmem:[%s3022 + $0x3a0] sm:$0xff] %v3010
        %3140 = vst [vmem:[%s3022 + $0x3a8] sm:$0xff] %v3011
        %3141 = vst [vmem:[%s3022 + $0x3b0] sm:$0xff] %v3012
        %3142 = vst [vmem:[%s3022 + $0x3b8] sm:$0xff] %v3013
        %3143 = vst [vmem:[%s3022 + $0x3c0] sm:$0xff] %v3014
        %3144 = vst [vmem:[%s3022 + $0x3c8] sm:$0xff] %v3015
        %3145 = vst [vmem:[%s3022 + $0x3d0] sm:$0xff] %v3016
        %3146 = vst [vmem:[%s3022 + $0x3d8] sm:$0xff] %v3017
        %3147 = vst [vmem:[%s3022 + $0x3e0] sm:$0xff] %v3018
        %3148 = vst [vmem:[%s3022 + $0x3e8] sm:$0xff] %v3019
        %3149 = vst [vmem:[%s3022 + $0x3f0] sm:$0xff] %v3020
        %3150 = vst [vmem:[%s3022 + $0x3f8] sm:$0xff] %v3021
        %v3279 = vlaneseq
        %v3280 = vand.u32 %v3279, 127
        %v3281 = vlaneseq
        %v3282 = vshrl.u32 %v3281, 7
        %v3283 = vsub.s32 %v3280, %v3282
        %v3284 = vrot.slane %v1221, %v3283
        %v3285 = vadd.s32 %v3280, 4294967288
        %v3286 = vlaneseq
        %v3287 = vshrl.u32 %v3286, 7
        %v3288 = vsub.s32 %v3285, %v3287
        %v3289 = vrot.slane %v1223, %v3288
        %vm3290 = vcmask 130112
        %v3291 = vsel %vm3290, %v3289, %v3284
        %v3292 = vadd.s32 %v3280, 4294967280
        %v3293 = vlaneseq
        %v3294 = vshrl.u32 %v3293, 7
        %v3295 = vsub.s32 %v3292, %v3294
        %v3296 = vrot.slane %v1225, %v3295
        %vm3297 = vcmask 195712
        %v3298 = vsel %vm3297, %v3296, %v3291
        %v3299 = vadd.s32 %v3280, 4294967272
        %v3300 = vlaneseq
        %v3301 = vshrl.u32 %v3300, 7
        %v3302 = vsub.s32 %v3299, %v3301
        %v3303 = vrot.slane %v1227, %v3302
        %vm3304 = vcmask 261312
        %v3305 = vsel %vm3304, %v3303, %v3298
        %v3306 = vadd.s32 %v3280, 4294967264
        %v3307 = vlaneseq
        %v3308 = vshrl.u32 %v3307, 7
        %v3309 = vsub.s32 %v3306, %v3308
        %v3310 = vrot.slane %v1229, %v3309
        %vm3311 = vcmask 326912
        %v3312 = vsel %vm3311, %v3310, %v3305
        %v3313 = vadd.s32 %v3280, 4294967256
        %v3314 = vlaneseq
        %v3315 = vshrl.u32 %v3314, 7
        %v3316 = vsub.s32 %v3313, %v3315
        %v3317 = vrot.slane %v1231, %v3316
        %vm3318 = vcmask 392512
        %v3319 = vsel %vm3318, %v3317, %v3312
        %v3320 = vadd.s32 %v3280, 4294967248
        %v3321 = vlaneseq
        %v3322 = vshrl.u32 %v3321, 7
        %v3323 = vsub.s32 %v3320, %v3322
        %v3324 = vrot.slane %v1233, %v3323
        %vm3325 = vcmask 458112
        %v3326 = vsel %vm3325, %v3324, %v3319
        %v3327 = vadd.s32 %v3280, 4294967240
        %v3328 = vlaneseq
        %v3329 = vshrl.u32 %v3328, 7
        %v3330 = vsub.s32 %v3327, %v3329
        %v3331 = vrot.slane %v1235, %v3330
        %vm3332 = vcmask 523712
        %v3333 = vsel %vm3332, %v3331, %v3326
        %v3334 = vadd.s32 %v3280, 4294967232
        %v3335 = vlaneseq
        %v3336 = vshrl.u32 %v3335, 7
        %v3337 = vsub.s32 %v3334, %v3336
        %v3338 = vrot.slane %v1237, %v3337
        %vm3339 = vcmask 589312
        %v3340 = vsel %vm3339, %v3338, %v3333
        %v3341 = vadd.s32 %v3280, 4294967224
        %v3342 = vlaneseq
        %v3343 = vshrl.u32 %v3342, 7
        %v3344 = vsub.s32 %v3341, %v3343
        %v3345 = vrot.slane %v1239, %v3344
        %vm3346 = vcmask 654912
        %v3347 = vsel %vm3346, %v3345, %v3340
        %v3348 = vadd.s32 %v3280, 4294967216
        %v3349 = vlaneseq
        %v3350 = vshrl.u32 %v3349, 7
        %v3351 = vsub.s32 %v3348, %v3350
        %v3352 = vrot.slane %v1241, %v3351
        %vm3353 = vcmask 720512
        %v3354 = vsel %vm3353, %v3352, %v3347
        %v3355 = vadd.s32 %v3280, 4294967208
        %v3356 = vlaneseq
        %v3357 = vshrl.u32 %v3356, 7
        %v3358 = vsub.s32 %v3355, %v3357
        %v3359 = vrot.slane %v1243, %v3358
        %vm3360 = vcmask 786112
        %v3361 = vsel %vm3360, %v3359, %v3354
        %v3362 = vadd.s32 %v3280, 4294967200
        %v3363 = vlaneseq
        %v3364 = vshrl.u32 %v3363, 7
        %v3365 = vsub.s32 %v3362, %v3364
        %v3366 = vrot.slane %v1245, %v3365
        %vm3367 = vcmask 851712
        %v3368 = vsel %vm3367, %v3366, %v3361
        %v3369 = vadd.s32 %v3280, 4294967192
        %v3370 = vlaneseq
        %v3371 = vshrl.u32 %v3370, 7
        %v3372 = vsub.s32 %v3369, %v3371
        %v3373 = vrot.slane %v1247, %v3372
        %vm3374 = vcmask 917312
        %v3375 = vsel %vm3374, %v3373, %v3368
        %v3376 = vadd.s32 %v3280, 4294967184
        %v3377 = vlaneseq
        %v3378 = vshrl.u32 %v3377, 7
        %v3379 = vsub.s32 %v3376, %v3378
        %v3380 = vrot.slane %v1249, %v3379
        %vm3381 = vcmask 982912
        %v3382 = vsel %vm3381, %v3380, %v3375
        %v3383 = vadd.s32 %v3280, 4294967176
        %v3384 = vlaneseq
        %v3385 = vshrl.u32 %v3384, 7
        %v3386 = vsub.s32 %v3383, %v3385
        %v3387 = vrot.slane %v1251, %v3386
        %vm3388 = vcmask 1048512
        %v3389 = vsel %vm3388, %v3387, %v3382
        %v3390 = vlaneseq
        %v3391 = vshrl.u32 %v3390, 7
        %v3392 = vsub.s32 %v3280, %v3391
        %v3393 = vrot.slane %v1253, %v3392
        %v3394 = vlaneseq
        %v3395 = vshrl.u32 %v3394, 7
        %v3396 = vsub.s32 %v3285, %v3395
        %v3397 = vrot.slane %v1255, %v3396
        %v3398 = vsel %vm3290, %v3397, %v3393
        %v3399 = vlaneseq
        %v3400 = vshrl.u32 %v3399, 7
        %v3401 = vsub.s32 %v3292, %v3400
        %v3402 = vrot.slane %v1257, %v3401
        %v3403 = vsel %vm3297, %v3402, %v3398
        %v3404 = vlaneseq
        %v3405 = vshrl.u32 %v3404, 7
        %v3406 = vsub.s32 %v3299, %v3405
        %v3407 = vrot.slane %v1259, %v3406
        %v3408 = vsel %vm3304, %v3407, %v3403
        %v3409 = vlaneseq
        %v3410 = vshrl.u32 %v3409, 7
        %v3411 = vsub.s32 %v3306, %v3410
        %v3412 = vrot.slane %v1261, %v3411
        %v3413 = vsel %vm3311, %v3412, %v3408
        %v3414 = vlaneseq
        %v3415 = vshrl.u32 %v3414, 7
        %v3416 = vsub.s32 %v3313, %v3415
        %v3417 = vrot.slane %v1263, %v3416
        %v3418 = vsel %vm3318, %v3417, %v3413
        %v3419 = vlaneseq
        %v3420 = vshrl.u32 %v3419, 7
        %v3421 = vsub.s32 %v3320, %v3420
        %v3422 = vrot.slane %v1265, %v3421
        %v3423 = vsel %vm3325, %v3422, %v3418
        %v3424 = vlaneseq
        %v3425 = vshrl.u32 %v3424, 7
        %v3426 = vsub.s32 %v3327, %v3425
        %v3427 = vrot.slane %v1267, %v3426
        %v3428 = vsel %vm3332, %v3427, %v3423
        %v3429 = vlaneseq
        %v3430 = vshrl.u32 %v3429, 7
        %v3431 = vsub.s32 %v3334, %v3430
        %v3432 = vrot.slane %v1269, %v3431
        %v3433 = vsel %vm3339, %v3432, %v3428
        %v3434 = vlaneseq
        %v3435 = vshrl.u32 %v3434, 7
        %v3436 = vsub.s32 %v3341, %v3435
        %v3437 = vrot.slane %v1271, %v3436
        %v3438 = vsel %vm3346, %v3437, %v3433
        %v3439 = vlaneseq
        %v3440 = vshrl.u32 %v3439, 7
        %v3441 = vsub.s32 %v3348, %v3440
        %v3442 = vrot.slane %v1273, %v3441
        %v3443 = vsel %vm3353, %v3442, %v3438
        %v3444 = vlaneseq
        %v3445 = vshrl.u32 %v3444, 7
        %v3446 = vsub.s32 %v3355, %v3445
        %v3447 = vrot.slane %v1275, %v3446
        %v3448 = vsel %vm3360, %v3447, %v3443
        %v3449 = vlaneseq
        %v3450 = vshrl.u32 %v3449, 7
        %v3451 = vsub.s32 %v3362, %v3450
        %v3452 = vrot.slane %v1277, %v3451
        %v3453 = vsel %vm3367, %v3452, %v3448
        %v3454 = vlaneseq
        %v3455 = vshrl.u32 %v3454, 7
        %v3456 = vsub.s32 %v3369, %v3455
        %v3457 = vrot.slane %v1279, %v3456
        %v3458 = vsel %vm3374, %v3457, %v3453
        %v3459 = vlaneseq
        %v3460 = vshrl.u32 %v3459, 7
        %v3461 = vsub.s32 %v3376, %v3460
        %v3462 = vrot.slane %v1281, %v3461
        %v3463 = vsel %vm3381, %v3462, %v3458
        %v3464 = vlaneseq
        %v3465 = vshrl.u32 %v3464, 7
        %v3466 = vsub.s32 %v3383, %v3465
        %v3467 = vrot.slane %v1283, %v3466
        %v3468 = vsel %vm3388, %v3467, %v3463
        %v3469 = vlaneseq
        %v3470 = vshrl.u32 %v3469, 7
        %v3471 = vsub.s32 %v3280, %v3470
        %v3472 = vrot.slane %v1285, %v3471
        %v3473 = vlaneseq
        %v3474 = vshrl.u32 %v3473, 7
        %v3475 = vsub.s32 %v3285, %v3474
        %v3476 = vrot.slane %v1287, %v3475
        %v3477 = vsel %vm3290, %v3476, %v3472
        %v3478 = vlaneseq
        %v3479 = vshrl.u32 %v3478, 7
        %v3480 = vsub.s32 %v3292, %v3479
        %v3481 = vrot.slane %v1289, %v3480
        %v3482 = vsel %vm3297, %v3481, %v3477
        %v3483 = vlaneseq
        %v3484 = vshrl.u32 %v3483, 7
        %v3485 = vsub.s32 %v3299, %v3484
        %v3486 = vrot.slane %v1291, %v3485
        %v3487 = vsel %vm3304, %v3486, %v3482
        %v3488 = vlaneseq
        %v3489 = vshrl.u32 %v3488, 7
        %v3490 = vsub.s32 %v3306, %v3489
        %v3491 = vrot.slane %v1293, %v3490
        %v3492 = vsel %vm3311, %v3491, %v3487
        %v3493 = vlaneseq
        %v3494 = vshrl.u32 %v3493, 7
        %v3495 = vsub.s32 %v3313, %v3494
        %v3496 = vrot.slane %v1295, %v3495
        %v3497 = vsel %vm3318, %v3496, %v3492
        %v3498 = vlaneseq
        %v3499 = vshrl.u32 %v3498, 7
        %v3500 = vsub.s32 %v3320, %v3499
        %v3501 = vrot.slane %v1297, %v3500
        %v3502 = vsel %vm3325, %v3501, %v3497
        %v3503 = vlaneseq
        %v3504 = vshrl.u32 %v3503, 7
        %v3505 = vsub.s32 %v3327, %v3504
        %v3506 = vrot.slane %v1299, %v3505
        %v3507 = vsel %vm3332, %v3506, %v3502
        %v3508 = vlaneseq
        %v3509 = vshrl.u32 %v3508, 7
        %v3510 = vsub.s32 %v3334, %v3509
        %v3511 = vrot.slane %v1301, %v3510
        %v3512 = vsel %vm3339, %v3511, %v3507
        %v3513 = vlaneseq
        %v3514 = vshrl.u32 %v3513, 7
        %v3515 = vsub.s32 %v3341, %v3514
        %v3516 = vrot.slane %v1303, %v3515
        %v3517 = vsel %vm3346, %v3516, %v3512
        %v3518 = vlaneseq
        %v3519 = vshrl.u32 %v3518, 7
        %v3520 = vsub.s32 %v3348, %v3519
        %v3521 = vrot.slane %v1305, %v3520
        %v3522 = vsel %vm3353, %v3521, %v3517
        %v3523 = vlaneseq
        %v3524 = vshrl.u32 %v3523, 7
        %v3525 = vsub.s32 %v3355, %v3524
        %v3526 = vrot.slane %v1307, %v3525
        %v3527 = vsel %vm3360, %v3526, %v3522
        %v3528 = vlaneseq
        %v3529 = vshrl.u32 %v3528, 7
        %v3530 = vsub.s32 %v3362, %v3529
        %v3531 = vrot.slane %v1309, %v3530
        %v3532 = vsel %vm3367, %v3531, %v3527
        %v3533 = vlaneseq
        %v3534 = vshrl.u32 %v3533, 7
        %v3535 = vsub.s32 %v3369, %v3534
        %v3536 = vrot.slane %v1311, %v3535
        %v3537 = vsel %vm3374, %v3536, %v3532
        %v3538 = vlaneseq
        %v3539 = vshrl.u32 %v3538, 7
        %v3540 = vsub.s32 %v3376, %v3539
        %v3541 = vrot.slane %v1313, %v3540
        %v3542 = vsel %vm3381, %v3541, %v3537
        %v3543 = vlaneseq
        %v3544 = vshrl.u32 %v3543, 7
        %v3545 = vsub.s32 %v3383, %v3544
        %v3546 = vrot.slane %v1315, %v3545
        %v3547 = vsel %vm3388, %v3546, %v3542
        %v3548 = vlaneseq
        %v3549 = vshrl.u32 %v3548, 7
        %v3550 = vsub.s32 %v3280, %v3549
        %v3551 = vrot.slane %v1317, %v3550
        %v3552 = vlaneseq
        %v3553 = vshrl.u32 %v3552, 7
        %v3554 = vsub.s32 %v3285, %v3553
        %v3555 = vrot.slane %v1319, %v3554
        %v3556 = vsel %vm3290, %v3555, %v3551
        %v3557 = vlaneseq
        %v3558 = vshrl.u32 %v3557, 7
        %v3559 = vsub.s32 %v3292, %v3558
        %v3560 = vrot.slane %v1321, %v3559
        %v3561 = vsel %vm3297, %v3560, %v3556
        %v3562 = vlaneseq
        %v3563 = vshrl.u32 %v3562, 7
        %v3564 = vsub.s32 %v3299, %v3563
        %v3565 = vrot.slane %v1323, %v3564
        %v3566 = vsel %vm3304, %v3565, %v3561
        %v3567 = vlaneseq
        %v3568 = vshrl.u32 %v3567, 7
        %v3569 = vsub.s32 %v3306, %v3568
        %v3570 = vrot.slane %v1325, %v3569
        %v3571 = vsel %vm3311, %v3570, %v3566
        %v3572 = vlaneseq
        %v3573 = vshrl.u32 %v3572, 7
        %v3574 = vsub.s32 %v3313, %v3573
        %v3575 = vrot.slane %v1327, %v3574
        %v3576 = vsel %vm3318, %v3575, %v3571
        %v3577 = vlaneseq
        %v3578 = vshrl.u32 %v3577, 7
        %v3579 = vsub.s32 %v3320, %v3578
        %v3580 = vrot.slane %v1329, %v3579
        %v3581 = vsel %vm3325, %v3580, %v3576
        %v3582 = vlaneseq
        %v3583 = vshrl.u32 %v3582, 7
        %v3584 = vsub.s32 %v3327, %v3583
        %v3585 = vrot.slane %v1331, %v3584
        %v3586 = vsel %vm3332, %v3585, %v3581
        %v3587 = vlaneseq
        %v3588 = vshrl.u32 %v3587, 7
        %v3589 = vsub.s32 %v3334, %v3588
        %v3590 = vrot.slane %v1333, %v3589
        %v3591 = vsel %vm3339, %v3590, %v3586
        %v3592 = vlaneseq
        %v3593 = vshrl.u32 %v3592, 7
        %v3594 = vsub.s32 %v3341, %v3593
        %v3595 = vrot.slane %v1335, %v3594
        %v3596 = vsel %vm3346, %v3595, %v3591
        %v3597 = vlaneseq
        %v3598 = vshrl.u32 %v3597, 7
        %v3599 = vsub.s32 %v3348, %v3598
        %v3600 = vrot.slane %v1337, %v3599
        %v3601 = vsel %vm3353, %v3600, %v3596
        %v3602 = vlaneseq
        %v3603 = vshrl.u32 %v3602, 7
        %v3604 = vsub.s32 %v3355, %v3603
        %v3605 = vrot.slane %v1339, %v3604
        %v3606 = vsel %vm3360, %v3605, %v3601
        %v3607 = vlaneseq
        %v3608 = vshrl.u32 %v3607, 7
        %v3609 = vsub.s32 %v3362, %v3608
        %v3610 = vrot.slane %v1341, %v3609
        %v3611 = vsel %vm3367, %v3610, %v3606
        %v3612 = vlaneseq
        %v3613 = vshrl.u32 %v3612, 7
        %v3614 = vsub.s32 %v3369, %v3613
        %v3615 = vrot.slane %v1343, %v3614
        %v3616 = vsel %vm3374, %v3615, %v3611
        %v3617 = vlaneseq
        %v3618 = vshrl.u32 %v3617, 7
        %v3619 = vsub.s32 %v3376, %v3618
        %v3620 = vrot.slane %v1345, %v3619
        %v3621 = vsel %vm3381, %v3620, %v3616
        %v3622 = vlaneseq
        %v3623 = vshrl.u32 %v3622, 7
        %v3624 = vsub.s32 %v3383, %v3623
        %v3625 = vrot.slane %v1347, %v3624
        %v3626 = vsel %vm3388, %v3625, %v3621
        %v3627 = vlaneseq
        %v3628 = vshrl.u32 %v3627, 7
        %v3629 = vsub.s32 %v3280, %v3628
        %v3630 = vrot.slane %v1349, %v3629
        %v3631 = vlaneseq
        %v3632 = vshrl.u32 %v3631, 7
        %v3633 = vsub.s32 %v3285, %v3632
        %v3634 = vrot.slane %v1351, %v3633
        %v3635 = vsel %vm3290, %v3634, %v3630
        %v3636 = vlaneseq
        %v3637 = vshrl.u32 %v3636, 7
        %v3638 = vsub.s32 %v3292, %v3637
        %v3639 = vrot.slane %v1353, %v3638
        %v3640 = vsel %vm3297, %v3639, %v3635
        %v3641 = vlaneseq
        %v3642 = vshrl.u32 %v3641, 7
        %v3643 = vsub.s32 %v3299, %v3642
        %v3644 = vrot.slane %v1355, %v3643
        %v3645 = vsel %vm3304, %v3644, %v3640
        %v3646 = vlaneseq
        %v3647 = vshrl.u32 %v3646, 7
        %v3648 = vsub.s32 %v3306, %v3647
        %v3649 = vrot.slane %v1357, %v3648
        %v3650 = vsel %vm3311, %v3649, %v3645
        %v3651 = vlaneseq
        %v3652 = vshrl.u32 %v3651, 7
        %v3653 = vsub.s32 %v3313, %v3652
        %v3654 = vrot.slane %v1359, %v3653
        %v3655 = vsel %vm3318, %v3654, %v3650
        %v3656 = vlaneseq
        %v3657 = vshrl.u32 %v3656, 7
        %v3658 = vsub.s32 %v3320, %v3657
        %v3659 = vrot.slane %v1361, %v3658
        %v3660 = vsel %vm3325, %v3659, %v3655
        %v3661 = vlaneseq
        %v3662 = vshrl.u32 %v3661, 7
        %v3663 = vsub.s32 %v3327, %v3662
        %v3664 = vrot.slane %v1363, %v3663
        %v3665 = vsel %vm3332, %v3664, %v3660
        %v3666 = vlaneseq
        %v3667 = vshrl.u32 %v3666, 7
        %v3668 = vsub.s32 %v3334, %v3667
        %v3669 = vrot.slane %v1365, %v3668
        %v3670 = vsel %vm3339, %v3669, %v3665
        %v3671 = vlaneseq
        %v3672 = vshrl.u32 %v3671, 7
        %v3673 = vsub.s32 %v3341, %v3672
        %v3674 = vrot.slane %v1367, %v3673
        %v3675 = vsel %vm3346, %v3674, %v3670
        %v3676 = vlaneseq
        %v3677 = vshrl.u32 %v3676, 7
        %v3678 = vsub.s32 %v3348, %v3677
        %v3679 = vrot.slane %v1369, %v3678
        %v3680 = vsel %vm3353, %v3679, %v3675
        %v3681 = vlaneseq
        %v3682 = vshrl.u32 %v3681, 7
        %v3683 = vsub.s32 %v3355, %v3682
        %v3684 = vrot.slane %v1371, %v3683
        %v3685 = vsel %vm3360, %v3684, %v3680
        %v3686 = vlaneseq
        %v3687 = vshrl.u32 %v3686, 7
        %v3688 = vsub.s32 %v3362, %v3687
        %v3689 = vrot.slane %v1373, %v3688
        %v3690 = vsel %vm3367, %v3689, %v3685
        %v3691 = vlaneseq
        %v3692 = vshrl.u32 %v3691, 7
        %v3693 = vsub.s32 %v3369, %v3692
        %v3694 = vrot.slane %v1375, %v3693
        %v3695 = vsel %vm3374, %v3694, %v3690
        %v3696 = vlaneseq
        %v3697 = vshrl.u32 %v3696, 7
        %v3698 = vsub.s32 %v3376, %v3697
        %v3699 = vrot.slane %v1377, %v3698
        %v3700 = vsel %vm3381, %v3699, %v3695
        %v3701 = vlaneseq
        %v3702 = vshrl.u32 %v3701, 7
        %v3703 = vsub.s32 %v3383, %v3702
        %v3704 = vrot.slane %v1379, %v3703
        %v3705 = vsel %vm3388, %v3704, %v3700
        %v3706 = vlaneseq
        %v3707 = vshrl.u32 %v3706, 7
        %v3708 = vsub.s32 %v3280, %v3707
        %v3709 = vrot.slane %v1381, %v3708
        %v3710 = vlaneseq
        %v3711 = vshrl.u32 %v3710, 7
        %v3712 = vsub.s32 %v3285, %v3711
        %v3713 = vrot.slane %v1383, %v3712
        %v3714 = vsel %vm3290, %v3713, %v3709
        %v3715 = vlaneseq
        %v3716 = vshrl.u32 %v3715, 7
        %v3717 = vsub.s32 %v3292, %v3716
        %v3718 = vrot.slane %v1385, %v3717
        %v3719 = vsel %vm3297, %v3718, %v3714
        %v3720 = vlaneseq
        %v3721 = vshrl.u32 %v3720, 7
        %v3722 = vsub.s32 %v3299, %v3721
        %v3723 = vrot.slane %v1387, %v3722
        %v3724 = vsel %vm3304, %v3723, %v3719
        %v3725 = vlaneseq
        %v3726 = vshrl.u32 %v3725, 7
        %v3727 = vsub.s32 %v3306, %v3726
        %v3728 = vrot.slane %v1389, %v3727
        %v3729 = vsel %vm3311, %v3728, %v3724
        %v3730 = vlaneseq
        %v3731 = vshrl.u32 %v3730, 7
        %v3732 = vsub.s32 %v3313, %v3731
        %v3733 = vrot.slane %v1391, %v3732
        %v3734 = vsel %vm3318, %v3733, %v3729
        %v3735 = vlaneseq
        %v3736 = vshrl.u32 %v3735, 7
        %v3737 = vsub.s32 %v3320, %v3736
        %v3738 = vrot.slane %v1393, %v3737
        %v3739 = vsel %vm3325, %v3738, %v3734
        %v3740 = vlaneseq
        %v3741 = vshrl.u32 %v3740, 7
        %v3742 = vsub.s32 %v3327, %v3741
        %v3743 = vrot.slane %v1395, %v3742
        %v3744 = vsel %vm3332, %v3743, %v3739
        %v3745 = vlaneseq
        %v3746 = vshrl.u32 %v3745, 7
        %v3747 = vsub.s32 %v3334, %v3746
        %v3748 = vrot.slane %v1397, %v3747
        %v3749 = vsel %vm3339, %v3748, %v3744
        %v3750 = vlaneseq
        %v3751 = vshrl.u32 %v3750, 7
        %v3752 = vsub.s32 %v3341, %v3751
        %v3753 = vrot.slane %v1399, %v3752
        %v3754 = vsel %vm3346, %v3753, %v3749
        %v3755 = vlaneseq
        %v3756 = vshrl.u32 %v3755, 7
        %v3757 = vsub.s32 %v3348, %v3756
        %v3758 = vrot.slane %v1401, %v3757
        %v3759 = vsel %vm3353, %v3758, %v3754
        %v3760 = vlaneseq
        %v3761 = vshrl.u32 %v3760, 7
        %v3762 = vsub.s32 %v3355, %v3761
        %v3763 = vrot.slane %v1403, %v3762
        %v3764 = vsel %vm3360, %v3763, %v3759
        %v3765 = vlaneseq
        %v3766 = vshrl.u32 %v3765, 7
        %v3767 = vsub.s32 %v3362, %v3766
        %v3768 = vrot.slane %v1405, %v3767
        %v3769 = vsel %vm3367, %v3768, %v3764
        %v3770 = vlaneseq
        %v3771 = vshrl.u32 %v3770, 7
        %v3772 = vsub.s32 %v3369, %v3771
        %v3773 = vrot.slane %v1407, %v3772
        %v3774 = vsel %vm3374, %v3773, %v3769
        %v3775 = vlaneseq
        %v3776 = vshrl.u32 %v3775, 7
        %v3777 = vsub.s32 %v3376, %v3776
        %v3778 = vrot.slane %v1409, %v3777
        %v3779 = vsel %vm3381, %v3778, %v3774
        %v3780 = vlaneseq
        %v3781 = vshrl.u32 %v3780, 7
        %v3782 = vsub.s32 %v3383, %v3781
        %v3783 = vrot.slane %v1411, %v3782
        %v3784 = vsel %vm3388, %v3783, %v3779
        %v3785 = vlaneseq
        %v3786 = vshrl.u32 %v3785, 7
        %v3787 = vsub.s32 %v3280, %v3786
        %v3788 = vrot.slane %v1413, %v3787
        %v3789 = vlaneseq
        %v3790 = vshrl.u32 %v3789, 7
        %v3791 = vsub.s32 %v3285, %v3790
        %v3792 = vrot.slane %v1415, %v3791
        %v3793 = vsel %vm3290, %v3792, %v3788
        %v3794 = vlaneseq
        %v3795 = vshrl.u32 %v3794, 7
        %v3796 = vsub.s32 %v3292, %v3795
        %v3797 = vrot.slane %v1417, %v3796
        %v3798 = vsel %vm3297, %v3797, %v3793
        %v3799 = vlaneseq
        %v3800 = vshrl.u32 %v3799, 7
        %v3801 = vsub.s32 %v3299, %v3800
        %v3802 = vrot.slane %v1419, %v3801
        %v3803 = vsel %vm3304, %v3802, %v3798
        %v3804 = vlaneseq
        %v3805 = vshrl.u32 %v3804, 7
        %v3806 = vsub.s32 %v3306, %v3805
        %v3807 = vrot.slane %v1421, %v3806
        %v3808 = vsel %vm3311, %v3807, %v3803
        %v3809 = vlaneseq
        %v3810 = vshrl.u32 %v3809, 7
        %v3811 = vsub.s32 %v3313, %v3810
        %v3812 = vrot.slane %v1423, %v3811
        %v3813 = vsel %vm3318, %v3812, %v3808
        %v3814 = vlaneseq
        %v3815 = vshrl.u32 %v3814, 7
        %v3816 = vsub.s32 %v3320, %v3815
        %v3817 = vrot.slane %v1425, %v3816
        %v3818 = vsel %vm3325, %v3817, %v3813
        %v3819 = vlaneseq
        %v3820 = vshrl.u32 %v3819, 7
        %v3821 = vsub.s32 %v3327, %v3820
        %v3822 = vrot.slane %v1427, %v3821
        %v3823 = vsel %vm3332, %v3822, %v3818
        %v3824 = vlaneseq
        %v3825 = vshrl.u32 %v3824, 7
        %v3826 = vsub.s32 %v3334, %v3825
        %v3827 = vrot.slane %v1429, %v3826
        %v3828 = vsel %vm3339, %v3827, %v3823
        %v3829 = vlaneseq
        %v3830 = vshrl.u32 %v3829, 7
        %v3831 = vsub.s32 %v3341, %v3830
        %v3832 = vrot.slane %v1431, %v3831
        %v3833 = vsel %vm3346, %v3832, %v3828
        %v3834 = vlaneseq
        %v3835 = vshrl.u32 %v3834, 7
        %v3836 = vsub.s32 %v3348, %v3835
        %v3837 = vrot.slane %v1433, %v3836
        %v3838 = vsel %vm3353, %v3837, %v3833
        %v3839 = vlaneseq
        %v3840 = vshrl.u32 %v3839, 7
        %v3841 = vsub.s32 %v3355, %v3840
        %v3842 = vrot.slane %v1435, %v3841
        %v3843 = vsel %vm3360, %v3842, %v3838
        %v3844 = vlaneseq
        %v3845 = vshrl.u32 %v3844, 7
        %v3846 = vsub.s32 %v3362, %v3845
        %v3847 = vrot.slane %v1437, %v3846
        %v3848 = vsel %vm3367, %v3847, %v3843
        %v3849 = vlaneseq
        %v3850 = vshrl.u32 %v3849, 7
        %v3851 = vsub.s32 %v3369, %v3850
        %v3852 = vrot.slane %v1439, %v3851
        %v3853 = vsel %vm3374, %v3852, %v3848
        %v3854 = vlaneseq
        %v3855 = vshrl.u32 %v3854, 7
        %v3856 = vsub.s32 %v3376, %v3855
        %v3857 = vrot.slane %v1441, %v3856
        %v3858 = vsel %vm3381, %v3857, %v3853
        %v3859 = vlaneseq
        %v3860 = vshrl.u32 %v3859, 7
        %v3861 = vsub.s32 %v3383, %v3860
        %v3862 = vrot.slane %v1443, %v3861
        %v3863 = vsel %vm3388, %v3862, %v3858
        %v3864 = vlaneseq
        %v3865 = vshrl.u32 %v3864, 7
        %v3866 = vsub.s32 %v3280, %v3865
        %v3867 = vrot.slane %v1445, %v3866
        %v3868 = vlaneseq
        %v3869 = vshrl.u32 %v3868, 7
        %v3870 = vsub.s32 %v3285, %v3869
        %v3871 = vrot.slane %v1447, %v3870
        %v3872 = vsel %vm3290, %v3871, %v3867
        %v3873 = vlaneseq
        %v3874 = vshrl.u32 %v3873, 7
        %v3875 = vsub.s32 %v3292, %v3874
        %v3876 = vrot.slane %v1449, %v3875
        %v3877 = vsel %vm3297, %v3876, %v3872
        %v3878 = vlaneseq
        %v3879 = vshrl.u32 %v3878, 7
        %v3880 = vsub.s32 %v3299, %v3879
        %v3881 = vrot.slane %v1451, %v3880
        %v3882 = vsel %vm3304, %v3881, %v3877
        %v3883 = vlaneseq
        %v3884 = vshrl.u32 %v3883, 7
        %v3885 = vsub.s32 %v3306, %v3884
        %v3886 = vrot.slane %v1453, %v3885
        %v3887 = vsel %vm3311, %v3886, %v3882
        %v3888 = vlaneseq
        %v3889 = vshrl.u32 %v3888, 7
        %v3890 = vsub.s32 %v3313, %v3889
        %v3891 = vrot.slane %v1455, %v3890
        %v3892 = vsel %vm3318, %v3891, %v3887
        %v3893 = vlaneseq
        %v3894 = vshrl.u32 %v3893, 7
        %v3895 = vsub.s32 %v3320, %v3894
        %v3896 = vrot.slane %v1457, %v3895
        %v3897 = vsel %vm3325, %v3896, %v3892
        %v3898 = vlaneseq
        %v3899 = vshrl.u32 %v3898, 7
        %v3900 = vsub.s32 %v3327, %v3899
        %v3901 = vrot.slane %v1459, %v3900
        %v3902 = vsel %vm3332, %v3901, %v3897
        %v3903 = vlaneseq
        %v3904 = vshrl.u32 %v3903, 7
        %v3905 = vsub.s32 %v3334, %v3904
        %v3906 = vrot.slane %v1461, %v3905
        %v3907 = vsel %vm3339, %v3906, %v3902
        %v3908 = vlaneseq
        %v3909 = vshrl.u32 %v3908, 7
        %v3910 = vsub.s32 %v3341, %v3909
        %v3911 = vrot.slane %v1463, %v3910
        %v3912 = vsel %vm3346, %v3911, %v3907
        %v3913 = vlaneseq
        %v3914 = vshrl.u32 %v3913, 7
        %v3915 = vsub.s32 %v3348, %v3914
        %v3916 = vrot.slane %v1465, %v3915
        %v3917 = vsel %vm3353, %v3916, %v3912
        %v3918 = vlaneseq
        %v3919 = vshrl.u32 %v3918, 7
        %v3920 = vsub.s32 %v3355, %v3919
        %v3921 = vrot.slane %v1467, %v3920
        %v3922 = vsel %vm3360, %v3921, %v3917
        %v3923 = vlaneseq
        %v3924 = vshrl.u32 %v3923, 7
        %v3925 = vsub.s32 %v3362, %v3924
        %v3926 = vrot.slane %v1469, %v3925
        %v3927 = vsel %vm3367, %v3926, %v3922
        %v3928 = vlaneseq
        %v3929 = vshrl.u32 %v3928, 7
        %v3930 = vsub.s32 %v3369, %v3929
        %v3931 = vrot.slane %v1471, %v3930
        %v3932 = vsel %vm3374, %v3931, %v3927
        %v3933 = vlaneseq
        %v3934 = vshrl.u32 %v3933, 7
        %v3935 = vsub.s32 %v3376, %v3934
        %v3936 = vrot.slane %v1473, %v3935
        %v3937 = vsel %vm3381, %v3936, %v3932
        %v3938 = vlaneseq
        %v3939 = vshrl.u32 %v3938, 7
        %v3940 = vsub.s32 %v3383, %v3939
        %v3941 = vrot.slane %v1475, %v3940
        %v3942 = vsel %vm3388, %v3941, %v3937
        %vm3943 = vcmask 1041409
        %v3944 = vsel %vm3943, %v3468, %v3389
        %vm3945 = vcmask 1042434
        %v3946 = vsel %vm3945, %v3547, %v3944
        %vm3947 = vcmask 1043459
        %v3948 = vsel %vm3947, %v3626, %v3946
        %vm3949 = vcmask 1044484
        %v3950 = vsel %vm3949, %v3705, %v3948
        %vm3951 = vcmask 1045509
        %v3952 = vsel %vm3951, %v3784, %v3950
        %vm3953 = vcmask 1046534
        %v3954 = vsel %vm3953, %v3863, %v3952
        %vm3955 = vcmask 1047559
        %v3956 = vsel %vm3955, %v3942, %v3954
        %v3958 = vmul.f32 %v868, %v3956
        %v3959 = vadd.f32 %v3958, %v871
        %3960 = vst [vmem:[%s469] sm:$0xff] %v3959
        %s3961 = sand.u32 %s191, 1
        %s3962 = scalar_lea.sflag [#allocation5], %s3961
        %s3963 = sand.u32 %s191, 1
        %s3964 = smul.addr %s3963, 8
        %s3965 = scalar_lea.vmem [#allocation12], %s3964
        %s3966 = sand.u32 %s37, 1
        %s3967 = scalar_lea.sflag [#allocation14], %s3966
        %s3968 = sand.u32 %s217, 1
        %s3969 = smul.addr %s3968, 1024
        %s3970 = scalar_lea.vmem [#allocation13], %s3969
        %s3971 = sand.u32 %s37, 1
        %s3972 = scalar_lea.sflag [#allocation14], %s3971
        %s3973 = sand.u32 %s243, 1
        %s3974 = smul.addr %s3973, 8
        %s3975 = scalar_lea.vmem [#allocation15], %s3974
        %s3976 = sand.u32 %s269, 1
        %s3977 = scalar_lea.sflag [#allocation17], %s3976
        %s3978 = sand.u32 %s269, 1
        %s3979 = smul.addr %s3978, 8
        %s3980 = scalar_lea.vmem [#allocation16], %s3979
        // Predicated region
        $region65: #{tpu_custom_call.1} parent=43 // pred_check
          %p3981 = pneg %p201
        $region66: #{tpu_custom_call.1} parent=43 // pred_check_branch
          %3983 = sbr.rel (%p3981) target = $region68
        $region67: #{tpu_custom_call.1} parent=43 // pred_region
          %s3985 = ssub.s32 128, 128
          %3986 = vsyncadd %s3962, %s3985
          %s3987 = smul.addr %s37, 128
          %s3988 = scalar_lea.hbm %s6, %s3987
          %s3990 = sshll.u32 %s3965, 4
          %s3991 = int_to_ptr.vmem [resolvable:$true] %s3990
          %3993 = dma.vmem_to_hbm [thread:$0]  %s3991, 128, %s3988, %s3962
        $region68: #{tpu_custom_call.1} parent=43 // pred_fallthru
          _
        // Predicated region
        $region69: #{tpu_custom_call.1} parent=43 // pred_check
          %p3994 = pneg %p227
        $region70: #{tpu_custom_call.1} parent=43 // pred_check_branch
          %3996 = sbr.rel (%p3994) target = $region72
        $region71: #{tpu_custom_call.1} parent=43 // pred_region
          %s3997 = smul.u32 8, %s37
          %s3999 = ssub.s32 16384, 16384
          %4000 = vsyncadd %s3967, %s3999
          %s4001 = smul.addr %s3997, 16
          %s4002 = smul.addr %s4001, 128
          %s4003 = scalar_lea.hbm %s7, %s4002
          %s4004 = sshll.u32 %s3970, 4
          %s4005 = int_to_ptr.vmem [resolvable:$true] %s4004
          %4010 = dma.vmem_to_hbm [thread:$0]  %s4005, 16384, %s4003, %s3967, 128, 128, 8
        $region72: #{tpu_custom_call.1} parent=43 // pred_fallthru
          _
        // Predicated region
        $region73: #{tpu_custom_call.1} parent=43 // pred_check
          %p4011 = pneg %p253
        $region74: #{tpu_custom_call.1} parent=43 // pred_check_branch
          %4013 = sbr.rel (%p4011) target = $region76
        $region75: #{tpu_custom_call.1} parent=43 // pred_region
          %s4015 = ssub.s32 128, 128
          %4016 = vsyncadd %s3972, %s4015
          %s4017 = smul.addr %s37, 128
          %s4018 = scalar_lea.hbm %s8, %s4017
          %s4020 = sshll.u32 %s3975, 4
          %s4021 = int_to_ptr.vmem [resolvable:$true] %s4020
          %4023 = dma.vmem_to_hbm [thread:$0]  %s4021, 128, %s4018, %s3972
        $region76: #{tpu_custom_call.1} parent=43 // pred_fallthru
          _
        // Predicated region
        $region77: #{tpu_custom_call.1} parent=43 // pred_check
          %p4024 = pneg %p279
        $region78: #{tpu_custom_call.1} parent=43 // pred_check_branch
          %4026 = sbr.rel (%p4024) target = $region80
        $region79: #{tpu_custom_call.1} parent=43 // pred_region
          %s4028 = ssub.s32 128, 128
          %4029 = vsyncadd %s3977, %s4028
          %s4030 = smul.addr %s37, 128
          %s4031 = scalar_lea.hbm %s9, %s4030
          %s4033 = sshll.u32 %s3980, 4
          %s4034 = int_to_ptr.vmem [resolvable:$true] %s4033
          %4036 = dma.vmem_to_hbm [thread:$0]  %s4034, 128, %s4031, %s3977
        $region80: #{tpu_custom_call.1} parent=43 // pred_fallthru
          _
      $region44: #{tpu_custom_call.1} parent=5 // pred_fallthru
        _
      %p4037 = scmp.le.s32.totalorder 2, %s32
      // Predicated region
      $region81: #{tpu_custom_call.1} parent=5 // pred_check
        %p4038 = pneg %p4037
      $region82: #{tpu_custom_call.1} parent=5 // pred_check_branch
        %4040 = sbr.rel (%p4038) target = $region84
      $region83: #{tpu_custom_call.1} parent=5 // pred_region
        %s4041 = ssub.s32 %s32, 2
        // Predicated region
        $region85: #{tpu_custom_call.1} parent=83 // pred_check
          %p4042 = pneg %p207
        $region86: #{tpu_custom_call.1} parent=83 // pred_check_branch
          %4044 = sbr.rel (%p4042) target = $region88
        $region87: #{tpu_custom_call.1} parent=83 // pred_region
          %s4045 = sand.u32 %s192, 1
          %s4046 = scalar_lea.sflag [#allocation5], %s4045
          %s4047 = sand.u32 %s192, 1
          %s4048 = smul.addr %s4047, 8
          %s4049 = scalar_lea.vmem [#allocation12], %s4048
          %4050 = dma.done %s4046, 128
        $region88: #{tpu_custom_call.1} parent=83 // pred_fallthru
          _
        // Predicated region
        $region89: #{tpu_custom_call.1} parent=83 // pred_check
          %p4051 = pneg %p233
        $region90: #{tpu_custom_call.1} parent=83 // pred_check_branch
          %4053 = sbr.rel (%p4051) target = $region92
        $region91: #{tpu_custom_call.1} parent=83 // pred_region
          %s4054 = sand.u32 %s38, 1
          %s4055 = scalar_lea.sflag [#allocation14], %s4054
          %s4056 = sand.u32 %s218, 1
          %s4057 = smul.addr %s4056, 1024
          %s4058 = scalar_lea.vmem [#allocation13], %s4057
          %4059 = dma.done %s4055, 16384
        $region92: #{tpu_custom_call.1} parent=83 // pred_fallthru
          _
        // Predicated region
        $region93: #{tpu_custom_call.1} parent=83 // pred_check
          %p4060 = pneg %p259
        $region94: #{tpu_custom_call.1} parent=83 // pred_check_branch
          %4062 = sbr.rel (%p4060) target = $region96
        $region95: #{tpu_custom_call.1} parent=83 // pred_region
          %s4063 = sand.u32 %s38, 1
          %s4064 = scalar_lea.sflag [#allocation14], %s4063
          %s4065 = sand.u32 %s244, 1
          %s4066 = smul.addr %s4065, 8
          %s4067 = scalar_lea.vmem [#allocation15], %s4066
          %4068 = dma.done %s4064, 128
        $region96: #{tpu_custom_call.1} parent=83 // pred_fallthru
          _
        // Predicated region
        $region97: #{tpu_custom_call.1} parent=83 // pred_check
          %p4069 = pneg %p285
        $region98: #{tpu_custom_call.1} parent=83 // pred_check_branch
          %4071 = sbr.rel (%p4069) target = $region100
        $region99: #{tpu_custom_call.1} parent=83 // pred_region
          %s4072 = sand.u32 %s270, 1
          %s4073 = scalar_lea.sflag [#allocation17], %s4072
          %s4074 = sand.u32 %s270, 1
          %s4075 = smul.addr %s4074, 8
          %s4076 = scalar_lea.vmem [#allocation16], %s4075
          %4077 = dma.done %s4073, 128
        $region100: #{tpu_custom_call.1} parent=83 // pred_fallthru
          _
      $region84: #{tpu_custom_call.1} parent=5 // pred_fallthru
        _
    $region6: #{tpu_custom_call.1} parent=1 // loop_footer
      %s36 = sadd.s32 1, %s32
    $region7: #{tpu_custom_call.1} parent=1 // loop_footer_branch
      %31 = sbr.rel target = $region3
    $region8: #{tpu_custom_call.1} parent=1 // loop_exit
      _
    %4078 = vsyncpa [#allocation4], 1
    %s4079 = scalar_lea.sflag [#allocation4], 1
    %4080 = vsyncpa %s4079, 1
    %4081 = vsyncpa [#allocation7], 1
    %4082 = vsyncpa [#allocation10], 1
    %s4083 = scalar_lea.sflag [#allocation10], 1
    %4084 = vsyncpa %s4083, 1
    %4085 = vsyncpa [#allocation5], 1
    %s4086 = scalar_lea.sflag [#allocation5], 1
    %4087 = vsyncpa %s4086, 1
    %4088 = vsyncpa [#allocation14], 1
    %s4089 = scalar_lea.sflag [#allocation14], 1
    %4090 = vsyncpa %s4089, 1
    %4091 = vsyncpa [#allocation17], 1
    %s4092 = scalar_lea.sflag [#allocation17], 1
    %4093 = vsyncpa %s4092, 1

</llo_original>
